<compile_context>
chip_gen: v7x
topology: tpu7x:2x2x1
jax: 0.10.0
libtpu: 0.0.40
codegen_flags: <defaults>
</compile_context>

<pallas_src>
import math

import numpy as np
import jax
import jax.numpy as jnp
from jax import lax
from jax.experimental import pallas as pl
from jax.experimental.pallas import tpu as pltpu

LOW_BOUND = 40
HIGH_BOUND = 150
NUM_BINS = HIGH_BOUND - LOW_BOUND  # 110
TWO_PI = 2.0 * math.pi


def freq_ce_kernel(wave_ref, hann_ref, fps_ref, gts_ref, bpm_ref, loss_ref):
    # Block shapes (== full arrays, single grid step):
    #   wave_ref : (B, Qp, C)  zero-padded wave, time folded as t = C*q + r
    #   hann_ref : (1, Qp, C)  zero-padded Hanning window (same folding)
    #   fps_ref  : (B, 1)   f32
    #   gts_ref  : (B, 1)   int32 class targets in [0, NUM_BINS-1]
    #   bpm_ref  : (1, F)   f32  bpm_range / 60
    #   loss_ref : (1, 1)   f32
    B, Qp, C = wave_ref.shape
    F = bpm_ref.shape[1]

    wave = wave_ref[...]
    hann = hann_ref[...]
    fps = fps_ref[...]
    gts = gts_ref[...]
    bpm = bpm_ref[...]

    # Windowed signal; the padded time tail is exactly zero, so padded samples
    # contribute nothing to the DFT sums.
    pw = wave * hann                                             # (B, Qp, C)

    # Phase increment per time sample: dphi[b, f] = 2*pi * bpm[f] / fps[b].
    # Exact reciprocal: an approximate vrcp would shift the DFT bin freqs.
    inv_fps = pl.reciprocal(fps, approx=False)                   # (B, 1)
    dphi = (TWO_PI * bpm) * inv_fps                              # (B, F), F on lanes

    # Two-level angle decomposition, t = C*q + r:
    #   sin(t*dphi) = sin(Cq*dphi)*cos(r*dphi) + cos(Cq*dphi)*sin(r*dphi)
    #   cos(t*dphi) = cos(Cq*dphi)*cos(r*dphi) - sin(Cq*dphi)*sin(r*dphi)
    # -> only (C + Qp)*B*F sin/cos evaluations instead of T*B*F.
    r_idx = lax.broadcasted_iota(jnp.int32, (B, C, F), 1).astype(jnp.float32)
    q_idx = lax.broadcasted_iota(jnp.int32, (B, Qp, F), 1).astype(jnp.float32)
    phi_r = r_idx * dphi[:, None, :]                             # (B, C, F)
    phi_q = q_idx * (dphi * float(C))[:, None, :]                # (B, Qp, F)
    sin_r = jnp.sin(phi_r)
    cos_r = jnp.cos(phi_r)
    sin_q = jnp.sin(phi_q)
    cos_q = jnp.cos(phi_q)

    # Intra-chunk time contraction on the MXU:
    #   U[b,q,f] = sum_r pw[b,q,r] * cos(r*dphi[b,f])
    #   V[b,q,f] = sum_r pw[b,q,r] * sin(r*dphi[b,f])
    U = jnp.einsum("bqr,brf->bqf", pw, cos_r,
                   precision=lax.Precision.HIGHEST,
                   preferred_element_type=jnp.float32)           # (B, Qp, F)
    V = jnp.einsum("bqr,brf->bqf", pw, sin_r,
                   precision=lax.Precision.HIGHEST,
                   preferred_element_type=jnp.float32)           # (B, Qp, F)

    # Combine with the chunk-base phases and reduce over chunks (sublane axis).
    sin_sum = jnp.sum(sin_q * U + cos_q * V, axis=1)             # (B, F)
    cos_sum = jnp.sum(cos_q * U - sin_q * V, axis=1)             # (B, F)

    complex_absolute = sin_sum * sin_sum + cos_sum * cos_sum     # (B, F)
    denom = jnp.sum(complex_absolute, axis=1, keepdims=True)     # (B, 1)
    complex_absolute = complex_absolute * pl.reciprocal(denom, approx=False)

    # Cross entropy with integer targets (reduction='mean'):
    #   loss_b = logsumexp(logits_b) - logits_b[gts_b]
    m = jnp.max(complex_absolute, axis=1, keepdims=True)         # (B, 1)
    lse = jnp.log(jnp.sum(jnp.exp(complex_absolute - m),
                          axis=1, keepdims=True)) + m            # (B, 1)
    col = lax.broadcasted_iota(jnp.int32, complex_absolute.shape, 1)
    picked = jnp.sum(jnp.where(col == gts, complex_absolute, 0.0),
                     axis=1, keepdims=True)                      # (B, 1)
    per_sample = lse - picked                                    # (B, 1)

    loss_ref[...] = jnp.mean(per_sample, keepdims=True)          # (1, 1)


def freq_ce_loss(wave, labels, fps, T=300, chunk=16):
    """JAX/Pallas equivalent of FreqCELoss(T=T, reduction='mean', use_snr=False)."""
    B = wave.shape[0]
    assert wave.shape == (B, T)

    n_chunks = pl.cdiv(T, chunk)
    n_chunks = ((n_chunks + 7) // 8) * 8      # sublane-friendly chunk count
    T_pad = n_chunks * chunk

    # Deterministic "parameters", exactly as in the module __init__ (padded
    # Hanning tail is zero so padded time samples drop out of the sums).
    hann_np = np.zeros((T_pad,), dtype=np.float32)
    hann_np[:T] = np.hanning(T)
    hann_q = jnp.asarray(hann_np.reshape(1, n_chunks, chunk))
    bpm_range = (jnp.arange(LOW_BOUND, HIGH_BOUND, dtype=jnp.float32)
                 / 60.0).reshape(1, NUM_BINS)

    # Glue: fold time into (chunk, intra-chunk) and build integer targets
    # (clamp to [0, NUM_BINS-1] then truncate, same as the torch code).
    wave_q = jnp.pad(wave.astype(jnp.float32),
                     ((0, 0), (0, T_pad - T))).reshape(B, n_chunks, chunk)
    gts = jnp.clip(labels.astype(jnp.float32) - LOW_BOUND,
                   0.0, float(NUM_BINS - 1)).astype(jnp.int32).reshape(B, 1)
    fps2 = fps.astype(jnp.float32).reshape(B, 1)

    out = pl.pallas_call(
        freq_ce_kernel,
        out_shape=jax.ShapeDtypeStruct((1, 1), jnp.float32),
        grid=(1,),
        in_specs=[
            pl.BlockSpec((B, n_chunks, chunk), lambda i: (0, 0, 0)),  # wave
            pl.BlockSpec((1, n_chunks, chunk), lambda i: (0, 0, 0)),  # hanning
            pl.BlockSpec((B, 1), lambda i: (0, 0)),                   # fps
            pl.BlockSpec((B, 1), lambda i: (0, 0)),                   # gts (int32)
            pl.BlockSpec((1, NUM_BINS), lambda i: (0, 0)),            # bpm_range
        ],
        out_specs=pl.BlockSpec((1, 1), lambda i: (0, 0)),
        compiler_params=pltpu.CompilerParams(
            dimension_semantics=("arbitrary",)),
    )(wave_q, hann_q, fps2, gts, bpm_range)
    return out[0, 0]


def freq_ce_loss_reference(wave, labels, fps, T=300):
    """Pure-JAX reference, mirroring the PyTorch forward directly."""
    hanning = jnp.asarray(np.hanning(T), dtype=jnp.float32).reshape(1, T)
    two_pi_n = (2.0 * math.pi * jnp.arange(T, dtype=jnp.float32)).reshape(1, 1, T)
    bpm = jnp.arange(LOW_BOUND, HIGH_BOUND, dtype=jnp.float32) / 60.0
    k = bpm[None, :] / fps.astype(jnp.float32)[:, None]           # (B, F)
    preds = (wave.astype(jnp.float32) * hanning)[:, None, :]      # (B, 1, T)
    ang = k[:, :, None] * two_pi_n                                # (B, F, T)
    sin_sum = jnp.sum(preds * jnp.sin(ang), axis=-1)
    cos_sum = jnp.sum(preds * jnp.cos(ang), axis=-1)
    ca = sin_sum ** 2 + cos_sum ** 2
    ca = ca / jnp.sum(ca, axis=1, keepdims=True)
    gts = jnp.clip(labels.astype(jnp.float32) - LOW_BOUND,
                   0.0, float(NUM_BINS - 1)).astype(jnp.int32)
    lse = jax.nn.logsumexp(ca, axis=1)
    picked = jnp.take_along_axis(ca, gts[:, None], axis=1)[:, 0]
    return jnp.mean(lse - picked)


if __name__ == "__main__":
    B, T = 2, 300  # module default sequence length
    key = jax.random.PRNGKey(0)
    kw, kl, kf = jax.random.split(key, 3)

    wave = jax.random.normal(kw, (B, T), dtype=jnp.float32)
    # heart-rate labels in a plausible bpm range
    labels = jax.random.uniform(kl, (B,), minval=45.0, maxval=140.0,
                                dtype=jnp.float32)
    fps = jax.random.uniform(kf, (B,), minval=24.0, maxval=31.0,
                             dtype=jnp.float32)

    loss = freq_ce_loss(wave, labels, fps, T=T)
    jax.block_until_ready(loss)

    ref = freq_ce_loss_reference(wave, labels, fps, T=T)
    np.testing.assert_allclose(np.asarray(loss), np.asarray(ref),
                               rtol=2e-3, atol=2e-3)

    print("KERNEL_OK")
</pallas_src>

<mosaic_0001>
module attributes {stable_mosaic.version = 11 : i64} {
  func.func @freq_ce_kernel(%arg0: i32, %arg1: memref<2x24x16xf32, #tpu.memory_space<vmem>>, %arg2: memref<1x24x16xf32, #tpu.memory_space<vmem>>, %arg3: memref<2x1xf32, #tpu.memory_space<vmem>>, %arg4: memref<2x1xi32, #tpu.memory_space<vmem>>, %arg5: memref<1x110xf32, #tpu.memory_space<vmem>>, %arg6: memref<1x1xf32, #tpu.memory_space<vmem>>) attributes {dimension_semantics = [#tpu.dimension_semantics<arbitrary>], iteration_bounds = array<i64: 1>, scalar_prefetch = 0 : i64, scratch_operands = 0 : i64, tpu.core_type = #tpu.core_type<tc>, window_params = [{pipeline_mode = #tpu.pipeline_mode<synchronous>, transform_indices = @transform_0, window_bounds = array<i64: 2, 24, 16>}, {pipeline_mode = #tpu.pipeline_mode<synchronous>, transform_indices = @transform_1, window_bounds = array<i64: 1, 24, 16>}, {pipeline_mode = #tpu.pipeline_mode<synchronous>, transform_indices = @transform_2, window_bounds = array<i64: 2, 1>}, {pipeline_mode = #tpu.pipeline_mode<synchronous>, transform_indices = @transform_3, window_bounds = array<i64: 2, 1>}, {pipeline_mode = #tpu.pipeline_mode<synchronous>, transform_indices = @transform_4, window_bounds = array<i64: 1, 110>}, {pipeline_mode = #tpu.pipeline_mode<synchronous>, transform_indices = @transform_5, window_bounds = array<i64: 1, 1>}]} {
    %c0 = arith.constant 0 : index
    %c0_0 = arith.constant 0 : index
    %c0_1 = arith.constant 0 : index
    %0 = vector.load %arg1[%c0, %c0_0, %c0_1] : memref<2x24x16xf32, #tpu.memory_space<vmem>>, vector<2x24x16xf32>
    %c0_2 = arith.constant 0 : index
    %c0_3 = arith.constant 0 : index
    %c0_4 = arith.constant 0 : index
    %1 = vector.load %arg2[%c0_2, %c0_3, %c0_4] : memref<1x24x16xf32, #tpu.memory_space<vmem>>, vector<1x24x16xf32>
    %c0_5 = arith.constant 0 : index
    %c0_6 = arith.constant 0 : index
    %2 = vector.load %arg3[%c0_5, %c0_6] : memref<2x1xf32, #tpu.memory_space<vmem>>, vector<2x1xf32>
    %c0_7 = arith.constant 0 : index
    %c0_8 = arith.constant 0 : index
    %3 = vector.load %arg4[%c0_7, %c0_8] : memref<2x1xi32, #tpu.memory_space<vmem>>, vector<2x1xi32>
    %c0_9 = arith.constant 0 : index
    %c0_10 = arith.constant 0 : index
    %4 = vector.load %arg5[%c0_9, %c0_10] : memref<1x110xf32, #tpu.memory_space<vmem>>, vector<1x110xf32>
    %5 = vector.broadcast %1 : vector<1x24x16xf32> to vector<2x24x16xf32>
    %6 = arith.mulf %0, %5 : vector<2x24x16xf32>
    %7 = tpu.reciprocal %2 : vector<2x1xf32> -> vector<2x1xf32>
    %cst = arith.constant 6.28318548 : f32
    %8 = vector.broadcast %cst : f32 to vector<1x110xf32>
    %9 = arith.mulf %8, %4 : vector<1x110xf32>
    %10 = vector.broadcast %9 : vector<1x110xf32> to vector<2x110xf32>
    %11 = vector.broadcast %7 : vector<2x1xf32> to vector<2x110xf32>
    %12 = arith.mulf %10, %11 : vector<2x110xf32>
    %13 = tpu.iota {dimensions = array<i32: 1>} : vector<2x16x110xi32>
    %14 = arith.sitofp %13 : vector<2x16x110xi32> to vector<2x16x110xf32>
    %15 = tpu.iota {dimensions = array<i32: 1>} : vector<2x24x110xi32>
    %16 = arith.sitofp %15 : vector<2x24x110xi32> to vector<2x24x110xf32>
    %17 = vector.shape_cast %12 : vector<2x110xf32> to vector<2x1x110xf32>
    %18 = vector.broadcast %17 : vector<2x1x110xf32> to vector<2x16x110xf32>
    %19 = arith.mulf %14, %18 : vector<2x16x110xf32>
    %cst_11 = arith.constant 1.600000e+01 : f32
    %20 = vector.broadcast %cst_11 : f32 to vector<2x110xf32>
    %21 = arith.mulf %12, %20 : vector<2x110xf32>
    %22 = vector.shape_cast %21 : vector<2x110xf32> to vector<2x1x110xf32>
    %23 = vector.broadcast %22 : vector<2x1x110xf32> to vector<2x24x110xf32>
    %24 = arith.mulf %16, %23 : vector<2x24x110xf32>
    %25 = math.sin %19 : vector<2x16x110xf32>
    %26 = math.cos %19 : vector<2x16x110xf32>
    %27 = math.sin %24 : vector<2x24x110xf32>
    %28 = math.cos %24 : vector<2x24x110xf32>
    "tpu.trace_start"() <{level = 10 : i32, message = "bqr,brf->bqf"}> : () -> ()
    %cst_12 = arith.constant dense<0.000000e+00> : vector<2x24x110xf32>
    %29 = tpu.matmul %6, %26, %cst_12 {dimension_numbers = #tpu.dot_dimension_numbers<[2], [1], [1], [2], [0, 0, 0, 1, 1, 2], [0], [0]>, precision = #tpu.contract_precision<fp32>} : vector<2x24x16xf32>, vector<2x16x110xf32>, vector<2x24x110xf32> -> vector<2x24x110xf32>
    %cst_13 = arith.constant dense<0.000000e+00> : vector<2x24x110xf32>
    %30 = tpu.matmul %6, %25, %cst_13 {dimension_numbers = #tpu.dot_dimension_numbers<[2], [1], [1], [2], [0, 0, 0, 1, 1, 2], [0], [0]>, precision = #tpu.contract_precision<fp32>} : vector<2x24x16xf32>, vector<2x16x110xf32>, vector<2x24x110xf32> -> vector<2x24x110xf32>
    "tpu.trace_stop"() : () -> ()
    %31 = arith.mulf %27, %29 : vector<2x24x110xf32>
    %32 = arith.mulf %28, %30 : vector<2x24x110xf32>
    %33 = arith.addf %31, %32 : vector<2x24x110xf32>
    %cst_14 = arith.constant dense<0.000000e+00> : vector<2x110xf32>
    %34 = vector.multi_reduction <add>, %33, %cst_14 [1] : vector<2x24x110xf32> to vector<2x110xf32>
    %35 = arith.mulf %28, %29 : vector<2x24x110xf32>
    %36 = arith.mulf %27, %30 : vector<2x24x110xf32>
    %37 = arith.subf %35, %36 : vector<2x24x110xf32>
    %cst_15 = arith.constant dense<0.000000e+00> : vector<2x110xf32>
    %38 = vector.multi_reduction <add>, %37, %cst_15 [1] : vector<2x24x110xf32> to vector<2x110xf32>
    %39 = arith.mulf %34, %34 : vector<2x110xf32>
    %40 = arith.mulf %38, %38 : vector<2x110xf32>
    %41 = arith.addf %39, %40 : vector<2x110xf32>
    %cst_16 = arith.constant dense<0.000000e+00> : vector<2xf32>
    %42 = vector.multi_reduction <add>, %41, %cst_16 [1] : vector<2x110xf32> to vector<2xf32>
    %43 = vector.shape_cast %42 : vector<2xf32> to vector<2x1xf32>
    %44 = tpu.reciprocal %43 : vector<2x1xf32> -> vector<2x1xf32>
    %45 = vector.broadcast %44 : vector<2x1xf32> to vector<2x110xf32>
    %46 = arith.mulf %41, %45 : vector<2x110xf32>
    %cst_17 = arith.constant dense<0xFF800000> : vector<2xf32>
    %47 = vector.multi_reduction <maximumf>, %46, %cst_17 [1] : vector<2x110xf32> to vector<2xf32>
    %48 = vector.shape_cast %47 : vector<2xf32> to vector<2x1xf32>
    %49 = vector.broadcast %48 : vector<2x1xf32> to vector<2x110xf32>
    %50 = arith.subf %46, %49 : vector<2x110xf32>
    %51 = math.exp %50 : vector<2x110xf32>
    %cst_18 = arith.constant dense<0.000000e+00> : vector<2xf32>
    %52 = vector.multi_reduction <add>, %51, %cst_18 [1] : vector<2x110xf32> to vector<2xf32>
    %53 = vector.shape_cast %52 : vector<2xf32> to vector<2x1xf32>
    %54 = math.log %53 : vector<2x1xf32>
    %55 = arith.addf %54, %48 : vector<2x1xf32>
    %56 = tpu.iota {dimensions = array<i32: 1>} : vector<2x110xi32>
    %57 = vector.broadcast %3 : vector<2x1xi32> to vector<2x110xi32>
    %58 = arith.cmpi eq, %56, %57 : vector<2x110xi32>
    %cst_19 = arith.constant 0.000000e+00 : f32
    %59 = vector.broadcast %cst_19 : f32 to vector<2x110xf32>
    %60 = arith.select %58, %46, %59 : vector<2x110xi1>, vector<2x110xf32>
    %cst_20 = arith.constant dense<0.000000e+00> : vector<2xf32>
    %61 = vector.multi_reduction <add>, %60, %cst_20 [1] : vector<2x110xf32> to vector<2xf32>
    %62 = vector.shape_cast %61 : vector<2xf32> to vector<2x1xf32>
    %63 = arith.subf %55, %62 : vector<2x1xf32>
    %64 = vector.shape_cast %63 : vector<2x1xf32> to vector<1x2x1xf32>
    %cst_21 = arith.constant dense<0.000000e+00> : vector<1xf32>
    %65 = vector.multi_reduction <add>, %64, %cst_21 [1, 2] : vector<1x2x1xf32> to vector<1xf32>
    %66 = vector.shape_cast %65 : vector<1xf32> to vector<1x1x1xf32>
    %67 = vector.extract %66[0, 0, 0] : f32 from vector<1x1x1xf32>
    %68 = vector.broadcast %67 : f32 to vector<1x1xf32>
    %cst_22 = arith.constant 2.000000e+00 : f32
    %69 = vector.broadcast %cst_22 : f32 to vector<1x1xf32>
    %70 = arith.divf %68, %69 : vector<1x1xf32>
    %c0_23 = arith.constant 0 : index
    %c0_24 = arith.constant 0 : index
    %71 = vector.load %arg6[%c0_23, %c0_24] : memref<1x1xf32, #tpu.memory_space<vmem>>, vector<1x1xf32>
    tpu.vector_store %arg6[%c0_23, %c0_24], %70 {strides = array<i32>} : memref<1x1xf32, #tpu.memory_space<vmem>>, vector<1x1xf32>,
    return
  }
  func.func @transform_0(%arg0: i32) -> (i32, i32, i32) {
    %c0_i32 = arith.constant 0 : i32
    %c0_i32_0 = arith.constant 0 : i32
    %c0_i32_1 = arith.constant 0 : i32
    %c0_i32_2 = arith.constant 0 : i32
    return %c0_i32, %c0_i32_0, %c0_i32_1 : i32, i32, i32
  }
  func.func @transform_1(%arg0: i32) -> (i32, i32, i32) {
    %c0_i32 = arith.constant 0 : i32
    %c0_i32_0 = arith.constant 0 : i32
    %c0_i32_1 = arith.constant 0 : i32
    %c0_i32_2 = arith.constant 0 : i32
    return %c0_i32, %c0_i32_0, %c0_i32_1 : i32, i32, i32
  }
  func.func @transform_2(%arg0: i32) -> (i32, i32) {
    %c0_i32 = arith.constant 0 : i32
    %c0_i32_0 = arith.constant 0 : i32
    %c0_i32_1 = arith.constant 0 : i32
    return %c0_i32, %c0_i32_0 : i32, i32
  }
  func.func @transform_3(%arg0: i32) -> (i32, i32) {
    %c0_i32 = arith.constant 0 : i32
    %c0_i32_0 = arith.constant 0 : i32
    %c0_i32_1 = arith.constant 0 : i32
    return %c0_i32, %c0_i32_0 : i32, i32
  }
  func.func @transform_4(%arg0: i32) -> (i32, i32) {
    %c0_i32 = arith.constant 0 : i32
    %c0_i32_0 = arith.constant 0 : i32
    %c0_i32_1 = arith.constant 0 : i32
    return %c0_i32, %c0_i32_0 : i32, i32
  }
  func.func @transform_5(%arg0: i32) -> (i32, i32) {
    %c0_i32 = arith.constant 0 : i32
    %c0_i32_0 = arith.constant 0 : i32
    %c0_i32_1 = arith.constant 0 : i32
    return %c0_i32, %c0_i32_0 : i32, i32
  }
}

</mosaic_0001>

<llo_original>
// kernel: tpu_custom_call.1
$region0: #{tpu_custom_call.1}
  #allocation0 [shape = 'u32[]', space=smem, size = 0x4, offset = 0x4, fixed_abs, tag = 'smem constant byte address 0x4 - core index']
  #allocation1 [shape = 'u32[144,128]{1,0:T(1,128)}', space=vmem, size = 0x12000, scoped, tag = 'internal scratch']
  %s0 = inlined_call_operand.vmem [shape: f32[2,24,16], index: 0, kind: input, shape index: {}]
  %s1 = inlined_call_operand.vmem [shape: f32[1,24,16], index: 1, kind: input, shape index: {}]
  %s2 = inlined_call_operand.vmem [shape: f32[2,1], index: 2, kind: input, shape index: {}]
  %s3 = inlined_call_operand.vmem [shape: s32[2,1], index: 3, kind: input, shape index: {}]
  %s4 = inlined_call_operand.vmem [shape: f32[1,110], index: 4, kind: input, shape index: {}]
  %s5 = inlined_call_operand.hbm [shape: f32[1,1], index: 5, kind: output, shape index: {}]
  %s6 = sld [smem:[#allocation0]]
  $region30: #{tpu_custom_call.1} parent=0
    _
  %s8 = ssub.s32 1, %s6
  %s9 = scalar_select 0, %s8, %s6
  $region1: #{tpu_custom_call.1} parent=0
    #allocation2 [shape = 'u8[512]{0}', space=vmem, size = 0x400, scoped, tag = 'output window, operand 0, single buffered']
    #allocation3 [shape = 's32[1]{0}', space=sflag, size = 0x4, scoped, tag = 'scoped memory for tpu_custom_call.1']
    %10 = vsyncpa [#allocation3], 0
    // Predicated region
    $region2: #{tpu_custom_call.1} parent=1 // pred_check
      _
    $region3: #{tpu_custom_call.1} parent=1 // pred_check_branch
      %12 = sbr.rel (0) target = $region5
    $region4: #{tpu_custom_call.1} parent=1 // pred_region
      _
    $region5: #{tpu_custom_call.1} parent=1 // pred_fallthru
      _
    // Predicated region
    $region6: #{tpu_custom_call.1} parent=1 // pred_check
      _
    $region7: #{tpu_custom_call.1} parent=1 // pred_check_branch
      %14 = sbr.rel (0) target = $region9
    $region8: #{tpu_custom_call.1} parent=1 // pred_region
      _
    $region9: #{tpu_custom_call.1} parent=1 // pred_fallthru
      _
    // Predicated region
    $region10: #{tpu_custom_call.1} parent=1 // pred_check
      _
    $region11: #{tpu_custom_call.1} parent=1 // pred_check_branch
      %16 = sbr.rel (0) target = $region13
    $region12: #{tpu_custom_call.1} parent=1 // pred_region
      _
    $region13: #{tpu_custom_call.1} parent=1 // pred_fallthru
      _
    // Predicated region
    $region14: #{tpu_custom_call.1} parent=1 // pred_check
      _
    $region15: #{tpu_custom_call.1} parent=1 // pred_check_branch
      %18 = sbr.rel (0) target = $region17
    $region16: #{tpu_custom_call.1} parent=1 // pred_region
      _
    $region17: #{tpu_custom_call.1} parent=1 // pred_fallthru
      _
    // Predicated region
    $region18: #{tpu_custom_call.1} parent=1 // pred_check
      _
    $region19: #{tpu_custom_call.1} parent=1 // pred_check_branch
      %20 = sbr.rel (0) target = $region21
    $region20: #{tpu_custom_call.1} parent=1 // pred_region
      _
    $region21: #{tpu_custom_call.1} parent=1 // pred_fallthru
      _
    %v21 = vld [vmem:[%s0] sm:$0xff]
    %v22 = vld [vmem:[%s0 + $0x8] sm:$0xff]
    %v23 = vld [vmem:[%s0 + $0x10] sm:$0xff]
    %v24 = vld [vmem:[%s0 + $0x18] sm:$0xff]
    %v25 = vld [vmem:[%s0 + $0x20] sm:$0xff]
    %v26 = vld [vmem:[%s0 + $0x28] sm:$0xff]
    %v27 = vld [vmem:[%s1] sm:$0xff]
    %v28 = vld [vmem:[%s1 + $0x8] sm:$0xff]
    %v29 = vld [vmem:[%s1 + $0x10] sm:$0xff]
    %v30 = vld [vmem:[%s2] sm:$0x3]
    %v31 = vld [vmem:[%s3] sm:$0x3]
    %v32 = vld [vmem:[%s4] sm:$0x1]
    %v33 = vmul.f32 %v21, %v27
    %v34 = vmul.f32 %v22, %v28
    %v35 = vmul.f32 %v23, %v29
    %v36 = vmul.f32 %v24, %v27
    %v37 = vmul.f32 %v25, %v28
    %v38 = vmul.f32 %v26, %v29
    %v39 = vrcp.pop %v30
    %v40 = vmul.f32 %v32, 6.2831855
    %v42 = vlaneseq
    %v43 = vshrl.u32 %v42, 7
    %v44 = vsub.s32 0, %v43
    %v45 = vrot.slane %v40, %v44
    %48 = vset.pattern.permute.xlu0 0
    %49 = vperm.xlu0 %48, %v39
    %v50 = vpop.permute.xlu0 %49
    %v52 = vmul.f32 %v45, %v50
    %v53 = vlaneseq
    %v54 = vshrl.u32 %v53, 7
    %v55 = vadd.s32 %v54, 8
    %v56 = vcvt.s32.f32 %v54
    %v57 = vcvt.s32.f32 %v55
    %v58 = vadd.s32 %v54, 16
    %v59 = vcvt.s32.f32 %v58
    %v62 = vunpack.c.l.s4 1966171168
    %v63 = vunpack.c.0.s8 %v62
    %v64 = vlaneseq
    %v65 = vshrl.u32 %v64, 7
    %v66 = vsub.s32 %v63, %v65
    %v67 = vrot.slane %v52, %v66
    %v68 = vcombine.high %v67, %v67
    %v70 = vunpack.c.l.s4 1966171168
    %v71 = vunpack.c.0.s8 %v70
    %v72 = vlaneseq
    %v73 = vshrl.u32 %v72, 7
    %v74 = vsub.s32 %v71, %v73
    %v75 = vrot.slane %v67, %v74
    %v77 = vunpack.c.l.s4 1966171168
    %v78 = vunpack.c.0.s8 %v77
    %v79 = vlaneseq
    %v80 = vshrl.u32 %v79, 7
    %v81 = vsub.s32 %v78, %v80
    %v82 = vrot.slane %v68, %v81
    %v83 = vlaneseq
    %v84 = vshrl.u32 %v83, 7
    %v85 = vsub.s32 0, %v84
    %v86 = vrot.slane %v75, %v85
    %v87 = vlaneseq
    %v88 = vshrl.u32 %v87, 7
    %v89 = vsub.s32 0, %v88
    %v90 = vrot.slane %v82, %v89
    %v93 = vmul.f32 %v56, %v86
    %v94 = vmul.f32 %v57, %v86
    %v95 = vmul.f32 %v56, %v90
    %v96 = vmul.f32 %v57, %v90
    %v97 = vmul.f32 %v52, 16.0
    %v100 = vunpack.c.l.s4 1966171168
    %v101 = vunpack.c.0.s8 %v100
    %v102 = vlaneseq
    %v103 = vshrl.u32 %v102, 7
    %v104 = vsub.s32 %v101, %v103
    %v105 = vrot.slane %v97, %v104
    %v106 = vcombine.high %v105, %v105
    %v108 = vunpack.c.l.s4 1966171168
    %v109 = vunpack.c.0.s8 %v108
    %v110 = vlaneseq
    %v111 = vshrl.u32 %v110, 7
    %v112 = vsub.s32 %v109, %v111
    %v113 = vrot.slane %v105, %v112
    %v115 = vunpack.c.l.s4 1966171168
    %v116 = vunpack.c.0.s8 %v115
    %v117 = vlaneseq
    %v118 = vshrl.u32 %v117, 7
    %v119 = vsub.s32 %v116, %v118
    %v120 = vrot.slane %v106, %v119
    %v121 = vlaneseq
    %v122 = vshrl.u32 %v121, 7
    %v123 = vsub.s32 0, %v122
    %v124 = vrot.slane %v113, %v123
    %v125 = vlaneseq
    %v126 = vshrl.u32 %v125, 7
    %v127 = vsub.s32 0, %v126
    %v128 = vrot.slane %v120, %v127
    %v131 = vmul.f32 %v56, %v124
    %v132 = vmul.f32 %v57, %v124
    %v133 = vmul.f32 %v59, %v124
    %v134 = vmul.f32 %v56, %v128
    %v135 = vmul.f32 %v57, %v128
    %v136 = vmul.f32 %v59, %v128
    %v137 = vand.u32 2147483647, %v93
    %vm138 = vcmp.le.f32.partialorder %v137, 0.7853982
    %vm139 = vcmp.lt.s32.totalorder %v93, 0
    %v140 = vand.u32 %v93, 2139095040
    %v141 = vshrl.u32 %v140, 23
    %v142 = vsub.s32 %v141, 127
    %v143 = vand.u32 2147483647, %v93
    %v144 = vand.u32 %v143, 8388607
    %v145 = vor.u32 %v144, 8388608
    %v146 = vsub.s32 0, %v145
    %v147 = vadd.s32 %v142, 1
    %vm148 = vcmp.gt.s32.totalorder %v147, 0
    %v149 = vsel %vm148, %v147, 0
    %v150 = vshrl.u32 %v149, 5
    %v151 = vand.u32 %v149, 31
    %v152 = vsub.s32 32, %v151
    %v153 = vshrl.u32 683565275, %v152
    %v154 = vshll.u32 683565275, %v151
    %v155 = vshrl.u32 2475754826, %v152
    %v156 = vor.u32 %v154, %v155
    %v157 = vshll.u32 2475754826, %v151
    %v158 = vshrl.u32 2131351028, %v152
    %v159 = vor.u32 %v157, %v158
    %v160 = vshll.u32 2131351028, %v151
    %v161 = vshrl.u32 2102212464, %v152
    %v162 = vor.u32 %v160, %v161
    %v163 = vshll.u32 2102212464, %v151
    %v164 = vshrl.u32 920167782, %v152
    %v165 = vor.u32 %v163, %v164
    %v166 = vshll.u32 920167782, %v151
    %v167 = vshrl.u32 1326507024, %v152
    %v168 = vor.u32 %v166, %v167
    %vm169 = vcmp.lt.s32.totalorder %v150, 1
    %vm170 = vcmp.lt.s32.totalorder %v150, 2
    %vm171 = vcmp.lt.s32.totalorder %v150, 3
    %vm172 = vcmp.lt.s32.totalorder %v150, 4
    %v173 = vsel %vm169, %v153, %v156
    %v174 = vsel %vm172, %v162, 2102212464
    %v175 = vsel %vm171, %v159, %v174
    %v176 = vsel %vm170, %v173, %v175
    %v177 = vsel %vm169, %v156, %v159
    %v178 = vsel %vm172, %v165, 920167782
    %v179 = vsel %vm171, %v162, %v178
    %v180 = vsel %vm170, %v177, %v179
    %v181 = vsel %vm169, %v159, %v162
    %v182 = vsel %vm172, %v168, 1326507024
    %v183 = vsel %vm171, %v165, %v182
    %v184 = vsel %vm170, %v181, %v183
    %v185 = vshll.u32 %v145, 8
    %v186 = vmul.u32.u64.compose %v185, %v184
    %v187 = vextract.low.u32 %v186
    %v188 = vextract.high.u32 %v186
    %v189 = vmul.u32.u64.compose %v185, %v180
    %v190 = vextract.low.u32 %v189
    %v191 = vextract.high.u32 %v189
    %v192 = vmul.u32 %v185, %v176
    %v193 = vadd.s32 %v188, %v190
    %vm194 = vc.u32 %v188, %v190
    %v195 = vadd.s32 %v191, 1
    %v196 = vsel %vm194, %v195, %v191
    %v197 = vadd.s32 %v192, %v196
    %v198 = vadd.s32 %v197, 536870912
    %v199 = vshrl.u32 %v198, 30
    %v200 = vshll.u32 %v199, 30
    %v201 = vsub.s32 %v197, %v200
    %vm202 = vcmp.lt.s32.totalorder %v201, 0
    %v203 = vsub.s32 0, %v201
    %v204 = vsel %vm202, %v203, %v201
    %v205 = vclz %v204
    %v206 = vsub.s32 %v205, 2
    %vm207 = vcmp.gt.s32.totalorder 0, %v206
    %v208 = vsel %vm207, 0, %v206
    %v209 = vsub.s32 32, %v208
    %v210 = vshll.u32 %v201, %v208
    %v211 = vshrl.u32 %v193, %v209
    %v212 = vor.u32 %v210, %v211
    %v213 = vsub.s32 4294967266, %v208
    %v214 = vadd.s32 %v213, 127
    %v215 = vshll.u32 %v214, 23
    %v216 = vor.u32 4788187, %v215
    %v217 = vand.u32 2147483647, %v216
    %v219 = vcvt.s32.f32 %v212
    %v220 = vmul.f32 %v219, %v217
    %v221 = vxor.u32 %v220, 2147483648
    %v222 = vsel %vm139, %v221, %v220
    %v223 = vsub.s32 4, %v199
    %v224 = vsel %vm139, %v223, %v199
    %v225 = vsel %vm138, %v93, %v222
    %v226 = vsel %vm138, 0, %v224
    %v227 = vcosq.f32.pop %v225
    %v228 = vsinq.f32.pop %v225
    %vm229 = vweird.f32 %v93
    %v230 = vadd.s32 %v226, 3
    %v231 = vand.u32 %v230, 3
    %vm232 = vcmp.lt.s32.totalorder %v231, 2
    %vm233 = vcmp.eq.s32.totalorder %v231, 0
    %v234 = vxor.u32 %v228, 2147483648
    %v235 = vsel %vm233, %v227, %v234
    %vm236 = vcmp.eq.s32.totalorder %v231, 2
    %v237 = vxor.u32 %v227, 2147483648
    %v238 = vsel %vm236, %v237, %v228
    %v239 = vsel %vm232, %v235, %v238
    %v240 = vsel %vm229, nan, %v239
    %v241 = vand.u32 2147483647, %v94
    %vm242 = vcmp.le.f32.partialorder %v241, 0.7853982
    %vm243 = vcmp.lt.s32.totalorder %v94, 0
    %v244 = vand.u32 %v94, 2139095040
    %v245 = vshrl.u32 %v244, 23
    %v246 = vsub.s32 %v245, 127
    %v247 = vand.u32 2147483647, %v94
    %v248 = vand.u32 %v247, 8388607
    %v249 = vor.u32 %v248, 8388608
    %v250 = vsub.s32 0, %v249
    %v251 = vadd.s32 %v246, 1
    %vm252 = vcmp.gt.s32.totalorder %v251, 0
    %v253 = vsel %vm252, %v251, 0
    %v254 = vshrl.u32 %v253, 5
    %v255 = vand.u32 %v253, 31
    %v256 = vsub.s32 32, %v255
    %v257 = vshrl.u32 683565275, %v256
    %v258 = vshll.u32 683565275, %v255
    %v259 = vshrl.u32 2475754826, %v256
    %v260 = vor.u32 %v258, %v259
    %v261 = vshll.u32 2475754826, %v255
    %v262 = vshrl.u32 2131351028, %v256
    %v263 = vor.u32 %v261, %v262
    %v264 = vshll.u32 2131351028, %v255
    %v265 = vshrl.u32 2102212464, %v256
    %v266 = vor.u32 %v264, %v265
    %v267 = vshll.u32 2102212464, %v255
    %v268 = vshrl.u32 920167782, %v256
    %v269 = vor.u32 %v267, %v268
    %v270 = vshll.u32 920167782, %v255
    %v271 = vshrl.u32 1326507024, %v256
    %v272 = vor.u32 %v270, %v271
    %vm273 = vcmp.lt.s32.totalorder %v254, 1
    %vm274 = vcmp.lt.s32.totalorder %v254, 2
    %vm275 = vcmp.lt.s32.totalorder %v254, 3
    %vm276 = vcmp.lt.s32.totalorder %v254, 4
    %v277 = vsel %vm273, %v257, %v260
    %v278 = vsel %vm276, %v266, 2102212464
    %v279 = vsel %vm275, %v263, %v278
    %v280 = vsel %vm274, %v277, %v279
    %v281 = vsel %vm273, %v260, %v263
    %v282 = vsel %vm276, %v269, 920167782
    %v283 = vsel %vm275, %v266, %v282
    %v284 = vsel %vm274, %v281, %v283
    %v285 = vsel %vm273, %v263, %v266
    %v286 = vsel %vm276, %v272, 1326507024
    %v287 = vsel %vm275, %v269, %v286
    %v288 = vsel %vm274, %v285, %v287
    %v289 = vshll.u32 %v249, 8
    %v290 = vmul.u32.u64.compose %v289, %v288
    %v291 = vextract.low.u32 %v290
    %v292 = vextract.high.u32 %v290
    %v293 = vmul.u32.u64.compose %v289, %v284
    %v294 = vextract.low.u32 %v293
    %v295 = vextract.high.u32 %v293
    %v296 = vmul.u32 %v289, %v280
    %v297 = vadd.s32 %v292, %v294
    %vm298 = vc.u32 %v292, %v294
    %v299 = vadd.s32 %v295, 1
    %v300 = vsel %vm298, %v299, %v295
    %v301 = vadd.s32 %v296, %v300
    %v302 = vadd.s32 %v301, 536870912
    %v303 = vshrl.u32 %v302, 30
    %v304 = vshll.u32 %v303, 30
    %v305 = vsub.s32 %v301, %v304
    %vm306 = vcmp.lt.s32.totalorder %v305, 0
    %v307 = vsub.s32 0, %v305
    %v308 = vsel %vm306, %v307, %v305
    %v309 = vclz %v308
    %v310 = vsub.s32 %v309, 2
    %vm311 = vcmp.gt.s32.totalorder 0, %v310
    %v312 = vsel %vm311, 0, %v310
    %v313 = vsub.s32 32, %v312
    %v314 = vshll.u32 %v305, %v312
    %v315 = vshrl.u32 %v297, %v313
    %v316 = vor.u32 %v314, %v315
    %v317 = vsub.s32 4294967266, %v312
    %v318 = vadd.s32 %v317, 127
    %v319 = vshll.u32 %v318, 23
    %v320 = vor.u32 4788187, %v319
    %v321 = vand.u32 2147483647, %v320
    %v323 = vcvt.s32.f32 %v316
    %v324 = vmul.f32 %v323, %v321
    %v325 = vxor.u32 %v324, 2147483648
    %v326 = vsel %vm243, %v325, %v324
    %v327 = vsub.s32 4, %v303
    %v328 = vsel %vm243, %v327, %v303
    %v329 = vsel %vm242, %v94, %v326
    %v330 = vsel %vm242, 0, %v328
    %v331 = vcosq.f32.pop %v329
    %v332 = vsinq.f32.pop %v329
    %vm333 = vweird.f32 %v94
    %v334 = vadd.s32 %v330, 3
    %v335 = vand.u32 %v334, 3
    %vm336 = vcmp.lt.s32.totalorder %v335, 2
    %vm337 = vcmp.eq.s32.totalorder %v335, 0
    %v338 = vxor.u32 %v332, 2147483648
    %v339 = vsel %vm337, %v331, %v338
    %vm340 = vcmp.eq.s32.totalorder %v335, 2
    %v341 = vxor.u32 %v331, 2147483648
    %v342 = vsel %vm340, %v341, %v332
    %v343 = vsel %vm336, %v339, %v342
    %v344 = vsel %vm333, nan, %v343
    %v345 = vand.u32 2147483647, %v95
    %vm346 = vcmp.le.f32.partialorder %v345, 0.7853982
    %vm347 = vcmp.lt.s32.totalorder %v95, 0
    %v348 = vand.u32 %v95, 2139095040
    %v349 = vshrl.u32 %v348, 23
    %v350 = vsub.s32 %v349, 127
    %v351 = vand.u32 2147483647, %v95
    %v352 = vand.u32 %v351, 8388607
    %v353 = vor.u32 %v352, 8388608
    %v354 = vsub.s32 0, %v353
    %v355 = vadd.s32 %v350, 1
    %vm356 = vcmp.gt.s32.totalorder %v355, 0
    %v357 = vsel %vm356, %v355, 0
    %v358 = vshrl.u32 %v357, 5
    %v359 = vand.u32 %v357, 31
    %v360 = vsub.s32 32, %v359
    %v361 = vshrl.u32 683565275, %v360
    %v362 = vshll.u32 683565275, %v359
    %v363 = vshrl.u32 2475754826, %v360
    %v364 = vor.u32 %v362, %v363
    %v365 = vshll.u32 2475754826, %v359
    %v366 = vshrl.u32 2131351028, %v360
    %v367 = vor.u32 %v365, %v366
    %v368 = vshll.u32 2131351028, %v359
    %v369 = vshrl.u32 2102212464, %v360
    %v370 = vor.u32 %v368, %v369
    %v371 = vshll.u32 2102212464, %v359
    %v372 = vshrl.u32 920167782, %v360
    %v373 = vor.u32 %v371, %v372
    %v374 = vshll.u32 920167782, %v359
    %v375 = vshrl.u32 1326507024, %v360
    %v376 = vor.u32 %v374, %v375
    %vm377 = vcmp.lt.s32.totalorder %v358, 1
    %vm378 = vcmp.lt.s32.totalorder %v358, 2
    %vm379 = vcmp.lt.s32.totalorder %v358, 3
    %vm380 = vcmp.lt.s32.totalorder %v358, 4
    %v381 = vsel %vm377, %v361, %v364
    %v382 = vsel %vm380, %v370, 2102212464
    %v383 = vsel %vm379, %v367, %v382
    %v384 = vsel %vm378, %v381, %v383
    %v385 = vsel %vm377, %v364, %v367
    %v386 = vsel %vm380, %v373, 920167782
    %v387 = vsel %vm379, %v370, %v386
    %v388 = vsel %vm378, %v385, %v387
    %v389 = vsel %vm377, %v367, %v370
    %v390 = vsel %vm380, %v376, 1326507024
    %v391 = vsel %vm379, %v373, %v390
    %v392 = vsel %vm378, %v389, %v391
    %v393 = vshll.u32 %v353, 8
    %v394 = vmul.u32.u64.compose %v393, %v392
    %v395 = vextract.low.u32 %v394
    %v396 = vextract.high.u32 %v394
    %v397 = vmul.u32.u64.compose %v393, %v388
    %v398 = vextract.low.u32 %v397
    %v399 = vextract.high.u32 %v397
    %v400 = vmul.u32 %v393, %v384
    %v401 = vadd.s32 %v396, %v398
    %vm402 = vc.u32 %v396, %v398
    %v403 = vadd.s32 %v399, 1
    %v404 = vsel %vm402, %v403, %v399
    %v405 = vadd.s32 %v400, %v404
    %v406 = vadd.s32 %v405, 536870912
    %v407 = vshrl.u32 %v406, 30
    %v408 = vshll.u32 %v407, 30
    %v409 = vsub.s32 %v405, %v408
    %vm410 = vcmp.lt.s32.totalorder %v409, 0
    %v411 = vsub.s32 0, %v409
    %v412 = vsel %vm410, %v411, %v409
    %v413 = vclz %v412
    %v414 = vsub.s32 %v413, 2
    %vm415 = vcmp.gt.s32.totalorder 0, %v414
    %v416 = vsel %vm415, 0, %v414
    %v417 = vsub.s32 32, %v416
    %v418 = vshll.u32 %v409, %v416
    %v419 = vshrl.u32 %v401, %v417
    %v420 = vor.u32 %v418, %v419
    %v421 = vsub.s32 4294967266, %v416
    %v422 = vadd.s32 %v421, 127
    %v423 = vshll.u32 %v422, 23
    %v424 = vor.u32 4788187, %v423
    %v425 = vand.u32 2147483647, %v424
    %v427 = vcvt.s32.f32 %v420
    %v428 = vmul.f32 %v427, %v425
    %v429 = vxor.u32 %v428, 2147483648
    %v430 = vsel %vm347, %v429, %v428
    %v431 = vsub.s32 4, %v407
    %v432 = vsel %vm347, %v431, %v407
    %v433 = vsel %vm346, %v95, %v430
    %v434 = vsel %vm346, 0, %v432
    %v435 = vcosq.f32.pop %v433
    %v436 = vsinq.f32.pop %v433
    %vm437 = vweird.f32 %v95
    %v438 = vadd.s32 %v434, 3
    %v439 = vand.u32 %v438, 3
    %vm440 = vcmp.lt.s32.totalorder %v439, 2
    %vm441 = vcmp.eq.s32.totalorder %v439, 0
    %v442 = vxor.u32 %v436, 2147483648
    %v443 = vsel %vm441, %v435, %v442
    %vm444 = vcmp.eq.s32.totalorder %v439, 2
    %v445 = vxor.u32 %v435, 2147483648
    %v446 = vsel %vm444, %v445, %v436
    %v447 = vsel %vm440, %v443, %v446
    %v448 = vsel %vm437, nan, %v447
    %v449 = vand.u32 2147483647, %v96
    %vm450 = vcmp.le.f32.partialorder %v449, 0.7853982
    %vm451 = vcmp.lt.s32.totalorder %v96, 0
    %v452 = vand.u32 %v96, 2139095040
    %v453 = vshrl.u32 %v452, 23
    %v454 = vsub.s32 %v453, 127
    %v455 = vand.u32 2147483647, %v96
    %v456 = vand.u32 %v455, 8388607
    %v457 = vor.u32 %v456, 8388608
    %v458 = vsub.s32 0, %v457
    %v459 = vadd.s32 %v454, 1
    %vm460 = vcmp.gt.s32.totalorder %v459, 0
    %v461 = vsel %vm460, %v459, 0
    %v462 = vshrl.u32 %v461, 5
    %v463 = vand.u32 %v461, 31
    %v464 = vsub.s32 32, %v463
    %v465 = vshrl.u32 683565275, %v464
    %v466 = vshll.u32 683565275, %v463
    %v467 = vshrl.u32 2475754826, %v464
    %v468 = vor.u32 %v466, %v467
    %v469 = vshll.u32 2475754826, %v463
    %v470 = vshrl.u32 2131351028, %v464
    %v471 = vor.u32 %v469, %v470
    %v472 = vshll.u32 2131351028, %v463
    %v473 = vshrl.u32 2102212464, %v464
    %v474 = vor.u32 %v472, %v473
    %v475 = vshll.u32 2102212464, %v463
    %v476 = vshrl.u32 920167782, %v464
    %v477 = vor.u32 %v475, %v476
    %v478 = vshll.u32 920167782, %v463
    %v479 = vshrl.u32 1326507024, %v464
    %v480 = vor.u32 %v478, %v479
    %vm481 = vcmp.lt.s32.totalorder %v462, 1
    %vm482 = vcmp.lt.s32.totalorder %v462, 2
    %vm483 = vcmp.lt.s32.totalorder %v462, 3
    %vm484 = vcmp.lt.s32.totalorder %v462, 4
    %v485 = vsel %vm481, %v465, %v468
    %v486 = vsel %vm484, %v474, 2102212464
    %v487 = vsel %vm483, %v471, %v486
    %v488 = vsel %vm482, %v485, %v487
    %v489 = vsel %vm481, %v468, %v471
    %v490 = vsel %vm484, %v477, 920167782
    %v491 = vsel %vm483, %v474, %v490
    %v492 = vsel %vm482, %v489, %v491
    %v493 = vsel %vm481, %v471, %v474
    %v494 = vsel %vm484, %v480, 1326507024
    %v495 = vsel %vm483, %v477, %v494
    %v496 = vsel %vm482, %v493, %v495
    %v497 = vshll.u32 %v457, 8
    %v498 = vmul.u32.u64.compose %v497, %v496
    %v499 = vextract.low.u32 %v498
    %v500 = vextract.high.u32 %v498
    %v501 = vmul.u32.u64.compose %v497, %v492
    %v502 = vextract.low.u32 %v501
    %v503 = vextract.high.u32 %v501
    %v504 = vmul.u32 %v497, %v488
    %v505 = vadd.s32 %v500, %v502
    %vm506 = vc.u32 %v500, %v502
    %v507 = vadd.s32 %v503, 1
    %v508 = vsel %vm506, %v507, %v503
    %v509 = vadd.s32 %v504, %v508
    %v510 = vadd.s32 %v509, 536870912
    %v511 = vshrl.u32 %v510, 30
    %v512 = vshll.u32 %v511, 30
    %v513 = vsub.s32 %v509, %v512
    %vm514 = vcmp.lt.s32.totalorder %v513, 0
    %v515 = vsub.s32 0, %v513
    %v516 = vsel %vm514, %v515, %v513
    %v517 = vclz %v516
    %v518 = vsub.s32 %v517, 2
    %vm519 = vcmp.gt.s32.totalorder 0, %v518
    %v520 = vsel %vm519, 0, %v518
    %v521 = vsub.s32 32, %v520
    %v522 = vshll.u32 %v513, %v520
    %v523 = vshrl.u32 %v505, %v521
    %v524 = vor.u32 %v522, %v523
    %v525 = vsub.s32 4294967266, %v520
    %v526 = vadd.s32 %v525, 127
    %v527 = vshll.u32 %v526, 23
    %v528 = vor.u32 4788187, %v527
    %v529 = vand.u32 2147483647, %v528
    %v531 = vcvt.s32.f32 %v524
    %v532 = vmul.f32 %v531, %v529
    %v533 = vxor.u32 %v532, 2147483648
    %v534 = vsel %vm451, %v533, %v532
    %v535 = vsub.s32 4, %v511
    %v536 = vsel %vm451, %v535, %v511
    %v537 = vsel %vm450, %v96, %v534
    %v538 = vsel %vm450, 0, %v536
    %v539 = vcosq.f32.pop %v537
    %v540 = vsinq.f32.pop %v537
    %vm541 = vweird.f32 %v96
    %v542 = vadd.s32 %v538, 3
    %v543 = vand.u32 %v542, 3
    %vm544 = vcmp.lt.s32.totalorder %v543, 2
    %vm545 = vcmp.eq.s32.totalorder %v543, 0
    %v546 = vxor.u32 %v540, 2147483648
    %v547 = vsel %vm545, %v539, %v546
    %vm548 = vcmp.eq.s32.totalorder %v543, 2
    %v549 = vxor.u32 %v539, 2147483648
    %v550 = vsel %vm548, %v549, %v540
    %v551 = vsel %vm544, %v547, %v550
    %v552 = vsel %vm541, nan, %v551
    %v553 = vand.u32 2147483647, %v93
    %vm554 = vcmp.le.f32.partialorder %v553, 0.7853982
    %vm555 = vcmp.lt.s32.totalorder %v93, 0
    %v556 = vand.u32 %v93, 2139095040
    %v557 = vshrl.u32 %v556, 23
    %v558 = vsub.s32 %v557, 127
    %v559 = vand.u32 2147483647, %v93
    %v560 = vand.u32 %v559, 8388607
    %v561 = vor.u32 %v560, 8388608
    %v562 = vsub.s32 0, %v561
    %v563 = vadd.s32 %v558, 1
    %vm564 = vcmp.gt.s32.totalorder %v563, 0
    %v565 = vsel %vm564, %v563, 0
    %v566 = vshrl.u32 %v565, 5
    %v567 = vand.u32 %v565, 31
    %v568 = vsub.s32 32, %v567
    %v569 = vshrl.u32 683565275, %v568
    %v570 = vshll.u32 683565275, %v567
    %v571 = vshrl.u32 2475754826, %v568
    %v572 = vor.u32 %v570, %v571
    %v573 = vshll.u32 2475754826, %v567
    %v574 = vshrl.u32 2131351028, %v568
    %v575 = vor.u32 %v573, %v574
    %v576 = vshll.u32 2131351028, %v567
    %v577 = vshrl.u32 2102212464, %v568
    %v578 = vor.u32 %v576, %v577
    %v579 = vshll.u32 2102212464, %v567
    %v580 = vshrl.u32 920167782, %v568
    %v581 = vor.u32 %v579, %v580
    %v582 = vshll.u32 920167782, %v567
    %v583 = vshrl.u32 1326507024, %v568
    %v584 = vor.u32 %v582, %v583
    %vm585 = vcmp.lt.s32.totalorder %v566, 1
    %vm586 = vcmp.lt.s32.totalorder %v566, 2
    %vm587 = vcmp.lt.s32.totalorder %v566, 3
    %vm588 = vcmp.lt.s32.totalorder %v566, 4
    %v589 = vsel %vm585, %v569, %v572
    %v590 = vsel %vm588, %v578, 2102212464
    %v591 = vsel %vm587, %v575, %v590
    %v592 = vsel %vm586, %v589, %v591
    %v593 = vsel %vm585, %v572, %v575
    %v594 = vsel %vm588, %v581, 920167782
    %v595 = vsel %vm587, %v578, %v594
    %v596 = vsel %vm586, %v593, %v595
    %v597 = vsel %vm585, %v575, %v578
    %v598 = vsel %vm588, %v584, 1326507024
    %v599 = vsel %vm587, %v581, %v598
    %v600 = vsel %vm586, %v597, %v599
    %v601 = vshll.u32 %v561, 8
    %v602 = vmul.u32.u64.compose %v601, %v600
    %v603 = vextract.low.u32 %v602
    %v604 = vextract.high.u32 %v602
    %v605 = vmul.u32.u64.compose %v601, %v596
    %v606 = vextract.low.u32 %v605
    %v607 = vextract.high.u32 %v605
    %v608 = vmul.u32 %v601, %v592
    %v609 = vadd.s32 %v604, %v606
    %vm610 = vc.u32 %v604, %v606
    %v611 = vadd.s32 %v607, 1
    %v612 = vsel %vm610, %v611, %v607
    %v613 = vadd.s32 %v608, %v612
    %v614 = vadd.s32 %v613, 536870912
    %v615 = vshrl.u32 %v614, 30
    %v616 = vshll.u32 %v615, 30
    %v617 = vsub.s32 %v613, %v616
    %vm618 = vcmp.lt.s32.totalorder %v617, 0
    %v619 = vsub.s32 0, %v617
    %v620 = vsel %vm618, %v619, %v617
    %v621 = vclz %v620
    %v622 = vsub.s32 %v621, 2
    %vm623 = vcmp.gt.s32.totalorder 0, %v622
    %v624 = vsel %vm623, 0, %v622
    %v625 = vsub.s32 32, %v624
    %v626 = vshll.u32 %v617, %v624
    %v627 = vshrl.u32 %v609, %v625
    %v628 = vor.u32 %v626, %v627
    %v629 = vsub.s32 4294967266, %v624
    %v630 = vadd.s32 %v629, 127
    %v631 = vshll.u32 %v630, 23
    %v632 = vor.u32 4788187, %v631
    %v633 = vand.u32 2147483647, %v632
    %v635 = vcvt.s32.f32 %v628
    %v636 = vmul.f32 %v635, %v633
    %v637 = vxor.u32 %v636, 2147483648
    %v638 = vsel %vm555, %v637, %v636
    %v639 = vsub.s32 4, %v615
    %v640 = vsel %vm555, %v639, %v615
    %v641 = vsel %vm554, %v93, %v638
    %v642 = vsel %vm554, 0, %v640
    %v643 = vcosq.f32.pop %v641
    %v644 = vsinq.f32.pop %v641
    %vm645 = vweird.f32 %v93
    %v646 = vand.u32 %v642, 3
    %vm647 = vcmp.lt.s32.totalorder %v646, 2
    %vm648 = vcmp.eq.s32.totalorder %v646, 0
    %v649 = vxor.u32 %v644, 2147483648
    %v650 = vsel %vm648, %v643, %v649
    %vm651 = vcmp.eq.s32.totalorder %v646, 2
    %v652 = vxor.u32 %v643, 2147483648
    %v653 = vsel %vm651, %v652, %v644
    %v654 = vsel %vm647, %v650, %v653
    %v655 = vsel %vm645, nan, %v654
    %v656 = vand.u32 2147483647, %v94
    %vm657 = vcmp.le.f32.partialorder %v656, 0.7853982
    %vm658 = vcmp.lt.s32.totalorder %v94, 0
    %v659 = vand.u32 %v94, 2139095040
    %v660 = vshrl.u32 %v659, 23
    %v661 = vsub.s32 %v660, 127
    %v662 = vand.u32 2147483647, %v94
    %v663 = vand.u32 %v662, 8388607
    %v664 = vor.u32 %v663, 8388608
    %v665 = vsub.s32 0, %v664
    %v666 = vadd.s32 %v661, 1
    %vm667 = vcmp.gt.s32.totalorder %v666, 0
    %v668 = vsel %vm667, %v666, 0
    %v669 = vshrl.u32 %v668, 5
    %v670 = vand.u32 %v668, 31
    %v671 = vsub.s32 32, %v670
    %v672 = vshrl.u32 683565275, %v671
    %v673 = vshll.u32 683565275, %v670
    %v674 = vshrl.u32 2475754826, %v671
    %v675 = vor.u32 %v673, %v674
    %v676 = vshll.u32 2475754826, %v670
    %v677 = vshrl.u32 2131351028, %v671
    %v678 = vor.u32 %v676, %v677
    %v679 = vshll.u32 2131351028, %v670
    %v680 = vshrl.u32 2102212464, %v671
    %v681 = vor.u32 %v679, %v680
    %v682 = vshll.u32 2102212464, %v670
    %v683 = vshrl.u32 920167782, %v671
    %v684 = vor.u32 %v682, %v683
    %v685 = vshll.u32 920167782, %v670
    %v686 = vshrl.u32 1326507024, %v671
    %v687 = vor.u32 %v685, %v686
    %vm688 = vcmp.lt.s32.totalorder %v669, 1
    %vm689 = vcmp.lt.s32.totalorder %v669, 2
    %vm690 = vcmp.lt.s32.totalorder %v669, 3
    %vm691 = vcmp.lt.s32.totalorder %v669, 4
    %v692 = vsel %vm688, %v672, %v675
    %v693 = vsel %vm691, %v681, 2102212464
    %v694 = vsel %vm690, %v678, %v693
    %v695 = vsel %vm689, %v692, %v694
    %v696 = vsel %vm688, %v675, %v678
    %v697 = vsel %vm691, %v684, 920167782
    %v698 = vsel %vm690, %v681, %v697
    %v699 = vsel %vm689, %v696, %v698
    %v700 = vsel %vm688, %v678, %v681
    %v701 = vsel %vm691, %v687, 1326507024
    %v702 = vsel %vm690, %v684, %v701
    %v703 = vsel %vm689, %v700, %v702
    %v704 = vshll.u32 %v664, 8
    %v705 = vmul.u32.u64.compose %v704, %v703
    %v706 = vextract.low.u32 %v705
    %v707 = vextract.high.u32 %v705
    %v708 = vmul.u32.u64.compose %v704, %v699
    %v709 = vextract.low.u32 %v708
    %v710 = vextract.high.u32 %v708
    %v711 = vmul.u32 %v704, %v695
    %v712 = vadd.s32 %v707, %v709
    %vm713 = vc.u32 %v707, %v709
    %v714 = vadd.s32 %v710, 1
    %v715 = vsel %vm713, %v714, %v710
    %v716 = vadd.s32 %v711, %v715
    %v717 = vadd.s32 %v716, 536870912
    %v718 = vshrl.u32 %v717, 30
    %v719 = vshll.u32 %v718, 30
    %v720 = vsub.s32 %v716, %v719
    %vm721 = vcmp.lt.s32.totalorder %v720, 0
    %v722 = vsub.s32 0, %v720
    %v723 = vsel %vm721, %v722, %v720
    %v724 = vclz %v723
    %v725 = vsub.s32 %v724, 2
    %vm726 = vcmp.gt.s32.totalorder 0, %v725
    %v727 = vsel %vm726, 0, %v725
    %v728 = vsub.s32 32, %v727
    %v729 = vshll.u32 %v720, %v727
    %v730 = vshrl.u32 %v712, %v728
    %v731 = vor.u32 %v729, %v730
    %v732 = vsub.s32 4294967266, %v727
    %v733 = vadd.s32 %v732, 127
    %v734 = vshll.u32 %v733, 23
    %v735 = vor.u32 4788187, %v734
    %v736 = vand.u32 2147483647, %v735
    %v738 = vcvt.s32.f32 %v731
    %v739 = vmul.f32 %v738, %v736
    %v740 = vxor.u32 %v739, 2147483648
    %v741 = vsel %vm658, %v740, %v739
    %v742 = vsub.s32 4, %v718
    %v743 = vsel %vm658, %v742, %v718
    %v744 = vsel %vm657, %v94, %v741
    %v745 = vsel %vm657, 0, %v743
    %v746 = vcosq.f32.pop %v744
    %v747 = vsinq.f32.pop %v744
    %vm748 = vweird.f32 %v94
    %v749 = vand.u32 %v745, 3
    %vm750 = vcmp.lt.s32.totalorder %v749, 2
    %vm751 = vcmp.eq.s32.totalorder %v749, 0
    %v752 = vxor.u32 %v747, 2147483648
    %v753 = vsel %vm751, %v746, %v752
    %vm754 = vcmp.eq.s32.totalorder %v749, 2
    %v755 = vxor.u32 %v746, 2147483648
    %v756 = vsel %vm754, %v755, %v747
    %v757 = vsel %vm750, %v753, %v756
    %v758 = vsel %vm748, nan, %v757
    %v759 = vand.u32 2147483647, %v95
    %vm760 = vcmp.le.f32.partialorder %v759, 0.7853982
    %vm761 = vcmp.lt.s32.totalorder %v95, 0
    %v762 = vand.u32 %v95, 2139095040
    %v763 = vshrl.u32 %v762, 23
    %v764 = vsub.s32 %v763, 127
    %v765 = vand.u32 2147483647, %v95
    %v766 = vand.u32 %v765, 8388607
    %v767 = vor.u32 %v766, 8388608
    %v768 = vsub.s32 0, %v767
    %v769 = vadd.s32 %v764, 1
    %vm770 = vcmp.gt.s32.totalorder %v769, 0
    %v771 = vsel %vm770, %v769, 0
    %v772 = vshrl.u32 %v771, 5
    %v773 = vand.u32 %v771, 31
    %v774 = vsub.s32 32, %v773
    %v775 = vshrl.u32 683565275, %v774
    %v776 = vshll.u32 683565275, %v773
    %v777 = vshrl.u32 2475754826, %v774
    %v778 = vor.u32 %v776, %v777
    %v779 = vshll.u32 2475754826, %v773
    %v780 = vshrl.u32 2131351028, %v774
    %v781 = vor.u32 %v779, %v780
    %v782 = vshll.u32 2131351028, %v773
    %v783 = vshrl.u32 2102212464, %v774
    %v784 = vor.u32 %v782, %v783
    %v785 = vshll.u32 2102212464, %v773
    %v786 = vshrl.u32 920167782, %v774
    %v787 = vor.u32 %v785, %v786
    %v788 = vshll.u32 920167782, %v773
    %v789 = vshrl.u32 1326507024, %v774
    %v790 = vor.u32 %v788, %v789
    %vm791 = vcmp.lt.s32.totalorder %v772, 1
    %vm792 = vcmp.lt.s32.totalorder %v772, 2
    %vm793 = vcmp.lt.s32.totalorder %v772, 3
    %vm794 = vcmp.lt.s32.totalorder %v772, 4
    %v795 = vsel %vm791, %v775, %v778
    %v796 = vsel %vm794, %v784, 2102212464
    %v797 = vsel %vm793, %v781, %v796
    %v798 = vsel %vm792, %v795, %v797
    %v799 = vsel %vm791, %v778, %v781
    %v800 = vsel %vm794, %v787, 920167782
    %v801 = vsel %vm793, %v784, %v800
    %v802 = vsel %vm792, %v799, %v801
    %v803 = vsel %vm791, %v781, %v784
    %v804 = vsel %vm794, %v790, 1326507024
    %v805 = vsel %vm793, %v787, %v804
    %v806 = vsel %vm792, %v803, %v805
    %v807 = vshll.u32 %v767, 8
    %v808 = vmul.u32.u64.compose %v807, %v806
    %v809 = vextract.low.u32 %v808
    %v810 = vextract.high.u32 %v808
    %v811 = vmul.u32.u64.compose %v807, %v802
    %v812 = vextract.low.u32 %v811
    %v813 = vextract.high.u32 %v811
    %v814 = vmul.u32 %v807, %v798
    %v815 = vadd.s32 %v810, %v812
    %vm816 = vc.u32 %v810, %v812
    %v817 = vadd.s32 %v813, 1
    %v818 = vsel %vm816, %v817, %v813
    %v819 = vadd.s32 %v814, %v818
    %v820 = vadd.s32 %v819, 536870912
    %v821 = vshrl.u32 %v820, 30
    %v822 = vshll.u32 %v821, 30
    %v823 = vsub.s32 %v819, %v822
    %vm824 = vcmp.lt.s32.totalorder %v823, 0
    %v825 = vsub.s32 0, %v823
    %v826 = vsel %vm824, %v825, %v823
    %v827 = vclz %v826
    %v828 = vsub.s32 %v827, 2
    %vm829 = vcmp.gt.s32.totalorder 0, %v828
    %v830 = vsel %vm829, 0, %v828
    %v831 = vsub.s32 32, %v830
    %v832 = vshll.u32 %v823, %v830
    %v833 = vshrl.u32 %v815, %v831
    %v834 = vor.u32 %v832, %v833
    %v835 = vsub.s32 4294967266, %v830
    %v836 = vadd.s32 %v835, 127
    %v837 = vshll.u32 %v836, 23
    %v838 = vor.u32 4788187, %v837
    %v839 = vand.u32 2147483647, %v838
    %v841 = vcvt.s32.f32 %v834
    %v842 = vmul.f32 %v841, %v839
    %v843 = vxor.u32 %v842, 2147483648
    %v844 = vsel %vm761, %v843, %v842
    %v845 = vsub.s32 4, %v821
    %v846 = vsel %vm761, %v845, %v821
    %v847 = vsel %vm760, %v95, %v844
    %v848 = vsel %vm760, 0, %v846
    %v849 = vcosq.f32.pop %v847
    %v850 = vsinq.f32.pop %v847
    %vm851 = vweird.f32 %v95
    %v852 = vand.u32 %v848, 3
    %vm853 = vcmp.lt.s32.totalorder %v852, 2
    %vm854 = vcmp.eq.s32.totalorder %v852, 0
    %v855 = vxor.u32 %v850, 2147483648
    %v856 = vsel %vm854, %v849, %v855
    %vm857 = vcmp.eq.s32.totalorder %v852, 2
    %v858 = vxor.u32 %v849, 2147483648
    %v859 = vsel %vm857, %v858, %v850
    %v860 = vsel %vm853, %v856, %v859
    %v861 = vsel %vm851, nan, %v860
    %v862 = vand.u32 2147483647, %v96
    %vm863 = vcmp.le.f32.partialorder %v862, 0.7853982
    %vm864 = vcmp.lt.s32.totalorder %v96, 0
    %v865 = vand.u32 %v96, 2139095040
    %v866 = vshrl.u32 %v865, 23
    %v867 = vsub.s32 %v866, 127
    %v868 = vand.u32 2147483647, %v96
    %v869 = vand.u32 %v868, 8388607
    %v870 = vor.u32 %v869, 8388608
    %v871 = vsub.s32 0, %v870
    %v872 = vadd.s32 %v867, 1
    %vm873 = vcmp.gt.s32.totalorder %v872, 0
    %v874 = vsel %vm873, %v872, 0
    %v875 = vshrl.u32 %v874, 5
    %v876 = vand.u32 %v874, 31
    %v877 = vsub.s32 32, %v876
    %v878 = vshrl.u32 683565275, %v877
    %v879 = vshll.u32 683565275, %v876
    %v880 = vshrl.u32 2475754826, %v877
    %v881 = vor.u32 %v879, %v880
    %v882 = vshll.u32 2475754826, %v876
    %v883 = vshrl.u32 2131351028, %v877
    %v884 = vor.u32 %v882, %v883
    %v885 = vshll.u32 2131351028, %v876
    %v886 = vshrl.u32 2102212464, %v877
    %v887 = vor.u32 %v885, %v886
    %v888 = vshll.u32 2102212464, %v876
    %v889 = vshrl.u32 920167782, %v877
    %v890 = vor.u32 %v888, %v889
    %v891 = vshll.u32 920167782, %v876
    %v892 = vshrl.u32 1326507024, %v877
    %v893 = vor.u32 %v891, %v892
    %vm894 = vcmp.lt.s32.totalorder %v875, 1
    %vm895 = vcmp.lt.s32.totalorder %v875, 2
    %vm896 = vcmp.lt.s32.totalorder %v875, 3
    %vm897 = vcmp.lt.s32.totalorder %v875, 4
    %v898 = vsel %vm894, %v878, %v881
    %v899 = vsel %vm897, %v887, 2102212464
    %v900 = vsel %vm896, %v884, %v899
    %v901 = vsel %vm895, %v898, %v900
    %v902 = vsel %vm894, %v881, %v884
    %v903 = vsel %vm897, %v890, 920167782
    %v904 = vsel %vm896, %v887, %v903
    %v905 = vsel %vm895, %v902, %v904
    %v906 = vsel %vm894, %v884, %v887
    %v907 = vsel %vm897, %v893, 1326507024
    %v908 = vsel %vm896, %v890, %v907
    %v909 = vsel %vm895, %v906, %v908
    %v910 = vshll.u32 %v870, 8
    %v911 = vmul.u32.u64.compose %v910, %v909
    %v912 = vextract.low.u32 %v911
    %v913 = vextract.high.u32 %v911
    %v914 = vmul.u32.u64.compose %v910, %v905
    %v915 = vextract.low.u32 %v914
    %v916 = vextract.high.u32 %v914
    %v917 = vmul.u32 %v910, %v901
    %v918 = vadd.s32 %v913, %v915
    %vm919 = vc.u32 %v913, %v915
    %v920 = vadd.s32 %v916, 1
    %v921 = vsel %vm919, %v920, %v916
    %v922 = vadd.s32 %v917, %v921
    %v923 = vadd.s32 %v922, 536870912
    %v924 = vshrl.u32 %v923, 30
    %v925 = vshll.u32 %v924, 30
    %v926 = vsub.s32 %v922, %v925
    %vm927 = vcmp.lt.s32.totalorder %v926, 0
    %v928 = vsub.s32 0, %v926
    %v929 = vsel %vm927, %v928, %v926
    %v930 = vclz %v929
    %v931 = vsub.s32 %v930, 2
    %vm932 = vcmp.gt.s32.totalorder 0, %v931
    %v933 = vsel %vm932, 0, %v931
    %v934 = vsub.s32 32, %v933
    %v935 = vshll.u32 %v926, %v933
    %v936 = vshrl.u32 %v918, %v934
    %v937 = vor.u32 %v935, %v936
    %v938 = vsub.s32 4294967266, %v933
    %v939 = vadd.s32 %v938, 127
    %v940 = vshll.u32 %v939, 23
    %v941 = vor.u32 4788187, %v940
    %v942 = vand.u32 2147483647, %v941
    %v944 = vcvt.s32.f32 %v937
    %v945 = vmul.f32 %v944, %v942
    %v946 = vxor.u32 %v945, 2147483648
    %v947 = vsel %vm864, %v946, %v945
    %v948 = vsub.s32 4, %v924
    %v949 = vsel %vm864, %v948, %v924
    %v950 = vsel %vm863, %v96, %v947
    %v951 = vsel %vm863, 0, %v949
    %v952 = vcosq.f32.pop %v950
    %v953 = vsinq.f32.pop %v950
    %vm954 = vweird.f32 %v96
    %v955 = vand.u32 %v951, 3
    %vm956 = vcmp.lt.s32.totalorder %v955, 2
    %vm957 = vcmp.eq.s32.totalorder %v955, 0
    %v958 = vxor.u32 %v953, 2147483648
    %v959 = vsel %vm957, %v952, %v958
    %vm960 = vcmp.eq.s32.totalorder %v955, 2
    %v961 = vxor.u32 %v952, 2147483648
    %v962 = vsel %vm960, %v961, %v953
    %v963 = vsel %vm956, %v959, %v962
    %v964 = vsel %vm954, nan, %v963
    %v965 = vand.u32 2147483647, %v131
    %vm966 = vcmp.le.f32.partialorder %v965, 0.7853982
    %vm967 = vcmp.lt.s32.totalorder %v131, 0
    %v968 = vand.u32 %v131, 2139095040
    %v969 = vshrl.u32 %v968, 23
    %v970 = vsub.s32 %v969, 127
    %v971 = vand.u32 2147483647, %v131
    %v972 = vand.u32 %v971, 8388607
    %v973 = vor.u32 %v972, 8388608
    %v974 = vsub.s32 0, %v973
    %v975 = vadd.s32 %v970, 1
    %vm976 = vcmp.gt.s32.totalorder %v975, 0
    %v977 = vsel %vm976, %v975, 0
    %v978 = vshrl.u32 %v977, 5
    %v979 = vand.u32 %v977, 31
    %v980 = vsub.s32 32, %v979
    %v981 = vshrl.u32 683565275, %v980
    %v982 = vshll.u32 683565275, %v979
    %v983 = vshrl.u32 2475754826, %v980
    %v984 = vor.u32 %v982, %v983
    %v985 = vshll.u32 2475754826, %v979
    %v986 = vshrl.u32 2131351028, %v980
    %v987 = vor.u32 %v985, %v986
    %v988 = vshll.u32 2131351028, %v979
    %v989 = vshrl.u32 2102212464, %v980
    %v990 = vor.u32 %v988, %v989
    %v991 = vshll.u32 2102212464, %v979
    %v992 = vshrl.u32 920167782, %v980
    %v993 = vor.u32 %v991, %v992
    %v994 = vshll.u32 920167782, %v979
    %v995 = vshrl.u32 1326507024, %v980
    %v996 = vor.u32 %v994, %v995
    %vm997 = vcmp.lt.s32.totalorder %v978, 1
    %vm998 = vcmp.lt.s32.totalorder %v978, 2
    %vm999 = vcmp.lt.s32.totalorder %v978, 3
    %vm1000 = vcmp.lt.s32.totalorder %v978, 4
    %v1001 = vsel %vm997, %v981, %v984
    %v1002 = vsel %vm1000, %v990, 2102212464
    %v1003 = vsel %vm999, %v987, %v1002
    %v1004 = vsel %vm998, %v1001, %v1003
    %v1005 = vsel %vm997, %v984, %v987
    %v1006 = vsel %vm1000, %v993, 920167782
    %v1007 = vsel %vm999, %v990, %v1006
    %v1008 = vsel %vm998, %v1005, %v1007
    %v1009 = vsel %vm997, %v987, %v990
    %v1010 = vsel %vm1000, %v996, 1326507024
    %v1011 = vsel %vm999, %v993, %v1010
    %v1012 = vsel %vm998, %v1009, %v1011
    %v1013 = vshll.u32 %v973, 8
    %v1014 = vmul.u32.u64.compose %v1013, %v1012
    %v1015 = vextract.low.u32 %v1014
    %v1016 = vextract.high.u32 %v1014
    %v1017 = vmul.u32.u64.compose %v1013, %v1008
    %v1018 = vextract.low.u32 %v1017
    %v1019 = vextract.high.u32 %v1017
    %v1020 = vmul.u32 %v1013, %v1004
    %v1021 = vadd.s32 %v1016, %v1018
    %vm1022 = vc.u32 %v1016, %v1018
    %v1023 = vadd.s32 %v1019, 1
    %v1024 = vsel %vm1022, %v1023, %v1019
    %v1025 = vadd.s32 %v1020, %v1024
    %v1026 = vadd.s32 %v1025, 536870912
    %v1027 = vshrl.u32 %v1026, 30
    %v1028 = vshll.u32 %v1027, 30
    %v1029 = vsub.s32 %v1025, %v1028
    %vm1030 = vcmp.lt.s32.totalorder %v1029, 0
    %v1031 = vsub.s32 0, %v1029
    %v1032 = vsel %vm1030, %v1031, %v1029
    %v1033 = vclz %v1032
    %v1034 = vsub.s32 %v1033, 2
    %vm1035 = vcmp.gt.s32.totalorder 0, %v1034
    %v1036 = vsel %vm1035, 0, %v1034
    %v1037 = vsub.s32 32, %v1036
    %v1038 = vshll.u32 %v1029, %v1036
    %v1039 = vshrl.u32 %v1021, %v1037
    %v1040 = vor.u32 %v1038, %v1039
    %v1041 = vsub.s32 4294967266, %v1036
    %v1042 = vadd.s32 %v1041, 127
    %v1043 = vshll.u32 %v1042, 23
    %v1044 = vor.u32 4788187, %v1043
    %v1045 = vand.u32 2147483647, %v1044
    %v1047 = vcvt.s32.f32 %v1040
    %v1048 = vmul.f32 %v1047, %v1045
    %v1049 = vxor.u32 %v1048, 2147483648
    %v1050 = vsel %vm967, %v1049, %v1048
    %v1051 = vsub.s32 4, %v1027
    %v1052 = vsel %vm967, %v1051, %v1027
    %v1053 = vsel %vm966, %v131, %v1050
    %v1054 = vsel %vm966, 0, %v1052
    %v1055 = vcosq.f32.pop %v1053
    %v1056 = vsinq.f32.pop %v1053
    %vm1057 = vweird.f32 %v131
    %v1058 = vadd.s32 %v1054, 3
    %v1059 = vand.u32 %v1058, 3
    %vm1060 = vcmp.lt.s32.totalorder %v1059, 2
    %vm1061 = vcmp.eq.s32.totalorder %v1059, 0
    %v1062 = vxor.u32 %v1056, 2147483648
    %v1063 = vsel %vm1061, %v1055, %v1062
    %vm1064 = vcmp.eq.s32.totalorder %v1059, 2
    %v1065 = vxor.u32 %v1055, 2147483648
    %v1066 = vsel %vm1064, %v1065, %v1056
    %v1067 = vsel %vm1060, %v1063, %v1066
    %v1068 = vsel %vm1057, nan, %v1067
    %v1069 = vand.u32 2147483647, %v132
    %vm1070 = vcmp.le.f32.partialorder %v1069, 0.7853982
    %vm1071 = vcmp.lt.s32.totalorder %v132, 0
    %v1072 = vand.u32 %v132, 2139095040
    %v1073 = vshrl.u32 %v1072, 23
    %v1074 = vsub.s32 %v1073, 127
    %v1075 = vand.u32 2147483647, %v132
    %v1076 = vand.u32 %v1075, 8388607
    %v1077 = vor.u32 %v1076, 8388608
    %v1078 = vsub.s32 0, %v1077
    %v1079 = vadd.s32 %v1074, 1
    %vm1080 = vcmp.gt.s32.totalorder %v1079, 0
    %v1081 = vsel %vm1080, %v1079, 0
    %v1082 = vshrl.u32 %v1081, 5
    %v1083 = vand.u32 %v1081, 31
    %v1084 = vsub.s32 32, %v1083
    %v1085 = vshrl.u32 683565275, %v1084
    %v1086 = vshll.u32 683565275, %v1083
    %v1087 = vshrl.u32 2475754826, %v1084
    %v1088 = vor.u32 %v1086, %v1087
    %v1089 = vshll.u32 2475754826, %v1083
    %v1090 = vshrl.u32 2131351028, %v1084
    %v1091 = vor.u32 %v1089, %v1090
    %v1092 = vshll.u32 2131351028, %v1083
    %v1093 = vshrl.u32 2102212464, %v1084
    %v1094 = vor.u32 %v1092, %v1093
    %v1095 = vshll.u32 2102212464, %v1083
    %v1096 = vshrl.u32 920167782, %v1084
    %v1097 = vor.u32 %v1095, %v1096
    %v1098 = vshll.u32 920167782, %v1083
    %v1099 = vshrl.u32 1326507024, %v1084
    %v1100 = vor.u32 %v1098, %v1099
    %vm1101 = vcmp.lt.s32.totalorder %v1082, 1
    %vm1102 = vcmp.lt.s32.totalorder %v1082, 2
    %vm1103 = vcmp.lt.s32.totalorder %v1082, 3
    %vm1104 = vcmp.lt.s32.totalorder %v1082, 4
    %v1105 = vsel %vm1101, %v1085, %v1088
    %v1106 = vsel %vm1104, %v1094, 2102212464
    %v1107 = vsel %vm1103, %v1091, %v1106
    %v1108 = vsel %vm1102, %v1105, %v1107
    %v1109 = vsel %vm1101, %v1088, %v1091
    %v1110 = vsel %vm1104, %v1097, 920167782
    %v1111 = vsel %vm1103, %v1094, %v1110
    %v1112 = vsel %vm1102, %v1109, %v1111
    %v1113 = vsel %vm1101, %v1091, %v1094
    %v1114 = vsel %vm1104, %v1100, 1326507024
    %v1115 = vsel %vm1103, %v1097, %v1114
    %v1116 = vsel %vm1102, %v1113, %v1115
    %v1117 = vshll.u32 %v1077, 8
    %v1118 = vmul.u32.u64.compose %v1117, %v1116
    %v1119 = vextract.low.u32 %v1118
    %v1120 = vextract.high.u32 %v1118
    %v1121 = vmul.u32.u64.compose %v1117, %v1112
    %v1122 = vextract.low.u32 %v1121
    %v1123 = vextract.high.u32 %v1121
    %v1124 = vmul.u32 %v1117, %v1108
    %v1125 = vadd.s32 %v1120, %v1122
    %vm1126 = vc.u32 %v1120, %v1122
    %v1127 = vadd.s32 %v1123, 1
    %v1128 = vsel %vm1126, %v1127, %v1123
    %v1129 = vadd.s32 %v1124, %v1128
    %v1130 = vadd.s32 %v1129, 536870912
    %v1131 = vshrl.u32 %v1130, 30
    %v1132 = vshll.u32 %v1131, 30
    %v1133 = vsub.s32 %v1129, %v1132
    %vm1134 = vcmp.lt.s32.totalorder %v1133, 0
    %v1135 = vsub.s32 0, %v1133
    %v1136 = vsel %vm1134, %v1135, %v1133
    %v1137 = vclz %v1136
    %v1138 = vsub.s32 %v1137, 2
    %vm1139 = vcmp.gt.s32.totalorder 0, %v1138
    %v1140 = vsel %vm1139, 0, %v1138
    %v1141 = vsub.s32 32, %v1140
    %v1142 = vshll.u32 %v1133, %v1140
    %v1143 = vshrl.u32 %v1125, %v1141
    %v1144 = vor.u32 %v1142, %v1143
    %v1145 = vsub.s32 4294967266, %v1140
    %v1146 = vadd.s32 %v1145, 127
    %v1147 = vshll.u32 %v1146, 23
    %v1148 = vor.u32 4788187, %v1147
    %v1149 = vand.u32 2147483647, %v1148
    %v1151 = vcvt.s32.f32 %v1144
    %v1152 = vmul.f32 %v1151, %v1149
    %v1153 = vxor.u32 %v1152, 2147483648
    %v1154 = vsel %vm1071, %v1153, %v1152
    %v1155 = vsub.s32 4, %v1131
    %v1156 = vsel %vm1071, %v1155, %v1131
    %v1157 = vsel %vm1070, %v132, %v1154
    %v1158 = vsel %vm1070, 0, %v1156
    %v1159 = vcosq.f32.pop %v1157
    %v1160 = vsinq.f32.pop %v1157
    %vm1161 = vweird.f32 %v132
    %v1162 = vadd.s32 %v1158, 3
    %v1163 = vand.u32 %v1162, 3
    %vm1164 = vcmp.lt.s32.totalorder %v1163, 2
    %vm1165 = vcmp.eq.s32.totalorder %v1163, 0
    %v1166 = vxor.u32 %v1160, 2147483648
    %v1167 = vsel %vm1165, %v1159, %v1166
    %vm1168 = vcmp.eq.s32.totalorder %v1163, 2
    %v1169 = vxor.u32 %v1159, 2147483648
    %v1170 = vsel %vm1168, %v1169, %v1160
    %v1171 = vsel %vm1164, %v1167, %v1170
    %v1172 = vsel %vm1161, nan, %v1171
    %v1173 = vand.u32 2147483647, %v133
    %vm1174 = vcmp.le.f32.partialorder %v1173, 0.7853982
    %vm1175 = vcmp.lt.s32.totalorder %v133, 0
    %v1176 = vand.u32 %v133, 2139095040
    %v1177 = vshrl.u32 %v1176, 23
    %v1178 = vsub.s32 %v1177, 127
    %v1179 = vand.u32 2147483647, %v133
    %v1180 = vand.u32 %v1179, 8388607
    %v1181 = vor.u32 %v1180, 8388608
    %v1182 = vsub.s32 0, %v1181
    %v1183 = vadd.s32 %v1178, 1
    %vm1184 = vcmp.gt.s32.totalorder %v1183, 0
    %v1185 = vsel %vm1184, %v1183, 0
    %v1186 = vshrl.u32 %v1185, 5
    %v1187 = vand.u32 %v1185, 31
    %v1188 = vsub.s32 32, %v1187
    %v1189 = vshrl.u32 683565275, %v1188
    %v1190 = vshll.u32 683565275, %v1187
    %v1191 = vshrl.u32 2475754826, %v1188
    %v1192 = vor.u32 %v1190, %v1191
    %v1193 = vshll.u32 2475754826, %v1187
    %v1194 = vshrl.u32 2131351028, %v1188
    %v1195 = vor.u32 %v1193, %v1194
    %v1196 = vshll.u32 2131351028, %v1187
    %v1197 = vshrl.u32 2102212464, %v1188
    %v1198 = vor.u32 %v1196, %v1197
    %v1199 = vshll.u32 2102212464, %v1187
    %v1200 = vshrl.u32 920167782, %v1188
    %v1201 = vor.u32 %v1199, %v1200
    %v1202 = vshll.u32 920167782, %v1187
    %v1203 = vshrl.u32 1326507024, %v1188
    %v1204 = vor.u32 %v1202, %v1203
    %vm1205 = vcmp.lt.s32.totalorder %v1186, 1
    %vm1206 = vcmp.lt.s32.totalorder %v1186, 2
    %vm1207 = vcmp.lt.s32.totalorder %v1186, 3
    %vm1208 = vcmp.lt.s32.totalorder %v1186, 4
    %v1209 = vsel %vm1205, %v1189, %v1192
    %v1210 = vsel %vm1208, %v1198, 2102212464
    %v1211 = vsel %vm1207, %v1195, %v1210
    %v1212 = vsel %vm1206, %v1209, %v1211
    %v1213 = vsel %vm1205, %v1192, %v1195
    %v1214 = vsel %vm1208, %v1201, 920167782
    %v1215 = vsel %vm1207, %v1198, %v1214
    %v1216 = vsel %vm1206, %v1213, %v1215
    %v1217 = vsel %vm1205, %v1195, %v1198
    %v1218 = vsel %vm1208, %v1204, 1326507024
    %v1219 = vsel %vm1207, %v1201, %v1218
    %v1220 = vsel %vm1206, %v1217, %v1219
    %v1221 = vshll.u32 %v1181, 8
    %v1222 = vmul.u32.u64.compose %v1221, %v1220
    %v1223 = vextract.low.u32 %v1222
    %v1224 = vextract.high.u32 %v1222
    %v1225 = vmul.u32.u64.compose %v1221, %v1216
    %v1226 = vextract.low.u32 %v1225
    %v1227 = vextract.high.u32 %v1225
    %v1228 = vmul.u32 %v1221, %v1212
    %v1229 = vadd.s32 %v1224, %v1226
    %vm1230 = vc.u32 %v1224, %v1226
    %v1231 = vadd.s32 %v1227, 1
    %v1232 = vsel %vm1230, %v1231, %v1227
    %v1233 = vadd.s32 %v1228, %v1232
    %v1234 = vadd.s32 %v1233, 536870912
    %v1235 = vshrl.u32 %v1234, 30
    %v1236 = vshll.u32 %v1235, 30
    %v1237 = vsub.s32 %v1233, %v1236
    %vm1238 = vcmp.lt.s32.totalorder %v1237, 0
    %v1239 = vsub.s32 0, %v1237
    %v1240 = vsel %vm1238, %v1239, %v1237
    %v1241 = vclz %v1240
    %v1242 = vsub.s32 %v1241, 2
    %vm1243 = vcmp.gt.s32.totalorder 0, %v1242
    %v1244 = vsel %vm1243, 0, %v1242
    %v1245 = vsub.s32 32, %v1244
    %v1246 = vshll.u32 %v1237, %v1244
    %v1247 = vshrl.u32 %v1229, %v1245
    %v1248 = vor.u32 %v1246, %v1247
    %v1249 = vsub.s32 4294967266, %v1244
    %v1250 = vadd.s32 %v1249, 127
    %v1251 = vshll.u32 %v1250, 23
    %v1252 = vor.u32 4788187, %v1251
    %v1253 = vand.u32 2147483647, %v1252
    %v1255 = vcvt.s32.f32 %v1248
    %v1256 = vmul.f32 %v1255, %v1253
    %v1257 = vxor.u32 %v1256, 2147483648
    %v1258 = vsel %vm1175, %v1257, %v1256
    %v1259 = vsub.s32 4, %v1235
    %v1260 = vsel %vm1175, %v1259, %v1235
    %v1261 = vsel %vm1174, %v133, %v1258
    %v1262 = vsel %vm1174, 0, %v1260
    %v1263 = vcosq.f32.pop %v1261
    %v1264 = vsinq.f32.pop %v1261
    %vm1265 = vweird.f32 %v133
    %v1266 = vadd.s32 %v1262, 3
    %v1267 = vand.u32 %v1266, 3
    %vm1268 = vcmp.lt.s32.totalorder %v1267, 2
    %vm1269 = vcmp.eq.s32.totalorder %v1267, 0
    %v1270 = vxor.u32 %v1264, 2147483648
    %v1271 = vsel %vm1269, %v1263, %v1270
    %vm1272 = vcmp.eq.s32.totalorder %v1267, 2
    %v1273 = vxor.u32 %v1263, 2147483648
    %v1274 = vsel %vm1272, %v1273, %v1264
    %v1275 = vsel %vm1268, %v1271, %v1274
    %v1276 = vsel %vm1265, nan, %v1275
    %v1277 = vand.u32 2147483647, %v134
    %vm1278 = vcmp.le.f32.partialorder %v1277, 0.7853982
    %vm1279 = vcmp.lt.s32.totalorder %v134, 0
    %v1280 = vand.u32 %v134, 2139095040
    %v1281 = vshrl.u32 %v1280, 23
    %v1282 = vsub.s32 %v1281, 127
    %v1283 = vand.u32 2147483647, %v134
    %v1284 = vand.u32 %v1283, 8388607
    %v1285 = vor.u32 %v1284, 8388608
    %v1286 = vsub.s32 0, %v1285
    %v1287 = vadd.s32 %v1282, 1
    %vm1288 = vcmp.gt.s32.totalorder %v1287, 0
    %v1289 = vsel %vm1288, %v1287, 0
    %v1290 = vshrl.u32 %v1289, 5
    %v1291 = vand.u32 %v1289, 31
    %v1292 = vsub.s32 32, %v1291
    %v1293 = vshrl.u32 683565275, %v1292
    %v1294 = vshll.u32 683565275, %v1291
    %v1295 = vshrl.u32 2475754826, %v1292
    %v1296 = vor.u32 %v1294, %v1295
    %v1297 = vshll.u32 2475754826, %v1291
    %v1298 = vshrl.u32 2131351028, %v1292
    %v1299 = vor.u32 %v1297, %v1298
    %v1300 = vshll.u32 2131351028, %v1291
    %v1301 = vshrl.u32 2102212464, %v1292
    %v1302 = vor.u32 %v1300, %v1301
    %v1303 = vshll.u32 2102212464, %v1291
    %v1304 = vshrl.u32 920167782, %v1292
    %v1305 = vor.u32 %v1303, %v1304
    %v1306 = vshll.u32 920167782, %v1291
    %v1307 = vshrl.u32 1326507024, %v1292
    %v1308 = vor.u32 %v1306, %v1307
    %vm1309 = vcmp.lt.s32.totalorder %v1290, 1
    %vm1310 = vcmp.lt.s32.totalorder %v1290, 2
    %vm1311 = vcmp.lt.s32.totalorder %v1290, 3
    %vm1312 = vcmp.lt.s32.totalorder %v1290, 4
    %v1313 = vsel %vm1309, %v1293, %v1296
    %v1314 = vsel %vm1312, %v1302, 2102212464
    %v1315 = vsel %vm1311, %v1299, %v1314
    %v1316 = vsel %vm1310, %v1313, %v1315
    %v1317 = vsel %vm1309, %v1296, %v1299
    %v1318 = vsel %vm1312, %v1305, 920167782
    %v1319 = vsel %vm1311, %v1302, %v1318
    %v1320 = vsel %vm1310, %v1317, %v1319
    %v1321 = vsel %vm1309, %v1299, %v1302
    %v1322 = vsel %vm1312, %v1308, 1326507024
    %v1323 = vsel %vm1311, %v1305, %v1322
    %v1324 = vsel %vm1310, %v1321, %v1323
    %v1325 = vshll.u32 %v1285, 8
    %v1326 = vmul.u32.u64.compose %v1325, %v1324
    %v1327 = vextract.low.u32 %v1326
    %v1328 = vextract.high.u32 %v1326
    %v1329 = vmul.u32.u64.compose %v1325, %v1320
    %v1330 = vextract.low.u32 %v1329
    %v1331 = vextract.high.u32 %v1329
    %v1332 = vmul.u32 %v1325, %v1316
    %v1333 = vadd.s32 %v1328, %v1330
    %vm1334 = vc.u32 %v1328, %v1330
    %v1335 = vadd.s32 %v1331, 1
    %v1336 = vsel %vm1334, %v1335, %v1331
    %v1337 = vadd.s32 %v1332, %v1336
    %v1338 = vadd.s32 %v1337, 536870912
    %v1339 = vshrl.u32 %v1338, 30
    %v1340 = vshll.u32 %v1339, 30
    %v1341 = vsub.s32 %v1337, %v1340
    %vm1342 = vcmp.lt.s32.totalorder %v1341, 0
    %v1343 = vsub.s32 0, %v1341
    %v1344 = vsel %vm1342, %v1343, %v1341
    %v1345 = vclz %v1344
    %v1346 = vsub.s32 %v1345, 2
    %vm1347 = vcmp.gt.s32.totalorder 0, %v1346
    %v1348 = vsel %vm1347, 0, %v1346
    %v1349 = vsub.s32 32, %v1348
    %v1350 = vshll.u32 %v1341, %v1348
    %v1351 = vshrl.u32 %v1333, %v1349
    %v1352 = vor.u32 %v1350, %v1351
    %v1353 = vsub.s32 4294967266, %v1348
    %v1354 = vadd.s32 %v1353, 127
    %v1355 = vshll.u32 %v1354, 23
    %v1356 = vor.u32 4788187, %v1355
    %v1357 = vand.u32 2147483647, %v1356
    %v1359 = vcvt.s32.f32 %v1352
    %v1360 = vmul.f32 %v1359, %v1357
    %v1361 = vxor.u32 %v1360, 2147483648
    %v1362 = vsel %vm1279, %v1361, %v1360
    %v1363 = vsub.s32 4, %v1339
    %v1364 = vsel %vm1279, %v1363, %v1339
    %v1365 = vsel %vm1278, %v134, %v1362
    %v1366 = vsel %vm1278, 0, %v1364
    %v1367 = vcosq.f32.pop %v1365
    %v1368 = vsinq.f32.pop %v1365
    %vm1369 = vweird.f32 %v134
    %v1370 = vadd.s32 %v1366, 3
    %v1371 = vand.u32 %v1370, 3
    %vm1372 = vcmp.lt.s32.totalorder %v1371, 2
    %vm1373 = vcmp.eq.s32.totalorder %v1371, 0
    %v1374 = vxor.u32 %v1368, 2147483648
    %v1375 = vsel %vm1373, %v1367, %v1374
    %vm1376 = vcmp.eq.s32.totalorder %v1371, 2
    %v1377 = vxor.u32 %v1367, 2147483648
    %v1378 = vsel %vm1376, %v1377, %v1368
    %v1379 = vsel %vm1372, %v1375, %v1378
    %v1380 = vsel %vm1369, nan, %v1379
    %v1381 = vand.u32 2147483647, %v135
    %vm1382 = vcmp.le.f32.partialorder %v1381, 0.7853982
    %vm1383 = vcmp.lt.s32.totalorder %v135, 0
    %v1384 = vand.u32 %v135, 2139095040
    %v1385 = vshrl.u32 %v1384, 23
    %v1386 = vsub.s32 %v1385, 127
    %v1387 = vand.u32 2147483647, %v135
    %v1388 = vand.u32 %v1387, 8388607
    %v1389 = vor.u32 %v1388, 8388608
    %v1390 = vsub.s32 0, %v1389
    %v1391 = vadd.s32 %v1386, 1
    %vm1392 = vcmp.gt.s32.totalorder %v1391, 0
    %v1393 = vsel %vm1392, %v1391, 0
    %v1394 = vshrl.u32 %v1393, 5
    %v1395 = vand.u32 %v1393, 31
    %v1396 = vsub.s32 32, %v1395
    %v1397 = vshrl.u32 683565275, %v1396
    %v1398 = vshll.u32 683565275, %v1395
    %v1399 = vshrl.u32 2475754826, %v1396
    %v1400 = vor.u32 %v1398, %v1399
    %v1401 = vshll.u32 2475754826, %v1395
    %v1402 = vshrl.u32 2131351028, %v1396
    %v1403 = vor.u32 %v1401, %v1402
    %v1404 = vshll.u32 2131351028, %v1395
    %v1405 = vshrl.u32 2102212464, %v1396
    %v1406 = vor.u32 %v1404, %v1405
    %v1407 = vshll.u32 2102212464, %v1395
    %v1408 = vshrl.u32 920167782, %v1396
    %v1409 = vor.u32 %v1407, %v1408
    %v1410 = vshll.u32 920167782, %v1395
    %v1411 = vshrl.u32 1326507024, %v1396
    %v1412 = vor.u32 %v1410, %v1411
    %vm1413 = vcmp.lt.s32.totalorder %v1394, 1
    %vm1414 = vcmp.lt.s32.totalorder %v1394, 2
    %vm1415 = vcmp.lt.s32.totalorder %v1394, 3
    %vm1416 = vcmp.lt.s32.totalorder %v1394, 4
    %v1417 = vsel %vm1413, %v1397, %v1400
    %v1418 = vsel %vm1416, %v1406, 2102212464
    %v1419 = vsel %vm1415, %v1403, %v1418
    %v1420 = vsel %vm1414, %v1417, %v1419
    %v1421 = vsel %vm1413, %v1400, %v1403
    %v1422 = vsel %vm1416, %v1409, 920167782
    %v1423 = vsel %vm1415, %v1406, %v1422
    %v1424 = vsel %vm1414, %v1421, %v1423
    %v1425 = vsel %vm1413, %v1403, %v1406
    %v1426 = vsel %vm1416, %v1412, 1326507024
    %v1427 = vsel %vm1415, %v1409, %v1426
    %v1428 = vsel %vm1414, %v1425, %v1427
    %v1429 = vshll.u32 %v1389, 8
    %v1430 = vmul.u32.u64.compose %v1429, %v1428
    %v1431 = vextract.low.u32 %v1430
    %v1432 = vextract.high.u32 %v1430
    %v1433 = vmul.u32.u64.compose %v1429, %v1424
    %v1434 = vextract.low.u32 %v1433
    %v1435 = vextract.high.u32 %v1433
    %v1436 = vmul.u32 %v1429, %v1420
    %v1437 = vadd.s32 %v1432, %v1434
    %vm1438 = vc.u32 %v1432, %v1434
    %v1439 = vadd.s32 %v1435, 1
    %v1440 = vsel %vm1438, %v1439, %v1435
    %v1441 = vadd.s32 %v1436, %v1440
    %v1442 = vadd.s32 %v1441, 536870912
    %v1443 = vshrl.u32 %v1442, 30
    %v1444 = vshll.u32 %v1443, 30
    %v1445 = vsub.s32 %v1441, %v1444
    %vm1446 = vcmp.lt.s32.totalorder %v1445, 0
    %v1447 = vsub.s32 0, %v1445
    %v1448 = vsel %vm1446, %v1447, %v1445
    %v1449 = vclz %v1448
    %v1450 = vsub.s32 %v1449, 2
    %vm1451 = vcmp.gt.s32.totalorder 0, %v1450
    %v1452 = vsel %vm1451, 0, %v1450
    %v1453 = vsub.s32 32, %v1452
    %v1454 = vshll.u32 %v1445, %v1452
    %v1455 = vshrl.u32 %v1437, %v1453
    %v1456 = vor.u32 %v1454, %v1455
    %v1457 = vsub.s32 4294967266, %v1452
    %v1458 = vadd.s32 %v1457, 127
    %v1459 = vshll.u32 %v1458, 23
    %v1460 = vor.u32 4788187, %v1459
    %v1461 = vand.u32 2147483647, %v1460
    %v1463 = vcvt.s32.f32 %v1456
    %v1464 = vmul.f32 %v1463, %v1461
    %v1465 = vxor.u32 %v1464, 2147483648
    %v1466 = vsel %vm1383, %v1465, %v1464
    %v1467 = vsub.s32 4, %v1443
    %v1468 = vsel %vm1383, %v1467, %v1443
    %v1469 = vsel %vm1382, %v135, %v1466
    %v1470 = vsel %vm1382, 0, %v1468
    %v1471 = vcosq.f32.pop %v1469
    %v1472 = vsinq.f32.pop %v1469
    %vm1473 = vweird.f32 %v135
    %v1474 = vadd.s32 %v1470, 3
    %v1475 = vand.u32 %v1474, 3
    %vm1476 = vcmp.lt.s32.totalorder %v1475, 2
    %vm1477 = vcmp.eq.s32.totalorder %v1475, 0
    %v1478 = vxor.u32 %v1472, 2147483648
    %v1479 = vsel %vm1477, %v1471, %v1478
    %vm1480 = vcmp.eq.s32.totalorder %v1475, 2
    %v1481 = vxor.u32 %v1471, 2147483648
    %v1482 = vsel %vm1480, %v1481, %v1472
    %v1483 = vsel %vm1476, %v1479, %v1482
    %v1484 = vsel %vm1473, nan, %v1483
    %v1485 = vand.u32 2147483647, %v136
    %vm1486 = vcmp.le.f32.partialorder %v1485, 0.7853982
    %vm1487 = vcmp.lt.s32.totalorder %v136, 0
    %v1488 = vand.u32 %v136, 2139095040
    %v1489 = vshrl.u32 %v1488, 23
    %v1490 = vsub.s32 %v1489, 127
    %v1491 = vand.u32 2147483647, %v136
    %v1492 = vand.u32 %v1491, 8388607
    %v1493 = vor.u32 %v1492, 8388608
    %v1494 = vsub.s32 0, %v1493
    %v1495 = vadd.s32 %v1490, 1
    %vm1496 = vcmp.gt.s32.totalorder %v1495, 0
    %v1497 = vsel %vm1496, %v1495, 0
    %v1498 = vshrl.u32 %v1497, 5
    %v1499 = vand.u32 %v1497, 31
    %v1500 = vsub.s32 32, %v1499
    %v1501 = vshrl.u32 683565275, %v1500
    %v1502 = vshll.u32 683565275, %v1499
    %v1503 = vshrl.u32 2475754826, %v1500
    %v1504 = vor.u32 %v1502, %v1503
    %v1505 = vshll.u32 2475754826, %v1499
    %v1506 = vshrl.u32 2131351028, %v1500
    %v1507 = vor.u32 %v1505, %v1506
    %v1508 = vshll.u32 2131351028, %v1499
    %v1509 = vshrl.u32 2102212464, %v1500
    %v1510 = vor.u32 %v1508, %v1509
    %v1511 = vshll.u32 2102212464, %v1499
    %v1512 = vshrl.u32 920167782, %v1500
    %v1513 = vor.u32 %v1511, %v1512
    %v1514 = vshll.u32 920167782, %v1499
    %v1515 = vshrl.u32 1326507024, %v1500
    %v1516 = vor.u32 %v1514, %v1515
    %vm1517 = vcmp.lt.s32.totalorder %v1498, 1
    %vm1518 = vcmp.lt.s32.totalorder %v1498, 2
    %vm1519 = vcmp.lt.s32.totalorder %v1498, 3
    %vm1520 = vcmp.lt.s32.totalorder %v1498, 4
    %v1521 = vsel %vm1517, %v1501, %v1504
    %v1522 = vsel %vm1520, %v1510, 2102212464
    %v1523 = vsel %vm1519, %v1507, %v1522
    %v1524 = vsel %vm1518, %v1521, %v1523
    %v1525 = vsel %vm1517, %v1504, %v1507
    %v1526 = vsel %vm1520, %v1513, 920167782
    %v1527 = vsel %vm1519, %v1510, %v1526
    %v1528 = vsel %vm1518, %v1525, %v1527
    %v1529 = vsel %vm1517, %v1507, %v1510
    %v1530 = vsel %vm1520, %v1516, 1326507024
    %v1531 = vsel %vm1519, %v1513, %v1530
    %v1532 = vsel %vm1518, %v1529, %v1531
    %v1533 = vshll.u32 %v1493, 8
    %v1534 = vmul.u32.u64.compose %v1533, %v1532
    %v1535 = vextract.low.u32 %v1534
    %v1536 = vextract.high.u32 %v1534
    %v1537 = vmul.u32.u64.compose %v1533, %v1528
    %v1538 = vextract.low.u32 %v1537
    %v1539 = vextract.high.u32 %v1537
    %v1540 = vmul.u32 %v1533, %v1524
    %v1541 = vadd.s32 %v1536, %v1538
    %vm1542 = vc.u32 %v1536, %v1538
    %v1543 = vadd.s32 %v1539, 1
    %v1544 = vsel %vm1542, %v1543, %v1539
    %v1545 = vadd.s32 %v1540, %v1544
    %v1546 = vadd.s32 %v1545, 536870912
    %v1547 = vshrl.u32 %v1546, 30
    %v1548 = vshll.u32 %v1547, 30
    %v1549 = vsub.s32 %v1545, %v1548
    %vm1550 = vcmp.lt.s32.totalorder %v1549, 0
    %v1551 = vsub.s32 0, %v1549
    %v1552 = vsel %vm1550, %v1551, %v1549
    %v1553 = vclz %v1552
    %v1554 = vsub.s32 %v1553, 2
    %vm1555 = vcmp.gt.s32.totalorder 0, %v1554
    %v1556 = vsel %vm1555, 0, %v1554
    %v1557 = vsub.s32 32, %v1556
    %v1558 = vshll.u32 %v1549, %v1556
    %v1559 = vshrl.u32 %v1541, %v1557
    %v1560 = vor.u32 %v1558, %v1559
    %v1561 = vsub.s32 4294967266, %v1556
    %v1562 = vadd.s32 %v1561, 127
    %v1563 = vshll.u32 %v1562, 23
    %v1564 = vor.u32 4788187, %v1563
    %v1565 = vand.u32 2147483647, %v1564
    %v1567 = vcvt.s32.f32 %v1560
    %v1568 = vmul.f32 %v1567, %v1565
    %v1569 = vxor.u32 %v1568, 2147483648
    %v1570 = vsel %vm1487, %v1569, %v1568
    %v1571 = vsub.s32 4, %v1547
    %v1572 = vsel %vm1487, %v1571, %v1547
    %v1573 = vsel %vm1486, %v136, %v1570
    %v1574 = vsel %vm1486, 0, %v1572
    %v1575 = vcosq.f32.pop %v1573
    %v1576 = vsinq.f32.pop %v1573
    %vm1577 = vweird.f32 %v136
    %v1578 = vadd.s32 %v1574, 3
    %v1579 = vand.u32 %v1578, 3
    %vm1580 = vcmp.lt.s32.totalorder %v1579, 2
    %vm1581 = vcmp.eq.s32.totalorder %v1579, 0
    %v1582 = vxor.u32 %v1576, 2147483648
    %v1583 = vsel %vm1581, %v1575, %v1582
    %vm1584 = vcmp.eq.s32.totalorder %v1579, 2
    %v1585 = vxor.u32 %v1575, 2147483648
    %v1586 = vsel %vm1584, %v1585, %v1576
    %v1587 = vsel %vm1580, %v1583, %v1586
    %v1588 = vsel %vm1577, nan, %v1587
    %v1589 = vand.u32 2147483647, %v131
    %vm1590 = vcmp.le.f32.partialorder %v1589, 0.7853982
    %vm1591 = vcmp.lt.s32.totalorder %v131, 0
    %v1592 = vand.u32 %v131, 2139095040
    %v1593 = vshrl.u32 %v1592, 23
    %v1594 = vsub.s32 %v1593, 127
    %v1595 = vand.u32 2147483647, %v131
    %v1596 = vand.u32 %v1595, 8388607
    %v1597 = vor.u32 %v1596, 8388608
    %v1598 = vsub.s32 0, %v1597
    %v1599 = vadd.s32 %v1594, 1
    %vm1600 = vcmp.gt.s32.totalorder %v1599, 0
    %v1601 = vsel %vm1600, %v1599, 0
    %v1602 = vshrl.u32 %v1601, 5
    %v1603 = vand.u32 %v1601, 31
    %v1604 = vsub.s32 32, %v1603
    %v1605 = vshrl.u32 683565275, %v1604
    %v1606 = vshll.u32 683565275, %v1603
    %v1607 = vshrl.u32 2475754826, %v1604
    %v1608 = vor.u32 %v1606, %v1607
    %v1609 = vshll.u32 2475754826, %v1603
    %v1610 = vshrl.u32 2131351028, %v1604
    %v1611 = vor.u32 %v1609, %v1610
    %v1612 = vshll.u32 2131351028, %v1603
    %v1613 = vshrl.u32 2102212464, %v1604
    %v1614 = vor.u32 %v1612, %v1613
    %v1615 = vshll.u32 2102212464, %v1603
    %v1616 = vshrl.u32 920167782, %v1604
    %v1617 = vor.u32 %v1615, %v1616
    %v1618 = vshll.u32 920167782, %v1603
    %v1619 = vshrl.u32 1326507024, %v1604
    %v1620 = vor.u32 %v1618, %v1619
    %vm1621 = vcmp.lt.s32.totalorder %v1602, 1
    %vm1622 = vcmp.lt.s32.totalorder %v1602, 2
    %vm1623 = vcmp.lt.s32.totalorder %v1602, 3
    %vm1624 = vcmp.lt.s32.totalorder %v1602, 4
    %v1625 = vsel %vm1621, %v1605, %v1608
    %v1626 = vsel %vm1624, %v1614, 2102212464
    %v1627 = vsel %vm1623, %v1611, %v1626
    %v1628 = vsel %vm1622, %v1625, %v1627
    %v1629 = vsel %vm1621, %v1608, %v1611
    %v1630 = vsel %vm1624, %v1617, 920167782
    %v1631 = vsel %vm1623, %v1614, %v1630
    %v1632 = vsel %vm1622, %v1629, %v1631
    %v1633 = vsel %vm1621, %v1611, %v1614
    %v1634 = vsel %vm1624, %v1620, 1326507024
    %v1635 = vsel %vm1623, %v1617, %v1634
    %v1636 = vsel %vm1622, %v1633, %v1635
    %v1637 = vshll.u32 %v1597, 8
    %v1638 = vmul.u32.u64.compose %v1637, %v1636
    %v1639 = vextract.low.u32 %v1638
    %v1640 = vextract.high.u32 %v1638
    %v1641 = vmul.u32.u64.compose %v1637, %v1632
    %v1642 = vextract.low.u32 %v1641
    %v1643 = vextract.high.u32 %v1641
    %v1644 = vmul.u32 %v1637, %v1628
    %v1645 = vadd.s32 %v1640, %v1642
    %vm1646 = vc.u32 %v1640, %v1642
    %v1647 = vadd.s32 %v1643, 1
    %v1648 = vsel %vm1646, %v1647, %v1643
    %v1649 = vadd.s32 %v1644, %v1648
    %v1650 = vadd.s32 %v1649, 536870912
    %v1651 = vshrl.u32 %v1650, 30
    %v1652 = vshll.u32 %v1651, 30
    %v1653 = vsub.s32 %v1649, %v1652
    %vm1654 = vcmp.lt.s32.totalorder %v1653, 0
    %v1655 = vsub.s32 0, %v1653
    %v1656 = vsel %vm1654, %v1655, %v1653
    %v1657 = vclz %v1656
    %v1658 = vsub.s32 %v1657, 2
    %vm1659 = vcmp.gt.s32.totalorder 0, %v1658
    %v1660 = vsel %vm1659, 0, %v1658
    %v1661 = vsub.s32 32, %v1660
    %v1662 = vshll.u32 %v1653, %v1660
    %v1663 = vshrl.u32 %v1645, %v1661
    %v1664 = vor.u32 %v1662, %v1663
    %v1665 = vsub.s32 4294967266, %v1660
    %v1666 = vadd.s32 %v1665, 127
    %v1667 = vshll.u32 %v1666, 23
    %v1668 = vor.u32 4788187, %v1667
    %v1669 = vand.u32 2147483647, %v1668
    %v1671 = vcvt.s32.f32 %v1664
    %v1672 = vmul.f32 %v1671, %v1669
    %v1673 = vxor.u32 %v1672, 2147483648
    %v1674 = vsel %vm1591, %v1673, %v1672
    %v1675 = vsub.s32 4, %v1651
    %v1676 = vsel %vm1591, %v1675, %v1651
    %v1677 = vsel %vm1590, %v131, %v1674
    %v1678 = vsel %vm1590, 0, %v1676
    %v1679 = vcosq.f32.pop %v1677
    %v1680 = vsinq.f32.pop %v1677
    %vm1681 = vweird.f32 %v131
    %v1682 = vand.u32 %v1678, 3
    %vm1683 = vcmp.lt.s32.totalorder %v1682, 2
    %vm1684 = vcmp.eq.s32.totalorder %v1682, 0
    %v1685 = vxor.u32 %v1680, 2147483648
    %v1686 = vsel %vm1684, %v1679, %v1685
    %vm1687 = vcmp.eq.s32.totalorder %v1682, 2
    %v1688 = vxor.u32 %v1679, 2147483648
    %v1689 = vsel %vm1687, %v1688, %v1680
    %v1690 = vsel %vm1683, %v1686, %v1689
    %v1691 = vsel %vm1681, nan, %v1690
    %v1692 = vand.u32 2147483647, %v132
    %vm1693 = vcmp.le.f32.partialorder %v1692, 0.7853982
    %vm1694 = vcmp.lt.s32.totalorder %v132, 0
    %v1695 = vand.u32 %v132, 2139095040
    %v1696 = vshrl.u32 %v1695, 23
    %v1697 = vsub.s32 %v1696, 127
    %v1698 = vand.u32 2147483647, %v132
    %v1699 = vand.u32 %v1698, 8388607
    %v1700 = vor.u32 %v1699, 8388608
    %v1701 = vsub.s32 0, %v1700
    %v1702 = vadd.s32 %v1697, 1
    %vm1703 = vcmp.gt.s32.totalorder %v1702, 0
    %v1704 = vsel %vm1703, %v1702, 0
    %v1705 = vshrl.u32 %v1704, 5
    %v1706 = vand.u32 %v1704, 31
    %v1707 = vsub.s32 32, %v1706
    %v1708 = vshrl.u32 683565275, %v1707
    %v1709 = vshll.u32 683565275, %v1706
    %v1710 = vshrl.u32 2475754826, %v1707
    %v1711 = vor.u32 %v1709, %v1710
    %v1712 = vshll.u32 2475754826, %v1706
    %v1713 = vshrl.u32 2131351028, %v1707
    %v1714 = vor.u32 %v1712, %v1713
    %v1715 = vshll.u32 2131351028, %v1706
    %v1716 = vshrl.u32 2102212464, %v1707
    %v1717 = vor.u32 %v1715, %v1716
    %v1718 = vshll.u32 2102212464, %v1706
    %v1719 = vshrl.u32 920167782, %v1707
    %v1720 = vor.u32 %v1718, %v1719
    %v1721 = vshll.u32 920167782, %v1706
    %v1722 = vshrl.u32 1326507024, %v1707
    %v1723 = vor.u32 %v1721, %v1722
    %vm1724 = vcmp.lt.s32.totalorder %v1705, 1
    %vm1725 = vcmp.lt.s32.totalorder %v1705, 2
    %vm1726 = vcmp.lt.s32.totalorder %v1705, 3
    %vm1727 = vcmp.lt.s32.totalorder %v1705, 4
    %v1728 = vsel %vm1724, %v1708, %v1711
    %v1729 = vsel %vm1727, %v1717, 2102212464
    %v1730 = vsel %vm1726, %v1714, %v1729
    %v1731 = vsel %vm1725, %v1728, %v1730
    %v1732 = vsel %vm1724, %v1711, %v1714
    %v1733 = vsel %vm1727, %v1720, 920167782
    %v1734 = vsel %vm1726, %v1717, %v1733
    %v1735 = vsel %vm1725, %v1732, %v1734
    %v1736 = vsel %vm1724, %v1714, %v1717
    %v1737 = vsel %vm1727, %v1723, 1326507024
    %v1738 = vsel %vm1726, %v1720, %v1737
    %v1739 = vsel %vm1725, %v1736, %v1738
    %v1740 = vshll.u32 %v1700, 8
    %v1741 = vmul.u32.u64.compose %v1740, %v1739
    %v1742 = vextract.low.u32 %v1741
    %v1743 = vextract.high.u32 %v1741
    %v1744 = vmul.u32.u64.compose %v1740, %v1735
    %v1745 = vextract.low.u32 %v1744
    %v1746 = vextract.high.u32 %v1744
    %v1747 = vmul.u32 %v1740, %v1731
    %v1748 = vadd.s32 %v1743, %v1745
    %vm1749 = vc.u32 %v1743, %v1745
    %v1750 = vadd.s32 %v1746, 1
    %v1751 = vsel %vm1749, %v1750, %v1746
    %v1752 = vadd.s32 %v1747, %v1751
    %v1753 = vadd.s32 %v1752, 536870912
    %v1754 = vshrl.u32 %v1753, 30
    %v1755 = vshll.u32 %v1754, 30
    %v1756 = vsub.s32 %v1752, %v1755
    %vm1757 = vcmp.lt.s32.totalorder %v1756, 0
    %v1758 = vsub.s32 0, %v1756
    %v1759 = vsel %vm1757, %v1758, %v1756
    %v1760 = vclz %v1759
    %v1761 = vsub.s32 %v1760, 2
    %vm1762 = vcmp.gt.s32.totalorder 0, %v1761
    %v1763 = vsel %vm1762, 0, %v1761
    %v1764 = vsub.s32 32, %v1763
    %v1765 = vshll.u32 %v1756, %v1763
    %v1766 = vshrl.u32 %v1748, %v1764
    %v1767 = vor.u32 %v1765, %v1766
    %v1768 = vsub.s32 4294967266, %v1763
    %v1769 = vadd.s32 %v1768, 127
    %v1770 = vshll.u32 %v1769, 23
    %v1771 = vor.u32 4788187, %v1770
    %v1772 = vand.u32 2147483647, %v1771
    %v1774 = vcvt.s32.f32 %v1767
    %v1775 = vmul.f32 %v1774, %v1772
    %v1776 = vxor.u32 %v1775, 2147483648
    %v1777 = vsel %vm1694, %v1776, %v1775
    %v1778 = vsub.s32 4, %v1754
    %v1779 = vsel %vm1694, %v1778, %v1754
    %v1780 = vsel %vm1693, %v132, %v1777
    %v1781 = vsel %vm1693, 0, %v1779
    %v1782 = vcosq.f32.pop %v1780
    %v1783 = vsinq.f32.pop %v1780
    %vm1784 = vweird.f32 %v132
    %v1785 = vand.u32 %v1781, 3
    %vm1786 = vcmp.lt.s32.totalorder %v1785, 2
    %vm1787 = vcmp.eq.s32.totalorder %v1785, 0
    %v1788 = vxor.u32 %v1783, 2147483648
    %v1789 = vsel %vm1787, %v1782, %v1788
    %vm1790 = vcmp.eq.s32.totalorder %v1785, 2
    %v1791 = vxor.u32 %v1782, 2147483648
    %v1792 = vsel %vm1790, %v1791, %v1783
    %v1793 = vsel %vm1786, %v1789, %v1792
    %v1794 = vsel %vm1784, nan, %v1793
    %v1795 = vand.u32 2147483647, %v133
    %vm1796 = vcmp.le.f32.partialorder %v1795, 0.7853982
    %vm1797 = vcmp.lt.s32.totalorder %v133, 0
    %v1798 = vand.u32 %v133, 2139095040
    %v1799 = vshrl.u32 %v1798, 23
    %v1800 = vsub.s32 %v1799, 127
    %v1801 = vand.u32 2147483647, %v133
    %v1802 = vand.u32 %v1801, 8388607
    %v1803 = vor.u32 %v1802, 8388608
    %v1804 = vsub.s32 0, %v1803
    %v1805 = vadd.s32 %v1800, 1
    %vm1806 = vcmp.gt.s32.totalorder %v1805, 0
    %v1807 = vsel %vm1806, %v1805, 0
    %v1808 = vshrl.u32 %v1807, 5
    %v1809 = vand.u32 %v1807, 31
    %v1810 = vsub.s32 32, %v1809
    %v1811 = vshrl.u32 683565275, %v1810
    %v1812 = vshll.u32 683565275, %v1809
    %v1813 = vshrl.u32 2475754826, %v1810
    %v1814 = vor.u32 %v1812, %v1813
    %v1815 = vshll.u32 2475754826, %v1809
    %v1816 = vshrl.u32 2131351028, %v1810
    %v1817 = vor.u32 %v1815, %v1816
    %v1818 = vshll.u32 2131351028, %v1809
    %v1819 = vshrl.u32 2102212464, %v1810
    %v1820 = vor.u32 %v1818, %v1819
    %v1821 = vshll.u32 2102212464, %v1809
    %v1822 = vshrl.u32 920167782, %v1810
    %v1823 = vor.u32 %v1821, %v1822
    %v1824 = vshll.u32 920167782, %v1809
    %v1825 = vshrl.u32 1326507024, %v1810
    %v1826 = vor.u32 %v1824, %v1825
    %vm1827 = vcmp.lt.s32.totalorder %v1808, 1
    %vm1828 = vcmp.lt.s32.totalorder %v1808, 2
    %vm1829 = vcmp.lt.s32.totalorder %v1808, 3
    %vm1830 = vcmp.lt.s32.totalorder %v1808, 4
    %v1831 = vsel %vm1827, %v1811, %v1814
    %v1832 = vsel %vm1830, %v1820, 2102212464
    %v1833 = vsel %vm1829, %v1817, %v1832
    %v1834 = vsel %vm1828, %v1831, %v1833
    %v1835 = vsel %vm1827, %v1814, %v1817
    %v1836 = vsel %vm1830, %v1823, 920167782
    %v1837 = vsel %vm1829, %v1820, %v1836
    %v1838 = vsel %vm1828, %v1835, %v1837
    %v1839 = vsel %vm1827, %v1817, %v1820
    %v1840 = vsel %vm1830, %v1826, 1326507024
    %v1841 = vsel %vm1829, %v1823, %v1840
    %v1842 = vsel %vm1828, %v1839, %v1841
    %v1843 = vshll.u32 %v1803, 8
    %v1844 = vmul.u32.u64.compose %v1843, %v1842
    %v1845 = vextract.low.u32 %v1844
    %v1846 = vextract.high.u32 %v1844
    %v1847 = vmul.u32.u64.compose %v1843, %v1838
    %v1848 = vextract.low.u32 %v1847
    %v1849 = vextract.high.u32 %v1847
    %v1850 = vmul.u32 %v1843, %v1834
    %v1851 = vadd.s32 %v1846, %v1848
    %vm1852 = vc.u32 %v1846, %v1848
    %v1853 = vadd.s32 %v1849, 1
    %v1854 = vsel %vm1852, %v1853, %v1849
    %v1855 = vadd.s32 %v1850, %v1854
    %v1856 = vadd.s32 %v1855, 536870912
    %v1857 = vshrl.u32 %v1856, 30
    %v1858 = vshll.u32 %v1857, 30
    %v1859 = vsub.s32 %v1855, %v1858
    %vm1860 = vcmp.lt.s32.totalorder %v1859, 0
    %v1861 = vsub.s32 0, %v1859
    %v1862 = vsel %vm1860, %v1861, %v1859
    %v1863 = vclz %v1862
    %v1864 = vsub.s32 %v1863, 2
    %vm1865 = vcmp.gt.s32.totalorder 0, %v1864
    %v1866 = vsel %vm1865, 0, %v1864
    %v1867 = vsub.s32 32, %v1866
    %v1868 = vshll.u32 %v1859, %v1866
    %v1869 = vshrl.u32 %v1851, %v1867
    %v1870 = vor.u32 %v1868, %v1869
    %v1871 = vsub.s32 4294967266, %v1866
    %v1872 = vadd.s32 %v1871, 127
    %v1873 = vshll.u32 %v1872, 23
    %v1874 = vor.u32 4788187, %v1873
    %v1875 = vand.u32 2147483647, %v1874
    %v1877 = vcvt.s32.f32 %v1870
    %v1878 = vmul.f32 %v1877, %v1875
    %v1879 = vxor.u32 %v1878, 2147483648
    %v1880 = vsel %vm1797, %v1879, %v1878
    %v1881 = vsub.s32 4, %v1857
    %v1882 = vsel %vm1797, %v1881, %v1857
    %v1883 = vsel %vm1796, %v133, %v1880
    %v1884 = vsel %vm1796, 0, %v1882
    %v1885 = vcosq.f32.pop %v1883
    %v1886 = vsinq.f32.pop %v1883
    %vm1887 = vweird.f32 %v133
    %v1888 = vand.u32 %v1884, 3
    %vm1889 = vcmp.lt.s32.totalorder %v1888, 2
    %vm1890 = vcmp.eq.s32.totalorder %v1888, 0
    %v1891 = vxor.u32 %v1886, 2147483648
    %v1892 = vsel %vm1890, %v1885, %v1891
    %vm1893 = vcmp.eq.s32.totalorder %v1888, 2
    %v1894 = vxor.u32 %v1885, 2147483648
    %v1895 = vsel %vm1893, %v1894, %v1886
    %v1896 = vsel %vm1889, %v1892, %v1895
    %v1897 = vsel %vm1887, nan, %v1896
    %v1898 = vand.u32 2147483647, %v134
    %vm1899 = vcmp.le.f32.partialorder %v1898, 0.7853982
    %vm1900 = vcmp.lt.s32.totalorder %v134, 0
    %v1901 = vand.u32 %v134, 2139095040
    %v1902 = vshrl.u32 %v1901, 23
    %v1903 = vsub.s32 %v1902, 127
    %v1904 = vand.u32 2147483647, %v134
    %v1905 = vand.u32 %v1904, 8388607
    %v1906 = vor.u32 %v1905, 8388608
    %v1907 = vsub.s32 0, %v1906
    %v1908 = vadd.s32 %v1903, 1
    %vm1909 = vcmp.gt.s32.totalorder %v1908, 0
    %v1910 = vsel %vm1909, %v1908, 0
    %v1911 = vshrl.u32 %v1910, 5
    %v1912 = vand.u32 %v1910, 31
    %v1913 = vsub.s32 32, %v1912
    %v1914 = vshrl.u32 683565275, %v1913
    %v1915 = vshll.u32 683565275, %v1912
    %v1916 = vshrl.u32 2475754826, %v1913
    %v1917 = vor.u32 %v1915, %v1916
    %v1918 = vshll.u32 2475754826, %v1912
    %v1919 = vshrl.u32 2131351028, %v1913
    %v1920 = vor.u32 %v1918, %v1919
    %v1921 = vshll.u32 2131351028, %v1912
    %v1922 = vshrl.u32 2102212464, %v1913
    %v1923 = vor.u32 %v1921, %v1922
    %v1924 = vshll.u32 2102212464, %v1912
    %v1925 = vshrl.u32 920167782, %v1913
    %v1926 = vor.u32 %v1924, %v1925
    %v1927 = vshll.u32 920167782, %v1912
    %v1928 = vshrl.u32 1326507024, %v1913
    %v1929 = vor.u32 %v1927, %v1928
    %vm1930 = vcmp.lt.s32.totalorder %v1911, 1
    %vm1931 = vcmp.lt.s32.totalorder %v1911, 2
    %vm1932 = vcmp.lt.s32.totalorder %v1911, 3
    %vm1933 = vcmp.lt.s32.totalorder %v1911, 4
    %v1934 = vsel %vm1930, %v1914, %v1917
    %v1935 = vsel %vm1933, %v1923, 2102212464
    %v1936 = vsel %vm1932, %v1920, %v1935
    %v1937 = vsel %vm1931, %v1934, %v1936
    %v1938 = vsel %vm1930, %v1917, %v1920
    %v1939 = vsel %vm1933, %v1926, 920167782
    %v1940 = vsel %vm1932, %v1923, %v1939
    %v1941 = vsel %vm1931, %v1938, %v1940
    %v1942 = vsel %vm1930, %v1920, %v1923
    %v1943 = vsel %vm1933, %v1929, 1326507024
    %v1944 = vsel %vm1932, %v1926, %v1943
    %v1945 = vsel %vm1931, %v1942, %v1944
    %v1946 = vshll.u32 %v1906, 8
    %v1947 = vmul.u32.u64.compose %v1946, %v1945
    %v1948 = vextract.low.u32 %v1947
    %v1949 = vextract.high.u32 %v1947
    %v1950 = vmul.u32.u64.compose %v1946, %v1941
    %v1951 = vextract.low.u32 %v1950
    %v1952 = vextract.high.u32 %v1950
    %v1953 = vmul.u32 %v1946, %v1937
    %v1954 = vadd.s32 %v1949, %v1951
    %vm1955 = vc.u32 %v1949, %v1951
    %v1956 = vadd.s32 %v1952, 1
    %v1957 = vsel %vm1955, %v1956, %v1952
    %v1958 = vadd.s32 %v1953, %v1957
    %v1959 = vadd.s32 %v1958, 536870912
    %v1960 = vshrl.u32 %v1959, 30
    %v1961 = vshll.u32 %v1960, 30
    %v1962 = vsub.s32 %v1958, %v1961
    %vm1963 = vcmp.lt.s32.totalorder %v1962, 0
    %v1964 = vsub.s32 0, %v1962
    %v1965 = vsel %vm1963, %v1964, %v1962
    %v1966 = vclz %v1965
    %v1967 = vsub.s32 %v1966, 2
    %vm1968 = vcmp.gt.s32.totalorder 0, %v1967
    %v1969 = vsel %vm1968, 0, %v1967
    %v1970 = vsub.s32 32, %v1969
    %v1971 = vshll.u32 %v1962, %v1969
    %v1972 = vshrl.u32 %v1954, %v1970
    %v1973 = vor.u32 %v1971, %v1972
    %v1974 = vsub.s32 4294967266, %v1969
    %v1975 = vadd.s32 %v1974, 127
    %v1976 = vshll.u32 %v1975, 23
    %v1977 = vor.u32 4788187, %v1976
    %v1978 = vand.u32 2147483647, %v1977
    %v1980 = vcvt.s32.f32 %v1973
    %v1981 = vmul.f32 %v1980, %v1978
    %v1982 = vxor.u32 %v1981, 2147483648
    %v1983 = vsel %vm1900, %v1982, %v1981
    %v1984 = vsub.s32 4, %v1960
    %v1985 = vsel %vm1900, %v1984, %v1960
    %v1986 = vsel %vm1899, %v134, %v1983
    %v1987 = vsel %vm1899, 0, %v1985
    %v1988 = vcosq.f32.pop %v1986
    %v1989 = vsinq.f32.pop %v1986
    %vm1990 = vweird.f32 %v134
    %v1991 = vand.u32 %v1987, 3
    %vm1992 = vcmp.lt.s32.totalorder %v1991, 2
    %vm1993 = vcmp.eq.s32.totalorder %v1991, 0
    %v1994 = vxor.u32 %v1989, 2147483648
    %v1995 = vsel %vm1993, %v1988, %v1994
    %vm1996 = vcmp.eq.s32.totalorder %v1991, 2
    %v1997 = vxor.u32 %v1988, 2147483648
    %v1998 = vsel %vm1996, %v1997, %v1989
    %v1999 = vsel %vm1992, %v1995, %v1998
    %v2000 = vsel %vm1990, nan, %v1999
    %v2001 = vand.u32 2147483647, %v135
    %vm2002 = vcmp.le.f32.partialorder %v2001, 0.7853982
    %vm2003 = vcmp.lt.s32.totalorder %v135, 0
    %v2004 = vand.u32 %v135, 2139095040
    %v2005 = vshrl.u32 %v2004, 23
    %v2006 = vsub.s32 %v2005, 127
    %v2007 = vand.u32 2147483647, %v135
    %v2008 = vand.u32 %v2007, 8388607
    %v2009 = vor.u32 %v2008, 8388608
    %v2010 = vsub.s32 0, %v2009
    %v2011 = vadd.s32 %v2006, 1
    %vm2012 = vcmp.gt.s32.totalorder %v2011, 0
    %v2013 = vsel %vm2012, %v2011, 0
    %v2014 = vshrl.u32 %v2013, 5
    %v2015 = vand.u32 %v2013, 31
    %v2016 = vsub.s32 32, %v2015
    %v2017 = vshrl.u32 683565275, %v2016
    %v2018 = vshll.u32 683565275, %v2015
    %v2019 = vshrl.u32 2475754826, %v2016
    %v2020 = vor.u32 %v2018, %v2019
    %v2021 = vshll.u32 2475754826, %v2015
    %v2022 = vshrl.u32 2131351028, %v2016
    %v2023 = vor.u32 %v2021, %v2022
    %v2024 = vshll.u32 2131351028, %v2015
    %v2025 = vshrl.u32 2102212464, %v2016
    %v2026 = vor.u32 %v2024, %v2025
    %v2027 = vshll.u32 2102212464, %v2015
    %v2028 = vshrl.u32 920167782, %v2016
    %v2029 = vor.u32 %v2027, %v2028
    %v2030 = vshll.u32 920167782, %v2015
    %v2031 = vshrl.u32 1326507024, %v2016
    %v2032 = vor.u32 %v2030, %v2031
    %vm2033 = vcmp.lt.s32.totalorder %v2014, 1
    %vm2034 = vcmp.lt.s32.totalorder %v2014, 2
    %vm2035 = vcmp.lt.s32.totalorder %v2014, 3
    %vm2036 = vcmp.lt.s32.totalorder %v2014, 4
    %v2037 = vsel %vm2033, %v2017, %v2020
    %v2038 = vsel %vm2036, %v2026, 2102212464
    %v2039 = vsel %vm2035, %v2023, %v2038
    %v2040 = vsel %vm2034, %v2037, %v2039
    %v2041 = vsel %vm2033, %v2020, %v2023
    %v2042 = vsel %vm2036, %v2029, 920167782
    %v2043 = vsel %vm2035, %v2026, %v2042
    %v2044 = vsel %vm2034, %v2041, %v2043
    %v2045 = vsel %vm2033, %v2023, %v2026
    %v2046 = vsel %vm2036, %v2032, 1326507024
    %v2047 = vsel %vm2035, %v2029, %v2046
    %v2048 = vsel %vm2034, %v2045, %v2047
    %v2049 = vshll.u32 %v2009, 8
    %v2050 = vmul.u32.u64.compose %v2049, %v2048
    %v2051 = vextract.low.u32 %v2050
    %v2052 = vextract.high.u32 %v2050
    %v2053 = vmul.u32.u64.compose %v2049, %v2044
    %v2054 = vextract.low.u32 %v2053
    %v2055 = vextract.high.u32 %v2053
    %v2056 = vmul.u32 %v2049, %v2040
    %v2057 = vadd.s32 %v2052, %v2054
    %vm2058 = vc.u32 %v2052, %v2054
    %v2059 = vadd.s32 %v2055, 1
    %v2060 = vsel %vm2058, %v2059, %v2055
    %v2061 = vadd.s32 %v2056, %v2060
    %v2062 = vadd.s32 %v2061, 536870912
    %v2063 = vshrl.u32 %v2062, 30
    %v2064 = vshll.u32 %v2063, 30
    %v2065 = vsub.s32 %v2061, %v2064
    %vm2066 = vcmp.lt.s32.totalorder %v2065, 0
    %v2067 = vsub.s32 0, %v2065
    %v2068 = vsel %vm2066, %v2067, %v2065
    %v2069 = vclz %v2068
    %v2070 = vsub.s32 %v2069, 2
    %vm2071 = vcmp.gt.s32.totalorder 0, %v2070
    %v2072 = vsel %vm2071, 0, %v2070
    %v2073 = vsub.s32 32, %v2072
    %v2074 = vshll.u32 %v2065, %v2072
    %v2075 = vshrl.u32 %v2057, %v2073
    %v2076 = vor.u32 %v2074, %v2075
    %v2077 = vsub.s32 4294967266, %v2072
    %v2078 = vadd.s32 %v2077, 127
    %v2079 = vshll.u32 %v2078, 23
    %v2080 = vor.u32 4788187, %v2079
    %v2081 = vand.u32 2147483647, %v2080
    %v2083 = vcvt.s32.f32 %v2076
    %v2084 = vmul.f32 %v2083, %v2081
    %v2085 = vxor.u32 %v2084, 2147483648
    %v2086 = vsel %vm2003, %v2085, %v2084
    %v2087 = vsub.s32 4, %v2063
    %v2088 = vsel %vm2003, %v2087, %v2063
    %v2089 = vsel %vm2002, %v135, %v2086
    %v2090 = vsel %vm2002, 0, %v2088
    %v2091 = vcosq.f32.pop %v2089
    %v2092 = vsinq.f32.pop %v2089
    %vm2093 = vweird.f32 %v135
    %v2094 = vand.u32 %v2090, 3
    %vm2095 = vcmp.lt.s32.totalorder %v2094, 2
    %vm2096 = vcmp.eq.s32.totalorder %v2094, 0
    %v2097 = vxor.u32 %v2092, 2147483648
    %v2098 = vsel %vm2096, %v2091, %v2097
    %vm2099 = vcmp.eq.s32.totalorder %v2094, 2
    %v2100 = vxor.u32 %v2091, 2147483648
    %v2101 = vsel %vm2099, %v2100, %v2092
    %v2102 = vsel %vm2095, %v2098, %v2101
    %v2103 = vsel %vm2093, nan, %v2102
    %v2104 = vand.u32 2147483647, %v136
    %vm2105 = vcmp.le.f32.partialorder %v2104, 0.7853982
    %vm2106 = vcmp.lt.s32.totalorder %v136, 0
    %v2107 = vand.u32 %v136, 2139095040
    %v2108 = vshrl.u32 %v2107, 23
    %v2109 = vsub.s32 %v2108, 127
    %v2110 = vand.u32 2147483647, %v136
    %v2111 = vand.u32 %v2110, 8388607
    %v2112 = vor.u32 %v2111, 8388608
    %v2113 = vsub.s32 0, %v2112
    %v2114 = vadd.s32 %v2109, 1
    %vm2115 = vcmp.gt.s32.totalorder %v2114, 0
    %v2116 = vsel %vm2115, %v2114, 0
    %v2117 = vshrl.u32 %v2116, 5
    %v2118 = vand.u32 %v2116, 31
    %v2119 = vsub.s32 32, %v2118
    %v2120 = vshrl.u32 683565275, %v2119
    %v2121 = vshll.u32 683565275, %v2118
    %v2122 = vshrl.u32 2475754826, %v2119
    %v2123 = vor.u32 %v2121, %v2122
    %v2124 = vshll.u32 2475754826, %v2118
    %v2125 = vshrl.u32 2131351028, %v2119
    %v2126 = vor.u32 %v2124, %v2125
    %v2127 = vshll.u32 2131351028, %v2118
    %v2128 = vshrl.u32 2102212464, %v2119
    %v2129 = vor.u32 %v2127, %v2128
    %v2130 = vshll.u32 2102212464, %v2118
    %v2131 = vshrl.u32 920167782, %v2119
    %v2132 = vor.u32 %v2130, %v2131
    %v2133 = vshll.u32 920167782, %v2118
    %v2134 = vshrl.u32 1326507024, %v2119
    %v2135 = vor.u32 %v2133, %v2134
    %vm2136 = vcmp.lt.s32.totalorder %v2117, 1
    %vm2137 = vcmp.lt.s32.totalorder %v2117, 2
    %vm2138 = vcmp.lt.s32.totalorder %v2117, 3
    %vm2139 = vcmp.lt.s32.totalorder %v2117, 4
    %v2140 = vsel %vm2136, %v2120, %v2123
    %v2141 = vsel %vm2139, %v2129, 2102212464
    %v2142 = vsel %vm2138, %v2126, %v2141
    %v2143 = vsel %vm2137, %v2140, %v2142
    %v2144 = vsel %vm2136, %v2123, %v2126
    %v2145 = vsel %vm2139, %v2132, 920167782
    %v2146 = vsel %vm2138, %v2129, %v2145
    %v2147 = vsel %vm2137, %v2144, %v2146
    %v2148 = vsel %vm2136, %v2126, %v2129
    %v2149 = vsel %vm2139, %v2135, 1326507024
    %v2150 = vsel %vm2138, %v2132, %v2149
    %v2151 = vsel %vm2137, %v2148, %v2150
    %v2152 = vshll.u32 %v2112, 8
    %v2153 = vmul.u32.u64.compose %v2152, %v2151
    %v2154 = vextract.low.u32 %v2153
    %v2155 = vextract.high.u32 %v2153
    %v2156 = vmul.u32.u64.compose %v2152, %v2147
    %v2157 = vextract.low.u32 %v2156
    %v2158 = vextract.high.u32 %v2156
    %v2159 = vmul.u32 %v2152, %v2143
    %v2160 = vadd.s32 %v2155, %v2157
    %vm2161 = vc.u32 %v2155, %v2157
    %v2162 = vadd.s32 %v2158, 1
    %v2163 = vsel %vm2161, %v2162, %v2158
    %v2164 = vadd.s32 %v2159, %v2163
    %v2165 = vadd.s32 %v2164, 536870912
    %v2166 = vshrl.u32 %v2165, 30
    %v2167 = vshll.u32 %v2166, 30
    %v2168 = vsub.s32 %v2164, %v2167
    %vm2169 = vcmp.lt.s32.totalorder %v2168, 0
    %v2170 = vsub.s32 0, %v2168
    %v2171 = vsel %vm2169, %v2170, %v2168
    %v2172 = vclz %v2171
    %v2173 = vsub.s32 %v2172, 2
    %vm2174 = vcmp.gt.s32.totalorder 0, %v2173
    %v2175 = vsel %vm2174, 0, %v2173
    %v2176 = vsub.s32 32, %v2175
    %v2177 = vshll.u32 %v2168, %v2175
    %v2178 = vshrl.u32 %v2160, %v2176
    %v2179 = vor.u32 %v2177, %v2178
    %v2180 = vsub.s32 4294967266, %v2175
    %v2181 = vadd.s32 %v2180, 127
    %v2182 = vshll.u32 %v2181, 23
    %v2183 = vor.u32 4788187, %v2182
    %v2184 = vand.u32 2147483647, %v2183
    %v2186 = vcvt.s32.f32 %v2179
    %v2187 = vmul.f32 %v2186, %v2184
    %v2188 = vxor.u32 %v2187, 2147483648
    %v2189 = vsel %vm2106, %v2188, %v2187
    %v2190 = vsub.s32 4, %v2166
    %v2191 = vsel %vm2106, %v2190, %v2166
    %v2192 = vsel %vm2105, %v136, %v2189
    %v2193 = vsel %vm2105, 0, %v2191
    %v2194 = vcosq.f32.pop %v2192
    %v2195 = vsinq.f32.pop %v2192
    %vm2196 = vweird.f32 %v136
    %v2197 = vand.u32 %v2193, 3
    %vm2198 = vcmp.lt.s32.totalorder %v2197, 2
    %vm2199 = vcmp.eq.s32.totalorder %v2197, 0
    %v2200 = vxor.u32 %v2195, 2147483648
    %v2201 = vsel %vm2199, %v2194, %v2200
    %vm2202 = vcmp.eq.s32.totalorder %v2197, 2
    %v2203 = vxor.u32 %v2194, 2147483648
    %v2204 = vsel %vm2202, %v2203, %v2195
    %v2205 = vsel %vm2198, %v2201, %v2204
    %v2206 = vsel %vm2196, nan, %v2205
    %vm2207 = vcmask 130048
    %v2209 = vsel %vm2207, %v33, 0
    %v2212 = vsel %vm2207, %v34, 0
    %v2215 = vsel %vm2207, %v35, 0
    %2217 = vmatprep.subr.mxu0 0.0
    %v2218 = vand.u32 %v655, 4294901760
    %2219 = vmatpush1.msra.mxu0 %v2218
    %2220 = vmatprep.subr.mxu0 0.0
    %v2221 = vand.u32 %v758, 4294901760
    %2222 = vmatpush1.msra.mxu0 %v2221
    %2223 = vmatprep.subr.mxu0 0.0
    %2224 = vmatpush1.msra.mxu0 0.0
    %2225 = vmatprep.subr.mxu0 0.0
    %2226 = vmatpush1.msra.mxu0 0.0
    %2227 = vmatprep.subr.mxu0 0.0
    %2228 = vmatpush1.msra.mxu0 0.0
    %2229 = vmatprep.subr.mxu0 0.0
    %2230 = vmatpush1.msra.mxu0 0.0
    %2231 = vmatprep.subr.mxu0 0.0
    %2232 = vmatpush1.msra.mxu0 0.0
    %2233 = vmatprep.subr.mxu0 0.0
    %2234 = vmatpush1.msra.mxu0 0.0
    %2235 = vmatprep.subr.mxu0 0.0
    %2236 = vmatpush1.msra.mxu0 0.0
    %2237 = vmatprep.subr.mxu0 0.0
    %2238 = vmatpush1.msra.mxu0 0.0
    %2239 = vmatprep.subr.mxu0 0.0
    %2240 = vmatpush1.msra.mxu0 0.0
    %2241 = vmatprep.subr.mxu0 0.0
    %2242 = vmatpush1.msra.mxu0 0.0
    %2243 = vmatprep.subr.mxu0 0.0
    %2244 = vmatpush1.msra.mxu0 0.0
    %2245 = vmatprep.subr.mxu0 0.0
    %2246 = vmatpush1.msra.mxu0 0.0
    %2247 = vmatprep.subr.mxu0 0.0
    %2248 = vmatpush1.msra.mxu0 0.0
    %2249 = vmatprep.subr.mxu0 0.0
    %2250 = vmatpush1.msra.mxu0 0.0
    %2251 = vmatprep.subr.mxu0 0.0
    %2252 = vmatpush1.msra.mxu0 0.0
    %2253 = vmatprep.subr.mxu0 0.0
    %2254 = vmatpush1.msra.mxu0 0.0
    %2255 = vmatprep.subr.mxu0 0.0
    %2256 = vmatpush1.msra.mxu0 0.0
    %2257 = vmatprep.subr.mxu0 0.0
    %2258 = vmatpush1.msra.mxu0 0.0
    %2259 = vmatprep.subr.mxu0 0.0
    %2260 = vmatpush1.msra.mxu0 0.0
    %2261 = vmatprep.subr.mxu0 0.0
    %2262 = vmatpush1.msra.mxu0 0.0
    %2263 = vmatprep.subr.mxu0 0.0
    %2264 = vmatpush1.msra.mxu0 0.0
    %2265 = vmatprep.subr.mxu0 0.0
    %2266 = vmatpush1.msra.mxu0 0.0
    %2267 = vmatprep.subr.mxu0 0.0
    %2268 = vmatpush1.msra.mxu0 0.0
    %2269 = vmatprep.subr.mxu0 0.0
    %2270 = vmatpush1.msra.mxu0 0.0
    %2271 = vmatprep.subr.mxu0 0.0
    %2272 = vmatpush1.msra.mxu0 0.0
    %2273 = vmatprep.subr.mxu0 0.0
    %2274 = vmatpush1.msra.mxu0 0.0
    %2275 = vmatprep.subr.mxu0 0.0
    %2276 = vmatpush1.msra.mxu0 0.0
    %2277 = vmatprep.subr.mxu0 0.0
    %2278 = vmatpush1.msra.mxu0 0.0
    %2279 = vmatprep.subr.mxu0 0.0
    %2280 = vmatpush1.msra.mxu0 0.0
    %2281 = vmatprep.subr.mxu0 0.0
    %2282 = vmatpush1.msra.mxu0 0.0
    %2283 = vmatprep.mubr.f32.mxu0 0.0
    %v2284 = vand.u32 %v2209, 4294901760
    %v2285 = vsub.f32 %v2209, %v2284
    %v2286 = vand.u32 %v2285, 4294901760
    %v2287 = vsub.f32 %v2285, %v2286
    %v2288 = vand.u32 %v2287, 4294901760
    %2289 = vmatmul.mubr.f32.gmra.mrb[0].mxu0 %v2288
    %v2290 = vpop.f32.mrb[0].mxu0
    %v2291 = vadd.f32 0.0, %v2290
    %v2292 = vpop.f32.mrb[0].mxu0
    %2293 = vmatprep.mubr.f32.mxu0 0.0
    %v2294 = vand.u32 %v2212, 4294901760
    %v2295 = vsub.f32 %v2212, %v2294
    %v2296 = vand.u32 %v2295, 4294901760
    %v2297 = vsub.f32 %v2295, %v2296
    %v2298 = vand.u32 %v2297, 4294901760
    %2299 = vmatmul.mubr.f32.gmra.mrb[0].mxu0 %v2298
    %v2300 = vpop.f32.mrb[0].mxu0
    %v2301 = vadd.f32 0.0, %v2300
    %v2302 = vpop.f32.mrb[0].mxu0
    %2303 = vmatprep.mubr.f32.mxu0 0.0
    %v2304 = vand.u32 %v2215, 4294901760
    %v2305 = vsub.f32 %v2215, %v2304
    %v2306 = vand.u32 %v2305, 4294901760
    %v2307 = vsub.f32 %v2305, %v2306
    %v2308 = vand.u32 %v2307, 4294901760
    %2309 = vmatmul.mubr.f32.gmra.mrb[0].mxu0 %v2308
    %v2310 = vpop.f32.mrb[0].mxu0
    %v2311 = vadd.f32 0.0, %v2310
    %v2312 = vpop.f32.mrb[0].mxu0
    %2313 = vdwg.mxu0
    %2314 = vmatprep.subr.mxu0 0.0
    %v2315 = vand.u32 %v655, 4294901760
    %v2316 = vsub.f32 %v655, %v2315
    %v2317 = vand.u32 %v2316, 4294901760
    %v2318 = vsub.f32 %v2316, %v2317
    %v2319 = vand.u32 %v2318, 4294901760
    %2320 = vmatpush1.msra.mxu0 %v2319
    %2321 = vmatprep.subr.mxu0 0.0
    %v2322 = vand.u32 %v758, 4294901760
    %v2323 = vsub.f32 %v758, %v2322
    %v2324 = vand.u32 %v2323, 4294901760
    %v2325 = vsub.f32 %v2323, %v2324
    %v2326 = vand.u32 %v2325, 4294901760
    %2327 = vmatpush1.msra.mxu0 %v2326
    %2328 = vmatprep.subr.mxu0 0.0
    %2329 = vmatpush1.msra.mxu0 0.0
    %2330 = vmatprep.subr.mxu0 0.0
    %2331 = vmatpush1.msra.mxu0 0.0
    %2332 = vmatprep.subr.mxu0 0.0
    %2333 = vmatpush1.msra.mxu0 0.0
    %2334 = vmatprep.subr.mxu0 0.0
    %2335 = vmatpush1.msra.mxu0 0.0
    %2336 = vmatprep.subr.mxu0 0.0
    %2337 = vmatpush1.msra.mxu0 0.0
    %2338 = vmatprep.subr.mxu0 0.0
    %2339 = vmatpush1.msra.mxu0 0.0
    %2340 = vmatprep.subr.mxu0 0.0
    %2341 = vmatpush1.msra.mxu0 0.0
    %2342 = vmatprep.subr.mxu0 0.0
    %2343 = vmatpush1.msra.mxu0 0.0
    %2344 = vmatprep.subr.mxu0 0.0
    %2345 = vmatpush1.msra.mxu0 0.0
    %2346 = vmatprep.subr.mxu0 0.0
    %2347 = vmatpush1.msra.mxu0 0.0
    %2348 = vmatprep.subr.mxu0 0.0
    %2349 = vmatpush1.msra.mxu0 0.0
    %2350 = vmatprep.subr.mxu0 0.0
    %2351 = vmatpush1.msra.mxu0 0.0
    %2352 = vmatprep.subr.mxu0 0.0
    %2353 = vmatpush1.msra.mxu0 0.0
    %2354 = vmatprep.subr.mxu0 0.0
    %2355 = vmatpush1.msra.mxu0 0.0
    %2356 = vmatprep.subr.mxu0 0.0
    %2357 = vmatpush1.msra.mxu0 0.0
    %2358 = vmatprep.subr.mxu0 0.0
    %2359 = vmatpush1.msra.mxu0 0.0
    %2360 = vmatprep.subr.mxu0 0.0
    %2361 = vmatpush1.msra.mxu0 0.0
    %2362 = vmatprep.subr.mxu0 0.0
    %2363 = vmatpush1.msra.mxu0 0.0
    %2364 = vmatprep.subr.mxu0 0.0
    %2365 = vmatpush1.msra.mxu0 0.0
    %2366 = vmatprep.subr.mxu0 0.0
    %2367 = vmatpush1.msra.mxu0 0.0
    %2368 = vmatprep.subr.mxu0 0.0
    %2369 = vmatpush1.msra.mxu0 0.0
    %2370 = vmatprep.subr.mxu0 0.0
    %2371 = vmatpush1.msra.mxu0 0.0
    %2372 = vmatprep.subr.mxu0 0.0
    %2373 = vmatpush1.msra.mxu0 0.0
    %2374 = vmatprep.subr.mxu0 0.0
    %2375 = vmatpush1.msra.mxu0 0.0
    %2376 = vmatprep.subr.mxu0 0.0
    %2377 = vmatpush1.msra.mxu0 0.0
    %2378 = vmatprep.subr.mxu0 0.0
    %2379 = vmatpush1.msra.mxu0 0.0
    %2380 = vmatprep.subr.mxu0 0.0
    %2381 = vmatpush1.msra.mxu0 0.0
    %2382 = vmatprep.subr.mxu0 0.0
    %2383 = vmatpush1.msra.mxu0 0.0
    %2384 = vmatprep.subr.mxu0 0.0
    %2385 = vmatpush1.msra.mxu0 0.0
    %2386 = vmatprep.subr.mxu0 0.0
    %2387 = vmatpush1.msra.mxu0 0.0
    %2388 = vmatprep.mubr.f32.mxu0 0.0
    %v2389 = vand.u32 %v2209, 4294901760
    %2390 = vmatmul.mubr.f32.gmra.mrb[0].mxu0 %v2389
    %v2391 = vpop.f32.mrb[0].mxu0
    %v2392 = vadd.f32 %v2291, %v2391
    %v2393 = vpop.f32.mrb[0].mxu0
    %2394 = vmatprep.mubr.f32.mxu0 0.0
    %v2395 = vand.u32 %v2212, 4294901760
    %2396 = vmatmul.mubr.f32.gmra.mrb[0].mxu0 %v2395
    %v2397 = vpop.f32.mrb[0].mxu0
    %v2398 = vadd.f32 %v2301, %v2397
    %v2399 = vpop.f32.mrb[0].mxu0
    %2400 = vmatprep.mubr.f32.mxu0 0.0
    %v2401 = vand.u32 %v2215, 4294901760
    %2402 = vmatmul.mubr.f32.gmra.mrb[0].mxu0 %v2401
    %v2403 = vpop.f32.mrb[0].mxu0
    %v2404 = vadd.f32 %v2311, %v2403
    %v2405 = vpop.f32.mrb[0].mxu0
    %2406 = vdwg.mxu0
    %2407 = vmatprep.subr.mxu0 0.0
    %v2408 = vand.u32 %v655, 4294901760
    %v2409 = vsub.f32 %v655, %v2408
    %2410 = vmatpush1.msra.mxu0 %v2409
    %2411 = vmatprep.subr.mxu0 0.0
    %v2412 = vand.u32 %v758, 4294901760
    %v2413 = vsub.f32 %v758, %v2412
    %2414 = vmatpush1.msra.mxu0 %v2413
    %2415 = vmatprep.subr.mxu0 0.0
    %2416 = vmatpush1.msra.mxu0 0.0
    %2417 = vmatprep.subr.mxu0 0.0
    %2418 = vmatpush1.msra.mxu0 0.0
    %2419 = vmatprep.subr.mxu0 0.0
    %2420 = vmatpush1.msra.mxu0 0.0
    %2421 = vmatprep.subr.mxu0 0.0
    %2422 = vmatpush1.msra.mxu0 0.0
    %2423 = vmatprep.subr.mxu0 0.0
    %2424 = vmatpush1.msra.mxu0 0.0
    %2425 = vmatprep.subr.mxu0 0.0
    %2426 = vmatpush1.msra.mxu0 0.0
    %2427 = vmatprep.subr.mxu0 0.0
    %2428 = vmatpush1.msra.mxu0 0.0
    %2429 = vmatprep.subr.mxu0 0.0
    %2430 = vmatpush1.msra.mxu0 0.0
    %2431 = vmatprep.subr.mxu0 0.0
    %2432 = vmatpush1.msra.mxu0 0.0
    %2433 = vmatprep.subr.mxu0 0.0
    %2434 = vmatpush1.msra.mxu0 0.0
    %2435 = vmatprep.subr.mxu0 0.0
    %2436 = vmatpush1.msra.mxu0 0.0
    %2437 = vmatprep.subr.mxu0 0.0
    %2438 = vmatpush1.msra.mxu0 0.0
    %2439 = vmatprep.subr.mxu0 0.0
    %2440 = vmatpush1.msra.mxu0 0.0
    %2441 = vmatprep.subr.mxu0 0.0
    %2442 = vmatpush1.msra.mxu0 0.0
    %2443 = vmatprep.subr.mxu0 0.0
    %2444 = vmatpush1.msra.mxu0 0.0
    %2445 = vmatprep.subr.mxu0 0.0
    %2446 = vmatpush1.msra.mxu0 0.0
    %2447 = vmatprep.subr.mxu0 0.0
    %2448 = vmatpush1.msra.mxu0 0.0
    %2449 = vmatprep.subr.mxu0 0.0
    %2450 = vmatpush1.msra.mxu0 0.0
    %2451 = vmatprep.subr.mxu0 0.0
    %2452 = vmatpush1.msra.mxu0 0.0
    %2453 = vmatprep.subr.mxu0 0.0
    %2454 = vmatpush1.msra.mxu0 0.0
    %2455 = vmatprep.subr.mxu0 0.0
    %2456 = vmatpush1.msra.mxu0 0.0
    %2457 = vmatprep.subr.mxu0 0.0
    %2458 = vmatpush1.msra.mxu0 0.0
    %2459 = vmatprep.subr.mxu0 0.0
    %2460 = vmatpush1.msra.mxu0 0.0
    %2461 = vmatprep.subr.mxu0 0.0
    %2462 = vmatpush1.msra.mxu0 0.0
    %2463 = vmatprep.subr.mxu0 0.0
    %2464 = vmatpush1.msra.mxu0 0.0
    %2465 = vmatprep.subr.mxu0 0.0
    %2466 = vmatpush1.msra.mxu0 0.0
    %2467 = vmatprep.subr.mxu0 0.0
    %2468 = vmatpush1.msra.mxu0 0.0
    %2469 = vmatprep.subr.mxu0 0.0
    %2470 = vmatpush1.msra.mxu0 0.0
    %2471 = vmatprep.subr.mxu0 0.0
    %2472 = vmatpush1.msra.mxu0 0.0
    %2473 = vmatprep.subr.mxu0 0.0
    %2474 = vmatpush1.msra.mxu0 0.0
    %2475 = vmatprep.mubr.f32.mxu0 0.0
    %v2476 = vand.u32 %v2209, 4294901760
    %v2477 = vsub.f32 %v2209, %v2476
    %2478 = vmatmul.mubr.f32.gmra.mrb[0].mxu0 %v2477
    %v2479 = vpop.f32.mrb[0].mxu0
    %v2480 = vadd.f32 %v2392, %v2479
    %v2481 = vpop.f32.mrb[0].mxu0
    %2482 = vmatprep.mubr.f32.mxu0 0.0
    %v2483 = vand.u32 %v2212, 4294901760
    %v2484 = vsub.f32 %v2212, %v2483
    %2485 = vmatmul.mubr.f32.gmra.mrb[0].mxu0 %v2484
    %v2486 = vpop.f32.mrb[0].mxu0
    %v2487 = vadd.f32 %v2398, %v2486
    %v2488 = vpop.f32.mrb[0].mxu0
    %2489 = vmatprep.mubr.f32.mxu0 0.0
    %v2490 = vand.u32 %v2215, 4294901760
    %v2491 = vsub.f32 %v2215, %v2490
    %2492 = vmatmul.mubr.f32.gmra.mrb[0].mxu0 %v2491
    %v2493 = vpop.f32.mrb[0].mxu0
    %v2494 = vadd.f32 %v2404, %v2493
    %v2495 = vpop.f32.mrb[0].mxu0
    %2496 = vdwg.mxu0
    %2497 = vmatprep.subr.mxu0 0.0
    %v2498 = vand.u32 %v655, 4294901760
    %2499 = vmatpush1.msra.mxu0 %v2498
    %2500 = vmatprep.subr.mxu0 0.0
    %v2501 = vand.u32 %v758, 4294901760
    %2502 = vmatpush1.msra.mxu0 %v2501
    %2503 = vmatprep.subr.mxu0 0.0
    %2504 = vmatpush1.msra.mxu0 0.0
    %2505 = vmatprep.subr.mxu0 0.0
    %2506 = vmatpush1.msra.mxu0 0.0
    %2507 = vmatprep.subr.mxu0 0.0
    %2508 = vmatpush1.msra.mxu0 0.0
    %2509 = vmatprep.subr.mxu0 0.0
    %2510 = vmatpush1.msra.mxu0 0.0
    %2511 = vmatprep.subr.mxu0 0.0
    %2512 = vmatpush1.msra.mxu0 0.0
    %2513 = vmatprep.subr.mxu0 0.0
    %2514 = vmatpush1.msra.mxu0 0.0
    %2515 = vmatprep.subr.mxu0 0.0
    %2516 = vmatpush1.msra.mxu0 0.0
    %2517 = vmatprep.subr.mxu0 0.0
    %2518 = vmatpush1.msra.mxu0 0.0
    %2519 = vmatprep.subr.mxu0 0.0
    %2520 = vmatpush1.msra.mxu0 0.0
    %2521 = vmatprep.subr.mxu0 0.0
    %2522 = vmatpush1.msra.mxu0 0.0
    %2523 = vmatprep.subr.mxu0 0.0
    %2524 = vmatpush1.msra.mxu0 0.0
    %2525 = vmatprep.subr.mxu0 0.0
    %2526 = vmatpush1.msra.mxu0 0.0
    %2527 = vmatprep.subr.mxu0 0.0
    %2528 = vmatpush1.msra.mxu0 0.0
    %2529 = vmatprep.subr.mxu0 0.0
    %2530 = vmatpush1.msra.mxu0 0.0
    %2531 = vmatprep.subr.mxu0 0.0
    %2532 = vmatpush1.msra.mxu0 0.0
    %2533 = vmatprep.subr.mxu0 0.0
    %2534 = vmatpush1.msra.mxu0 0.0
    %2535 = vmatprep.subr.mxu0 0.0
    %2536 = vmatpush1.msra.mxu0 0.0
    %2537 = vmatprep.subr.mxu0 0.0
    %2538 = vmatpush1.msra.mxu0 0.0
    %2539 = vmatprep.subr.mxu0 0.0
    %2540 = vmatpush1.msra.mxu0 0.0
    %2541 = vmatprep.subr.mxu0 0.0
    %2542 = vmatpush1.msra.mxu0 0.0
    %2543 = vmatprep.subr.mxu0 0.0
    %2544 = vmatpush1.msra.mxu0 0.0
    %2545 = vmatprep.subr.mxu0 0.0
    %2546 = vmatpush1.msra.mxu0 0.0
    %2547 = vmatprep.subr.mxu0 0.0
    %2548 = vmatpush1.msra.mxu0 0.0
    %2549 = vmatprep.subr.mxu0 0.0
    %2550 = vmatpush1.msra.mxu0 0.0
    %2551 = vmatprep.subr.mxu0 0.0
    %2552 = vmatpush1.msra.mxu0 0.0
    %2553 = vmatprep.subr.mxu0 0.0
    %2554 = vmatpush1.msra.mxu0 0.0
    %2555 = vmatprep.subr.mxu0 0.0
    %2556 = vmatpush1.msra.mxu0 0.0
    %2557 = vmatprep.subr.mxu0 0.0
    %2558 = vmatpush1.msra.mxu0 0.0
    %2559 = vmatprep.subr.mxu0 0.0
    %2560 = vmatpush1.msra.mxu0 0.0
    %2561 = vmatprep.subr.mxu0 0.0
    %2562 = vmatpush1.msra.mxu0 0.0
    %2563 = vmatprep.mubr.f32.mxu0 0.0
    %v2564 = vand.u32 %v2209, 4294901760
    %v2565 = vsub.f32 %v2209, %v2564
    %v2566 = vand.u32 %v2565, 4294901760
    %2567 = vmatmul.mubr.f32.gmra.mrb[0].mxu0 %v2566
    %v2568 = vpop.f32.mrb[0].mxu0
    %v2569 = vadd.f32 %v2480, %v2568
    %v2570 = vpop.f32.mrb[0].mxu0
    %2571 = vmatprep.mubr.f32.mxu0 0.0
    %v2572 = vand.u32 %v2212, 4294901760
    %v2573 = vsub.f32 %v2212, %v2572
    %v2574 = vand.u32 %v2573, 4294901760
    %2575 = vmatmul.mubr.f32.gmra.mrb[0].mxu0 %v2574
    %v2576 = vpop.f32.mrb[0].mxu0
    %v2577 = vadd.f32 %v2487, %v2576
    %v2578 = vpop.f32.mrb[0].mxu0
    %2579 = vmatprep.mubr.f32.mxu0 0.0
    %v2580 = vand.u32 %v2215, 4294901760
    %v2581 = vsub.f32 %v2215, %v2580
    %v2582 = vand.u32 %v2581, 4294901760
    %2583 = vmatmul.mubr.f32.gmra.mrb[0].mxu0 %v2582
    %v2584 = vpop.f32.mrb[0].mxu0
    %v2585 = vadd.f32 %v2494, %v2584
    %v2586 = vpop.f32.mrb[0].mxu0
    %2587 = vdwg.mxu0
    %2588 = vmatprep.subr.mxu0 0.0
    %v2589 = vand.u32 %v655, 4294901760
    %v2590 = vsub.f32 %v655, %v2589
    %v2591 = vand.u32 %v2590, 4294901760
    %2592 = vmatpush1.msra.mxu0 %v2591
    %2593 = vmatprep.subr.mxu0 0.0
    %v2594 = vand.u32 %v758, 4294901760
    %v2595 = vsub.f32 %v758, %v2594
    %v2596 = vand.u32 %v2595, 4294901760
    %2597 = vmatpush1.msra.mxu0 %v2596
    %2598 = vmatprep.subr.mxu0 0.0
    %2599 = vmatpush1.msra.mxu0 0.0
    %2600 = vmatprep.subr.mxu0 0.0
    %2601 = vmatpush1.msra.mxu0 0.0
    %2602 = vmatprep.subr.mxu0 0.0
    %2603 = vmatpush1.msra.mxu0 0.0
    %2604 = vmatprep.subr.mxu0 0.0
    %2605 = vmatpush1.msra.mxu0 0.0
    %2606 = vmatprep.subr.mxu0 0.0
    %2607 = vmatpush1.msra.mxu0 0.0
    %2608 = vmatprep.subr.mxu0 0.0
    %2609 = vmatpush1.msra.mxu0 0.0
    %2610 = vmatprep.subr.mxu0 0.0
    %2611 = vmatpush1.msra.mxu0 0.0
    %2612 = vmatprep.subr.mxu0 0.0
    %2613 = vmatpush1.msra.mxu0 0.0
    %2614 = vmatprep.subr.mxu0 0.0
    %2615 = vmatpush1.msra.mxu0 0.0
    %2616 = vmatprep.subr.mxu0 0.0
    %2617 = vmatpush1.msra.mxu0 0.0
    %2618 = vmatprep.subr.mxu0 0.0
    %2619 = vmatpush1.msra.mxu0 0.0
    %2620 = vmatprep.subr.mxu0 0.0
    %2621 = vmatpush1.msra.mxu0 0.0
    %2622 = vmatprep.subr.mxu0 0.0
    %2623 = vmatpush1.msra.mxu0 0.0
    %2624 = vmatprep.subr.mxu0 0.0
    %2625 = vmatpush1.msra.mxu0 0.0
    %2626 = vmatprep.subr.mxu0 0.0
    %2627 = vmatpush1.msra.mxu0 0.0
    %2628 = vmatprep.subr.mxu0 0.0
    %2629 = vmatpush1.msra.mxu0 0.0
    %2630 = vmatprep.subr.mxu0 0.0
    %2631 = vmatpush1.msra.mxu0 0.0
    %2632 = vmatprep.subr.mxu0 0.0
    %2633 = vmatpush1.msra.mxu0 0.0
    %2634 = vmatprep.subr.mxu0 0.0
    %2635 = vmatpush1.msra.mxu0 0.0
    %2636 = vmatprep.subr.mxu0 0.0
    %2637 = vmatpush1.msra.mxu0 0.0
    %2638 = vmatprep.subr.mxu0 0.0
    %2639 = vmatpush1.msra.mxu0 0.0
    %2640 = vmatprep.subr.mxu0 0.0
    %2641 = vmatpush1.msra.mxu0 0.0
    %2642 = vmatprep.subr.mxu0 0.0
    %2643 = vmatpush1.msra.mxu0 0.0
    %2644 = vmatprep.subr.mxu0 0.0
    %2645 = vmatpush1.msra.mxu0 0.0
    %2646 = vmatprep.subr.mxu0 0.0
    %2647 = vmatpush1.msra.mxu0 0.0
    %2648 = vmatprep.subr.mxu0 0.0
    %2649 = vmatpush1.msra.mxu0 0.0
    %2650 = vmatprep.subr.mxu0 0.0
    %2651 = vmatpush1.msra.mxu0 0.0
    %2652 = vmatprep.subr.mxu0 0.0
    %2653 = vmatpush1.msra.mxu0 0.0
    %2654 = vmatprep.subr.mxu0 0.0
    %2655 = vmatpush1.msra.mxu0 0.0
    %2656 = vmatprep.subr.mxu0 0.0
    %2657 = vmatpush1.msra.mxu0 0.0
    %2658 = vmatprep.mubr.f32.mxu0 0.0
    %v2659 = vand.u32 %v2209, 4294901760
    %2660 = vmatmul.mubr.f32.gmra.mrb[0].mxu0 %v2659
    %v2661 = vpop.f32.mrb[0].mxu0
    %v2662 = vadd.f32 %v2569, %v2661
    %v2663 = vpop.f32.mrb[0].mxu0
    %2664 = vmatprep.mubr.f32.mxu0 0.0
    %v2665 = vand.u32 %v2212, 4294901760
    %2666 = vmatmul.mubr.f32.gmra.mrb[0].mxu0 %v2665
    %v2667 = vpop.f32.mrb[0].mxu0
    %v2668 = vadd.f32 %v2577, %v2667
    %v2669 = vpop.f32.mrb[0].mxu0
    %2670 = vmatprep.mubr.f32.mxu0 0.0
    %v2671 = vand.u32 %v2215, 4294901760
    %2672 = vmatmul.mubr.f32.gmra.mrb[0].mxu0 %v2671
    %v2673 = vpop.f32.mrb[0].mxu0
    %v2674 = vadd.f32 %v2585, %v2673
    %v2675 = vpop.f32.mrb[0].mxu0
    %2676 = vdwg.mxu0
    %2677 = vmatprep.subr.mxu0 0.0
    %v2678 = vand.u32 %v655, 4294901760
    %2679 = vmatpush1.msra.mxu0 %v2678
    %2680 = vmatprep.subr.mxu0 0.0
    %v2681 = vand.u32 %v758, 4294901760
    %2682 = vmatpush1.msra.mxu0 %v2681
    %2683 = vmatprep.subr.mxu0 0.0
    %2684 = vmatpush1.msra.mxu0 0.0
    %2685 = vmatprep.subr.mxu0 0.0
    %2686 = vmatpush1.msra.mxu0 0.0
    %2687 = vmatprep.subr.mxu0 0.0
    %2688 = vmatpush1.msra.mxu0 0.0
    %2689 = vmatprep.subr.mxu0 0.0
    %2690 = vmatpush1.msra.mxu0 0.0
    %2691 = vmatprep.subr.mxu0 0.0
    %2692 = vmatpush1.msra.mxu0 0.0
    %2693 = vmatprep.subr.mxu0 0.0
    %2694 = vmatpush1.msra.mxu0 0.0
    %2695 = vmatprep.subr.mxu0 0.0
    %2696 = vmatpush1.msra.mxu0 0.0
    %2697 = vmatprep.subr.mxu0 0.0
    %2698 = vmatpush1.msra.mxu0 0.0
    %2699 = vmatprep.subr.mxu0 0.0
    %2700 = vmatpush1.msra.mxu0 0.0
    %2701 = vmatprep.subr.mxu0 0.0
    %2702 = vmatpush1.msra.mxu0 0.0
    %2703 = vmatprep.subr.mxu0 0.0
    %2704 = vmatpush1.msra.mxu0 0.0
    %2705 = vmatprep.subr.mxu0 0.0
    %2706 = vmatpush1.msra.mxu0 0.0
    %2707 = vmatprep.subr.mxu0 0.0
    %2708 = vmatpush1.msra.mxu0 0.0
    %2709 = vmatprep.subr.mxu0 0.0
    %2710 = vmatpush1.msra.mxu0 0.0
    %2711 = vmatprep.subr.mxu0 0.0
    %2712 = vmatpush1.msra.mxu0 0.0
    %2713 = vmatprep.subr.mxu0 0.0
    %2714 = vmatpush1.msra.mxu0 0.0
    %2715 = vmatprep.subr.mxu0 0.0
    %2716 = vmatpush1.msra.mxu0 0.0
    %2717 = vmatprep.subr.mxu0 0.0
    %2718 = vmatpush1.msra.mxu0 0.0
    %2719 = vmatprep.subr.mxu0 0.0
    %2720 = vmatpush1.msra.mxu0 0.0
    %2721 = vmatprep.subr.mxu0 0.0
    %2722 = vmatpush1.msra.mxu0 0.0
    %2723 = vmatprep.subr.mxu0 0.0
    %2724 = vmatpush1.msra.mxu0 0.0
    %2725 = vmatprep.subr.mxu0 0.0
    %2726 = vmatpush1.msra.mxu0 0.0
    %2727 = vmatprep.subr.mxu0 0.0
    %2728 = vmatpush1.msra.mxu0 0.0
    %2729 = vmatprep.subr.mxu0 0.0
    %2730 = vmatpush1.msra.mxu0 0.0
    %2731 = vmatprep.subr.mxu0 0.0
    %2732 = vmatpush1.msra.mxu0 0.0
    %2733 = vmatprep.subr.mxu0 0.0
    %2734 = vmatpush1.msra.mxu0 0.0
    %2735 = vmatprep.subr.mxu0 0.0
    %2736 = vmatpush1.msra.mxu0 0.0
    %2737 = vmatprep.subr.mxu0 0.0
    %2738 = vmatpush1.msra.mxu0 0.0
    %2739 = vmatprep.subr.mxu0 0.0
    %2740 = vmatpush1.msra.mxu0 0.0
    %2741 = vmatprep.subr.mxu0 0.0
    %2742 = vmatpush1.msra.mxu0 0.0
    %2743 = vmatprep.mubr.f32.mxu0 0.0
    %v2744 = vand.u32 %v2209, 4294901760
    %2745 = vmatmul.mubr.f32.gmra.mrb[0].mxu0 %v2744
    %v2746 = vpop.f32.mrb[0].mxu0
    %v2747 = vadd.f32 %v2662, %v2746
    %v2748 = vpop.f32.mrb[0].mxu0
    %2749 = vmatprep.mubr.f32.mxu0 0.0
    %v2750 = vand.u32 %v2212, 4294901760
    %2751 = vmatmul.mubr.f32.gmra.mrb[0].mxu0 %v2750
    %v2752 = vpop.f32.mrb[0].mxu0
    %v2753 = vadd.f32 %v2668, %v2752
    %v2754 = vpop.f32.mrb[0].mxu0
    %2755 = vmatprep.mubr.f32.mxu0 0.0
    %v2756 = vand.u32 %v2215, 4294901760
    %2757 = vmatmul.mubr.f32.gmra.mrb[0].mxu0 %v2756
    %v2758 = vpop.f32.mrb[0].mxu0
    %v2759 = vadd.f32 %v2674, %v2758
    %v2760 = vpop.f32.mrb[0].mxu0
    %2761 = vdwg.mxu0
    %v2763 = vsel %vm2207, %v36, 0
    %v2766 = vsel %vm2207, %v37, 0
    %v2769 = vsel %vm2207, %v38, 0
    %2771 = vmatprep.subr.mxu0 0.0
    %v2772 = vand.u32 %v861, 4294901760
    %2773 = vmatpush1.msra.mxu0 %v2772
    %2774 = vmatprep.subr.mxu0 0.0
    %v2775 = vand.u32 %v964, 4294901760
    %2776 = vmatpush1.msra.mxu0 %v2775
    %2777 = vmatprep.subr.mxu0 0.0
    %2778 = vmatpush1.msra.mxu0 0.0
    %2779 = vmatprep.subr.mxu0 0.0
    %2780 = vmatpush1.msra.mxu0 0.0
    %2781 = vmatprep.subr.mxu0 0.0
    %2782 = vmatpush1.msra.mxu0 0.0
    %2783 = vmatprep.subr.mxu0 0.0
    %2784 = vmatpush1.msra.mxu0 0.0
    %2785 = vmatprep.subr.mxu0 0.0
    %2786 = vmatpush1.msra.mxu0 0.0
    %2787 = vmatprep.subr.mxu0 0.0
    %2788 = vmatpush1.msra.mxu0 0.0
    %2789 = vmatprep.subr.mxu0 0.0
    %2790 = vmatpush1.msra.mxu0 0.0
    %2791 = vmatprep.subr.mxu0 0.0
    %2792 = vmatpush1.msra.mxu0 0.0
    %2793 = vmatprep.subr.mxu0 0.0
    %2794 = vmatpush1.msra.mxu0 0.0
    %2795 = vmatprep.subr.mxu0 0.0
    %2796 = vmatpush1.msra.mxu0 0.0
    %2797 = vmatprep.subr.mxu0 0.0
    %2798 = vmatpush1.msra.mxu0 0.0
    %2799 = vmatprep.subr.mxu0 0.0
    %2800 = vmatpush1.msra.mxu0 0.0
    %2801 = vmatprep.subr.mxu0 0.0
    %2802 = vmatpush1.msra.mxu0 0.0
    %2803 = vmatprep.subr.mxu0 0.0
    %2804 = vmatpush1.msra.mxu0 0.0
    %2805 = vmatprep.subr.mxu0 0.0
    %2806 = vmatpush1.msra.mxu0 0.0
    %2807 = vmatprep.subr.mxu0 0.0
    %2808 = vmatpush1.msra.mxu0 0.0
    %2809 = vmatprep.subr.mxu0 0.0
    %2810 = vmatpush1.msra.mxu0 0.0
    %2811 = vmatprep.subr.mxu0 0.0
    %2812 = vmatpush1.msra.mxu0 0.0
    %2813 = vmatprep.subr.mxu0 0.0
    %2814 = vmatpush1.msra.mxu0 0.0
    %2815 = vmatprep.subr.mxu0 0.0
    %2816 = vmatpush1.msra.mxu0 0.0
    %2817 = vmatprep.subr.mxu0 0.0
    %2818 = vmatpush1.msra.mxu0 0.0
    %2819 = vmatprep.subr.mxu0 0.0
    %2820 = vmatpush1.msra.mxu0 0.0
    %2821 = vmatprep.subr.mxu0 0.0
    %2822 = vmatpush1.msra.mxu0 0.0
    %2823 = vmatprep.subr.mxu0 0.0
    %2824 = vmatpush1.msra.mxu0 0.0
    %2825 = vmatprep.subr.mxu0 0.0
    %2826 = vmatpush1.msra.mxu0 0.0
    %2827 = vmatprep.subr.mxu0 0.0
    %2828 = vmatpush1.msra.mxu0 0.0
    %2829 = vmatprep.subr.mxu0 0.0
    %2830 = vmatpush1.msra.mxu0 0.0
    %2831 = vmatprep.subr.mxu0 0.0
    %2832 = vmatpush1.msra.mxu0 0.0
    %2833 = vmatprep.subr.mxu0 0.0
    %2834 = vmatpush1.msra.mxu0 0.0
    %2835 = vmatprep.subr.mxu0 0.0
    %2836 = vmatpush1.msra.mxu0 0.0
    %2837 = vmatprep.mubr.f32.mxu0 0.0
    %v2838 = vand.u32 %v2763, 4294901760
    %v2839 = vsub.f32 %v2763, %v2838
    %v2840 = vand.u32 %v2839, 4294901760
    %v2841 = vsub.f32 %v2839, %v2840
    %v2842 = vand.u32 %v2841, 4294901760
    %2843 = vmatmul.mubr.f32.gmra.mrb[0].mxu0 %v2842
    %v2844 = vpop.f32.mrb[0].mxu0
    %v2845 = vadd.f32 0.0, %v2844
    %v2846 = vpop.f32.mrb[0].mxu0
    %2847 = vmatprep.mubr.f32.mxu0 0.0
    %v2848 = vand.u32 %v2766, 4294901760
    %v2849 = vsub.f32 %v2766, %v2848
    %v2850 = vand.u32 %v2849, 4294901760
    %v2851 = vsub.f32 %v2849, %v2850
    %v2852 = vand.u32 %v2851, 4294901760
    %2853 = vmatmul.mubr.f32.gmra.mrb[0].mxu0 %v2852
    %v2854 = vpop.f32.mrb[0].mxu0
    %v2855 = vadd.f32 0.0, %v2854
    %v2856 = vpop.f32.mrb[0].mxu0
    %2857 = vmatprep.mubr.f32.mxu0 0.0
    %v2858 = vand.u32 %v2769, 4294901760
    %v2859 = vsub.f32 %v2769, %v2858
    %v2860 = vand.u32 %v2859, 4294901760
    %v2861 = vsub.f32 %v2859, %v2860
    %v2862 = vand.u32 %v2861, 4294901760
    %2863 = vmatmul.mubr.f32.gmra.mrb[0].mxu0 %v2862
    %v2864 = vpop.f32.mrb[0].mxu0
    %v2865 = vadd.f32 0.0, %v2864
    %v2866 = vpop.f32.mrb[0].mxu0
    %2867 = vdwg.mxu0
    %2868 = vmatprep.subr.mxu0 0.0
    %v2869 = vand.u32 %v861, 4294901760
    %v2870 = vsub.f32 %v861, %v2869
    %v2871 = vand.u32 %v2870, 4294901760
    %v2872 = vsub.f32 %v2870, %v2871
    %v2873 = vand.u32 %v2872, 4294901760
    %2874 = vmatpush1.msra.mxu0 %v2873
    %2875 = vmatprep.subr.mxu0 0.0
    %v2876 = vand.u32 %v964, 4294901760
    %v2877 = vsub.f32 %v964, %v2876
    %v2878 = vand.u32 %v2877, 4294901760
    %v2879 = vsub.f32 %v2877, %v2878
    %v2880 = vand.u32 %v2879, 4294901760
    %2881 = vmatpush1.msra.mxu0 %v2880
    %2882 = vmatprep.subr.mxu0 0.0
    %2883 = vmatpush1.msra.mxu0 0.0
    %2884 = vmatprep.subr.mxu0 0.0
    %2885 = vmatpush1.msra.mxu0 0.0
    %2886 = vmatprep.subr.mxu0 0.0
    %2887 = vmatpush1.msra.mxu0 0.0
    %2888 = vmatprep.subr.mxu0 0.0
    %2889 = vmatpush1.msra.mxu0 0.0
    %2890 = vmatprep.subr.mxu0 0.0
    %2891 = vmatpush1.msra.mxu0 0.0
    %2892 = vmatprep.subr.mxu0 0.0
    %2893 = vmatpush1.msra.mxu0 0.0
    %2894 = vmatprep.subr.mxu0 0.0
    %2895 = vmatpush1.msra.mxu0 0.0
    %2896 = vmatprep.subr.mxu0 0.0
    %2897 = vmatpush1.msra.mxu0 0.0
    %2898 = vmatprep.subr.mxu0 0.0
    %2899 = vmatpush1.msra.mxu0 0.0
    %2900 = vmatprep.subr.mxu0 0.0
    %2901 = vmatpush1.msra.mxu0 0.0
    %2902 = vmatprep.subr.mxu0 0.0
    %2903 = vmatpush1.msra.mxu0 0.0
    %2904 = vmatprep.subr.mxu0 0.0
    %2905 = vmatpush1.msra.mxu0 0.0
    %2906 = vmatprep.subr.mxu0 0.0
    %2907 = vmatpush1.msra.mxu0 0.0
    %2908 = vmatprep.subr.mxu0 0.0
    %2909 = vmatpush1.msra.mxu0 0.0
    %2910 = vmatprep.subr.mxu0 0.0
    %2911 = vmatpush1.msra.mxu0 0.0
    %2912 = vmatprep.subr.mxu0 0.0
    %2913 = vmatpush1.msra.mxu0 0.0
    %2914 = vmatprep.subr.mxu0 0.0
    %2915 = vmatpush1.msra.mxu0 0.0
    %2916 = vmatprep.subr.mxu0 0.0
    %2917 = vmatpush1.msra.mxu0 0.0
    %2918 = vmatprep.subr.mxu0 0.0
    %2919 = vmatpush1.msra.mxu0 0.0
    %2920 = vmatprep.subr.mxu0 0.0
    %2921 = vmatpush1.msra.mxu0 0.0
    %2922 = vmatprep.subr.mxu0 0.0
    %2923 = vmatpush1.msra.mxu0 0.0
    %2924 = vmatprep.subr.mxu0 0.0
    %2925 = vmatpush1.msra.mxu0 0.0
    %2926 = vmatprep.subr.mxu0 0.0
    %2927 = vmatpush1.msra.mxu0 0.0
    %2928 = vmatprep.subr.mxu0 0.0
    %2929 = vmatpush1.msra.mxu0 0.0
    %2930 = vmatprep.subr.mxu0 0.0
    %2931 = vmatpush1.msra.mxu0 0.0
    %2932 = vmatprep.subr.mxu0 0.0
    %2933 = vmatpush1.msra.mxu0 0.0
    %2934 = vmatprep.subr.mxu0 0.0
    %2935 = vmatpush1.msra.mxu0 0.0
    %2936 = vmatprep.subr.mxu0 0.0
    %2937 = vmatpush1.msra.mxu0 0.0
    %2938 = vmatprep.subr.mxu0 0.0
    %2939 = vmatpush1.msra.mxu0 0.0
    %2940 = vmatprep.subr.mxu0 0.0
    %2941 = vmatpush1.msra.mxu0 0.0
    %2942 = vmatprep.mubr.f32.mxu0 0.0
    %v2943 = vand.u32 %v2763, 4294901760
    %2944 = vmatmul.mubr.f32.gmra.mrb[0].mxu0 %v2943
    %v2945 = vpop.f32.mrb[0].mxu0
    %v2946 = vadd.f32 %v2845, %v2945
    %v2947 = vpop.f32.mrb[0].mxu0
    %2948 = vmatprep.mubr.f32.mxu0 0.0
    %v2949 = vand.u32 %v2766, 4294901760
    %2950 = vmatmul.mubr.f32.gmra.mrb[0].mxu0 %v2949
    %v2951 = vpop.f32.mrb[0].mxu0
    %v2952 = vadd.f32 %v2855, %v2951
    %v2953 = vpop.f32.mrb[0].mxu0
    %2954 = vmatprep.mubr.f32.mxu0 0.0
    %v2955 = vand.u32 %v2769, 4294901760
    %2956 = vmatmul.mubr.f32.gmra.mrb[0].mxu0 %v2955
    %v2957 = vpop.f32.mrb[0].mxu0
    %v2958 = vadd.f32 %v2865, %v2957
    %v2959 = vpop.f32.mrb[0].mxu0
    %2960 = vdwg.mxu0
    %2961 = vmatprep.subr.mxu0 0.0
    %v2962 = vand.u32 %v861, 4294901760
    %v2963 = vsub.f32 %v861, %v2962
    %2964 = vmatpush1.msra.mxu0 %v2963
    %2965 = vmatprep.subr.mxu0 0.0
    %v2966 = vand.u32 %v964, 4294901760
    %v2967 = vsub.f32 %v964, %v2966
    %2968 = vmatpush1.msra.mxu0 %v2967
    %2969 = vmatprep.subr.mxu0 0.0
    %2970 = vmatpush1.msra.mxu0 0.0
    %2971 = vmatprep.subr.mxu0 0.0
    %2972 = vmatpush1.msra.mxu0 0.0
    %2973 = vmatprep.subr.mxu0 0.0
    %2974 = vmatpush1.msra.mxu0 0.0
    %2975 = vmatprep.subr.mxu0 0.0
    %2976 = vmatpush1.msra.mxu0 0.0
    %2977 = vmatprep.subr.mxu0 0.0
    %2978 = vmatpush1.msra.mxu0 0.0
    %2979 = vmatprep.subr.mxu0 0.0
    %2980 = vmatpush1.msra.mxu0 0.0
    %2981 = vmatprep.subr.mxu0 0.0
    %2982 = vmatpush1.msra.mxu0 0.0
    %2983 = vmatprep.subr.mxu0 0.0
    %2984 = vmatpush1.msra.mxu0 0.0
    %2985 = vmatprep.subr.mxu0 0.0
    %2986 = vmatpush1.msra.mxu0 0.0
    %2987 = vmatprep.subr.mxu0 0.0
    %2988 = vmatpush1.msra.mxu0 0.0
    %2989 = vmatprep.subr.mxu0 0.0
    %2990 = vmatpush1.msra.mxu0 0.0
    %2991 = vmatprep.subr.mxu0 0.0
    %2992 = vmatpush1.msra.mxu0 0.0
    %2993 = vmatprep.subr.mxu0 0.0
    %2994 = vmatpush1.msra.mxu0 0.0
    %2995 = vmatprep.subr.mxu0 0.0
    %2996 = vmatpush1.msra.mxu0 0.0
    %2997 = vmatprep.subr.mxu0 0.0
    %2998 = vmatpush1.msra.mxu0 0.0
    %2999 = vmatprep.subr.mxu0 0.0
    %3000 = vmatpush1.msra.mxu0 0.0
    %3001 = vmatprep.subr.mxu0 0.0
    %3002 = vmatpush1.msra.mxu0 0.0
    %3003 = vmatprep.subr.mxu0 0.0
    %3004 = vmatpush1.msra.mxu0 0.0
    %3005 = vmatprep.subr.mxu0 0.0
    %3006 = vmatpush1.msra.mxu0 0.0
    %3007 = vmatprep.subr.mxu0 0.0
    %3008 = vmatpush1.msra.mxu0 0.0
    %3009 = vmatprep.subr.mxu0 0.0
    %3010 = vmatpush1.msra.mxu0 0.0
    %3011 = vmatprep.subr.mxu0 0.0
    %3012 = vmatpush1.msra.mxu0 0.0
    %3013 = vmatprep.subr.mxu0 0.0
    %3014 = vmatpush1.msra.mxu0 0.0
    %3015 = vmatprep.subr.mxu0 0.0
    %3016 = vmatpush1.msra.mxu0 0.0
    %3017 = vmatprep.subr.mxu0 0.0
    %3018 = vmatpush1.msra.mxu0 0.0
    %3019 = vmatprep.subr.mxu0 0.0
    %3020 = vmatpush1.msra.mxu0 0.0
    %3021 = vmatprep.subr.mxu0 0.0
    %3022 = vmatpush1.msra.mxu0 0.0
    %3023 = vmatprep.subr.mxu0 0.0
    %3024 = vmatpush1.msra.mxu0 0.0
    %3025 = vmatprep.subr.mxu0 0.0
    %3026 = vmatpush1.msra.mxu0 0.0
    %3027 = vmatprep.subr.mxu0 0.0
    %3028 = vmatpush1.msra.mxu0 0.0
    %3029 = vmatprep.mubr.f32.mxu0 0.0
    %v3030 = vand.u32 %v2763, 4294901760
    %v3031 = vsub.f32 %v2763, %v3030
    %3032 = vmatmul.mubr.f32.gmra.mrb[0].mxu0 %v3031
    %v3033 = vpop.f32.mrb[0].mxu0
    %v3034 = vadd.f32 %v2946, %v3033
    %v3035 = vpop.f32.mrb[0].mxu0
    %3036 = vmatprep.mubr.f32.mxu0 0.0
    %v3037 = vand.u32 %v2766, 4294901760
    %v3038 = vsub.f32 %v2766, %v3037
    %3039 = vmatmul.mubr.f32.gmra.mrb[0].mxu0 %v3038
    %v3040 = vpop.f32.mrb[0].mxu0
    %v3041 = vadd.f32 %v2952, %v3040
    %v3042 = vpop.f32.mrb[0].mxu0
    %3043 = vmatprep.mubr.f32.mxu0 0.0
    %v3044 = vand.u32 %v2769, 4294901760
    %v3045 = vsub.f32 %v2769, %v3044
    %3046 = vmatmul.mubr.f32.gmra.mrb[0].mxu0 %v3045
    %v3047 = vpop.f32.mrb[0].mxu0
    %v3048 = vadd.f32 %v2958, %v3047
    %v3049 = vpop.f32.mrb[0].mxu0
    %3050 = vdwg.mxu0
    %3051 = vmatprep.subr.mxu0 0.0
    %v3052 = vand.u32 %v861, 4294901760
    %3053 = vmatpush1.msra.mxu0 %v3052
    %3054 = vmatprep.subr.mxu0 0.0
    %v3055 = vand.u32 %v964, 4294901760
    %3056 = vmatpush1.msra.mxu0 %v3055
    %3057 = vmatprep.subr.mxu0 0.0
    %3058 = vmatpush1.msra.mxu0 0.0
    %3059 = vmatprep.subr.mxu0 0.0
    %3060 = vmatpush1.msra.mxu0 0.0
    %3061 = vmatprep.subr.mxu0 0.0
    %3062 = vmatpush1.msra.mxu0 0.0
    %3063 = vmatprep.subr.mxu0 0.0
    %3064 = vmatpush1.msra.mxu0 0.0
    %3065 = vmatprep.subr.mxu0 0.0
    %3066 = vmatpush1.msra.mxu0 0.0
    %3067 = vmatprep.subr.mxu0 0.0
    %3068 = vmatpush1.msra.mxu0 0.0
    %3069 = vmatprep.subr.mxu0 0.0
    %3070 = vmatpush1.msra.mxu0 0.0
    %3071 = vmatprep.subr.mxu0 0.0
    %3072 = vmatpush1.msra.mxu0 0.0
    %3073 = vmatprep.subr.mxu0 0.0
    %3074 = vmatpush1.msra.mxu0 0.0
    %3075 = vmatprep.subr.mxu0 0.0
    %3076 = vmatpush1.msra.mxu0 0.0
    %3077 = vmatprep.subr.mxu0 0.0
    %3078 = vmatpush1.msra.mxu0 0.0
    %3079 = vmatprep.subr.mxu0 0.0
    %3080 = vmatpush1.msra.mxu0 0.0
    %3081 = vmatprep.subr.mxu0 0.0
    %3082 = vmatpush1.msra.mxu0 0.0
    %3083 = vmatprep.subr.mxu0 0.0
    %3084 = vmatpush1.msra.mxu0 0.0
    %3085 = vmatprep.subr.mxu0 0.0
    %3086 = vmatpush1.msra.mxu0 0.0
    %3087 = vmatprep.subr.mxu0 0.0
    %3088 = vmatpush1.msra.mxu0 0.0
    %3089 = vmatprep.subr.mxu0 0.0
    %3090 = vmatpush1.msra.mxu0 0.0
    %3091 = vmatprep.subr.mxu0 0.0
    %3092 = vmatpush1.msra.mxu0 0.0
    %3093 = vmatprep.subr.mxu0 0.0
    %3094 = vmatpush1.msra.mxu0 0.0
    %3095 = vmatprep.subr.mxu0 0.0
    %3096 = vmatpush1.msra.mxu0 0.0
    %3097 = vmatprep.subr.mxu0 0.0
    %3098 = vmatpush1.msra.mxu0 0.0
    %3099 = vmatprep.subr.mxu0 0.0
    %3100 = vmatpush1.msra.mxu0 0.0
    %3101 = vmatprep.subr.mxu0 0.0
    %3102 = vmatpush1.msra.mxu0 0.0
    %3103 = vmatprep.subr.mxu0 0.0
    %3104 = vmatpush1.msra.mxu0 0.0
    %3105 = vmatprep.subr.mxu0 0.0
    %3106 = vmatpush1.msra.mxu0 0.0
    %3107 = vmatprep.subr.mxu0 0.0
    %3108 = vmatpush1.msra.mxu0 0.0
    %3109 = vmatprep.subr.mxu0 0.0
    %3110 = vmatpush1.msra.mxu0 0.0
    %3111 = vmatprep.subr.mxu0 0.0
    %3112 = vmatpush1.msra.mxu0 0.0
    %3113 = vmatprep.subr.mxu0 0.0
    %3114 = vmatpush1.msra.mxu0 0.0
    %3115 = vmatprep.subr.mxu0 0.0
    %3116 = vmatpush1.msra.mxu0 0.0
    %3117 = vmatprep.mubr.f32.mxu0 0.0
    %v3118 = vand.u32 %v2763, 4294901760
    %v3119 = vsub.f32 %v2763, %v3118
    %v3120 = vand.u32 %v3119, 4294901760
    %3121 = vmatmul.mubr.f32.gmra.mrb[0].mxu0 %v3120
    %v3122 = vpop.f32.mrb[0].mxu0
    %v3123 = vadd.f32 %v3034, %v3122
    %v3124 = vpop.f32.mrb[0].mxu0
    %3125 = vmatprep.mubr.f32.mxu0 0.0
    %v3126 = vand.u32 %v2766, 4294901760
    %v3127 = vsub.f32 %v2766, %v3126
    %v3128 = vand.u32 %v3127, 4294901760
    %3129 = vmatmul.mubr.f32.gmra.mrb[0].mxu0 %v3128
    %v3130 = vpop.f32.mrb[0].mxu0
    %v3131 = vadd.f32 %v3041, %v3130
    %v3132 = vpop.f32.mrb[0].mxu0
    %3133 = vmatprep.mubr.f32.mxu0 0.0
    %v3134 = vand.u32 %v2769, 4294901760
    %v3135 = vsub.f32 %v2769, %v3134
    %v3136 = vand.u32 %v3135, 4294901760
    %3137 = vmatmul.mubr.f32.gmra.mrb[0].mxu0 %v3136
    %v3138 = vpop.f32.mrb[0].mxu0
    %v3139 = vadd.f32 %v3048, %v3138
    %v3140 = vpop.f32.mrb[0].mxu0
    %3141 = vdwg.mxu0
    %3142 = vmatprep.subr.mxu0 0.0
    %v3143 = vand.u32 %v861, 4294901760
    %v3144 = vsub.f32 %v861, %v3143
    %v3145 = vand.u32 %v3144, 4294901760
    %3146 = vmatpush1.msra.mxu0 %v3145
    %3147 = vmatprep.subr.mxu0 0.0
    %v3148 = vand.u32 %v964, 4294901760
    %v3149 = vsub.f32 %v964, %v3148
    %v3150 = vand.u32 %v3149, 4294901760
    %3151 = vmatpush1.msra.mxu0 %v3150
    %3152 = vmatprep.subr.mxu0 0.0
    %3153 = vmatpush1.msra.mxu0 0.0
    %3154 = vmatprep.subr.mxu0 0.0
    %3155 = vmatpush1.msra.mxu0 0.0
    %3156 = vmatprep.subr.mxu0 0.0
    %3157 = vmatpush1.msra.mxu0 0.0
    %3158 = vmatprep.subr.mxu0 0.0
    %3159 = vmatpush1.msra.mxu0 0.0
    %3160 = vmatprep.subr.mxu0 0.0
    %3161 = vmatpush1.msra.mxu0 0.0
    %3162 = vmatprep.subr.mxu0 0.0
    %3163 = vmatpush1.msra.mxu0 0.0
    %3164 = vmatprep.subr.mxu0 0.0
    %3165 = vmatpush1.msra.mxu0 0.0
    %3166 = vmatprep.subr.mxu0 0.0
    %3167 = vmatpush1.msra.mxu0 0.0
    %3168 = vmatprep.subr.mxu0 0.0
    %3169 = vmatpush1.msra.mxu0 0.0
    %3170 = vmatprep.subr.mxu0 0.0
    %3171 = vmatpush1.msra.mxu0 0.0
    %3172 = vmatprep.subr.mxu0 0.0
    %3173 = vmatpush1.msra.mxu0 0.0
    %3174 = vmatprep.subr.mxu0 0.0
    %3175 = vmatpush1.msra.mxu0 0.0
    %3176 = vmatprep.subr.mxu0 0.0
    %3177 = vmatpush1.msra.mxu0 0.0
    %3178 = vmatprep.subr.mxu0 0.0
    %3179 = vmatpush1.msra.mxu0 0.0
    %3180 = vmatprep.subr.mxu0 0.0
    %3181 = vmatpush1.msra.mxu0 0.0
    %3182 = vmatprep.subr.mxu0 0.0
    %3183 = vmatpush1.msra.mxu0 0.0
    %3184 = vmatprep.subr.mxu0 0.0
    %3185 = vmatpush1.msra.mxu0 0.0
    %3186 = vmatprep.subr.mxu0 0.0
    %3187 = vmatpush1.msra.mxu0 0.0
    %3188 = vmatprep.subr.mxu0 0.0
    %3189 = vmatpush1.msra.mxu0 0.0
    %3190 = vmatprep.subr.mxu0 0.0
    %3191 = vmatpush1.msra.mxu0 0.0
    %3192 = vmatprep.subr.mxu0 0.0
    %3193 = vmatpush1.msra.mxu0 0.0
    %3194 = vmatprep.subr.mxu0 0.0
    %3195 = vmatpush1.msra.mxu0 0.0
    %3196 = vmatprep.subr.mxu0 0.0
    %3197 = vmatpush1.msra.mxu0 0.0
    %3198 = vmatprep.subr.mxu0 0.0
    %3199 = vmatpush1.msra.mxu0 0.0
    %3200 = vmatprep.subr.mxu0 0.0
    %3201 = vmatpush1.msra.mxu0 0.0
    %3202 = vmatprep.subr.mxu0 0.0
    %3203 = vmatpush1.msra.mxu0 0.0
    %3204 = vmatprep.subr.mxu0 0.0
    %3205 = vmatpush1.msra.mxu0 0.0
    %3206 = vmatprep.subr.mxu0 0.0
    %3207 = vmatpush1.msra.mxu0 0.0
    %3208 = vmatprep.subr.mxu0 0.0
    %3209 = vmatpush1.msra.mxu0 0.0
    %3210 = vmatprep.subr.mxu0 0.0
    %3211 = vmatpush1.msra.mxu0 0.0
    %3212 = vmatprep.mubr.f32.mxu0 0.0
    %v3213 = vand.u32 %v2763, 4294901760
    %3214 = vmatmul.mubr.f32.gmra.mrb[0].mxu0 %v3213
    %v3215 = vpop.f32.mrb[0].mxu0
    %v3216 = vadd.f32 %v3123, %v3215
    %v3217 = vpop.f32.mrb[0].mxu0
    %3218 = vmatprep.mubr.f32.mxu0 0.0
    %v3219 = vand.u32 %v2766, 4294901760
    %3220 = vmatmul.mubr.f32.gmra.mrb[0].mxu0 %v3219
    %v3221 = vpop.f32.mrb[0].mxu0
    %v3222 = vadd.f32 %v3131, %v3221
    %v3223 = vpop.f32.mrb[0].mxu0
    %3224 = vmatprep.mubr.f32.mxu0 0.0
    %v3225 = vand.u32 %v2769, 4294901760
    %3226 = vmatmul.mubr.f32.gmra.mrb[0].mxu0 %v3225
    %v3227 = vpop.f32.mrb[0].mxu0
    %v3228 = vadd.f32 %v3139, %v3227
    %v3229 = vpop.f32.mrb[0].mxu0
    %3230 = vdwg.mxu0
    %3231 = vmatprep.subr.mxu0 0.0
    %v3232 = vand.u32 %v861, 4294901760
    %3233 = vmatpush1.msra.mxu0 %v3232
    %3234 = vmatprep.subr.mxu0 0.0
    %v3235 = vand.u32 %v964, 4294901760
    %3236 = vmatpush1.msra.mxu0 %v3235
    %3237 = vmatprep.subr.mxu0 0.0
    %3238 = vmatpush1.msra.mxu0 0.0
    %3239 = vmatprep.subr.mxu0 0.0
    %3240 = vmatpush1.msra.mxu0 0.0
    %3241 = vmatprep.subr.mxu0 0.0
    %3242 = vmatpush1.msra.mxu0 0.0
    %3243 = vmatprep.subr.mxu0 0.0
    %3244 = vmatpush1.msra.mxu0 0.0
    %3245 = vmatprep.subr.mxu0 0.0
    %3246 = vmatpush1.msra.mxu0 0.0
    %3247 = vmatprep.subr.mxu0 0.0
    %3248 = vmatpush1.msra.mxu0 0.0
    %3249 = vmatprep.subr.mxu0 0.0
    %3250 = vmatpush1.msra.mxu0 0.0
    %3251 = vmatprep.subr.mxu0 0.0
    %3252 = vmatpush1.msra.mxu0 0.0
    %3253 = vmatprep.subr.mxu0 0.0
    %3254 = vmatpush1.msra.mxu0 0.0
    %3255 = vmatprep.subr.mxu0 0.0
    %3256 = vmatpush1.msra.mxu0 0.0
    %3257 = vmatprep.subr.mxu0 0.0
    %3258 = vmatpush1.msra.mxu0 0.0
    %3259 = vmatprep.subr.mxu0 0.0
    %3260 = vmatpush1.msra.mxu0 0.0
    %3261 = vmatprep.subr.mxu0 0.0
    %3262 = vmatpush1.msra.mxu0 0.0
    %3263 = vmatprep.subr.mxu0 0.0
    %3264 = vmatpush1.msra.mxu0 0.0
    %3265 = vmatprep.subr.mxu0 0.0
    %3266 = vmatpush1.msra.mxu0 0.0
    %3267 = vmatprep.subr.mxu0 0.0
    %3268 = vmatpush1.msra.mxu0 0.0
    %3269 = vmatprep.subr.mxu0 0.0
    %3270 = vmatpush1.msra.mxu0 0.0
    %3271 = vmatprep.subr.mxu0 0.0
    %3272 = vmatpush1.msra.mxu0 0.0
    %3273 = vmatprep.subr.mxu0 0.0
    %3274 = vmatpush1.msra.mxu0 0.0
    %3275 = vmatprep.subr.mxu0 0.0
    %3276 = vmatpush1.msra.mxu0 0.0
    %3277 = vmatprep.subr.mxu0 0.0
    %3278 = vmatpush1.msra.mxu0 0.0
    %3279 = vmatprep.subr.mxu0 0.0
    %3280 = vmatpush1.msra.mxu0 0.0
    %3281 = vmatprep.subr.mxu0 0.0
    %3282 = vmatpush1.msra.mxu0 0.0
    %3283 = vmatprep.subr.mxu0 0.0
    %3284 = vmatpush1.msra.mxu0 0.0
    %3285 = vmatprep.subr.mxu0 0.0
    %3286 = vmatpush1.msra.mxu0 0.0
    %3287 = vmatprep.subr.mxu0 0.0
    %3288 = vmatpush1.msra.mxu0 0.0
    %3289 = vmatprep.subr.mxu0 0.0
    %3290 = vmatpush1.msra.mxu0 0.0
    %3291 = vmatprep.subr.mxu0 0.0
    %3292 = vmatpush1.msra.mxu0 0.0
    %3293 = vmatprep.subr.mxu0 0.0
    %3294 = vmatpush1.msra.mxu0 0.0
    %3295 = vmatprep.subr.mxu0 0.0
    %3296 = vmatpush1.msra.mxu0 0.0
    %3297 = vmatprep.mubr.f32.mxu0 0.0
    %v3298 = vand.u32 %v2763, 4294901760
    %3299 = vmatmul.mubr.f32.gmra.mrb[0].mxu0 %v3298
    %v3300 = vpop.f32.mrb[0].mxu0
    %v3301 = vadd.f32 %v3216, %v3300
    %v3302 = vpop.f32.mrb[0].mxu0
    %3303 = vmatprep.mubr.f32.mxu0 0.0
    %v3304 = vand.u32 %v2766, 4294901760
    %3305 = vmatmul.mubr.f32.gmra.mrb[0].mxu0 %v3304
    %v3306 = vpop.f32.mrb[0].mxu0
    %v3307 = vadd.f32 %v3222, %v3306
    %v3308 = vpop.f32.mrb[0].mxu0
    %3309 = vmatprep.mubr.f32.mxu0 0.0
    %v3310 = vand.u32 %v2769, 4294901760
    %3311 = vmatmul.mubr.f32.gmra.mrb[0].mxu0 %v3310
    %v3312 = vpop.f32.mrb[0].mxu0
    %v3313 = vadd.f32 %v3228, %v3312
    %v3314 = vpop.f32.mrb[0].mxu0
    %3315 = vdwg.mxu0
    %3316 = vmatprep.subr.mxu0 0.0
    %v3317 = vand.u32 %v240, 4294901760
    %3318 = vmatpush1.msra.mxu0 %v3317
    %3319 = vmatprep.subr.mxu0 0.0
    %v3320 = vand.u32 %v344, 4294901760
    %3321 = vmatpush1.msra.mxu0 %v3320
    %3322 = vmatprep.subr.mxu0 0.0
    %3323 = vmatpush1.msra.mxu0 0.0
    %3324 = vmatprep.subr.mxu0 0.0
    %3325 = vmatpush1.msra.mxu0 0.0
    %3326 = vmatprep.subr.mxu0 0.0
    %3327 = vmatpush1.msra.mxu0 0.0
    %3328 = vmatprep.subr.mxu0 0.0
    %3329 = vmatpush1.msra.mxu0 0.0
    %3330 = vmatprep.subr.mxu0 0.0
    %3331 = vmatpush1.msra.mxu0 0.0
    %3332 = vmatprep.subr.mxu0 0.0
    %3333 = vmatpush1.msra.mxu0 0.0
    %3334 = vmatprep.subr.mxu0 0.0
    %3335 = vmatpush1.msra.mxu0 0.0
    %3336 = vmatprep.subr.mxu0 0.0
    %3337 = vmatpush1.msra.mxu0 0.0
    %3338 = vmatprep.subr.mxu0 0.0
    %3339 = vmatpush1.msra.mxu0 0.0
    %3340 = vmatprep.subr.mxu0 0.0
    %3341 = vmatpush1.msra.mxu0 0.0
    %3342 = vmatprep.subr.mxu0 0.0
    %3343 = vmatpush1.msra.mxu0 0.0
    %3344 = vmatprep.subr.mxu0 0.0
    %3345 = vmatpush1.msra.mxu0 0.0
    %3346 = vmatprep.subr.mxu0 0.0
    %3347 = vmatpush1.msra.mxu0 0.0
    %3348 = vmatprep.subr.mxu0 0.0
    %3349 = vmatpush1.msra.mxu0 0.0
    %3350 = vmatprep.subr.mxu0 0.0
    %3351 = vmatpush1.msra.mxu0 0.0
    %3352 = vmatprep.subr.mxu0 0.0
    %3353 = vmatpush1.msra.mxu0 0.0
    %3354 = vmatprep.subr.mxu0 0.0
    %3355 = vmatpush1.msra.mxu0 0.0
    %3356 = vmatprep.subr.mxu0 0.0
    %3357 = vmatpush1.msra.mxu0 0.0
    %3358 = vmatprep.subr.mxu0 0.0
    %3359 = vmatpush1.msra.mxu0 0.0
    %3360 = vmatprep.subr.mxu0 0.0
    %3361 = vmatpush1.msra.mxu0 0.0
    %3362 = vmatprep.subr.mxu0 0.0
    %3363 = vmatpush1.msra.mxu0 0.0
    %3364 = vmatprep.subr.mxu0 0.0
    %3365 = vmatpush1.msra.mxu0 0.0
    %3366 = vmatprep.subr.mxu0 0.0
    %3367 = vmatpush1.msra.mxu0 0.0
    %3368 = vmatprep.subr.mxu0 0.0
    %3369 = vmatpush1.msra.mxu0 0.0
    %3370 = vmatprep.subr.mxu0 0.0
    %3371 = vmatpush1.msra.mxu0 0.0
    %3372 = vmatprep.subr.mxu0 0.0
    %3373 = vmatpush1.msra.mxu0 0.0
    %3374 = vmatprep.subr.mxu0 0.0
    %3375 = vmatpush1.msra.mxu0 0.0
    %3376 = vmatprep.subr.mxu0 0.0
    %3377 = vmatpush1.msra.mxu0 0.0
    %3378 = vmatprep.subr.mxu0 0.0
    %3379 = vmatpush1.msra.mxu0 0.0
    %3380 = vmatprep.subr.mxu0 0.0
    %3381 = vmatpush1.msra.mxu0 0.0
    %3382 = vmatprep.mubr.f32.mxu0 0.0
    %v3383 = vand.u32 %v2209, 4294901760
    %v3384 = vsub.f32 %v2209, %v3383
    %v3385 = vand.u32 %v3384, 4294901760
    %v3386 = vsub.f32 %v3384, %v3385
    %v3387 = vand.u32 %v3386, 4294901760
    %3388 = vmatmul.mubr.f32.gmra.mrb[0].mxu0 %v3387
    %v3389 = vpop.f32.mrb[0].mxu0
    %v3390 = vadd.f32 0.0, %v3389
    %v3391 = vpop.f32.mrb[0].mxu0
    %3392 = vmatprep.mubr.f32.mxu0 0.0
    %v3393 = vand.u32 %v2212, 4294901760
    %v3394 = vsub.f32 %v2212, %v3393
    %v3395 = vand.u32 %v3394, 4294901760
    %v3396 = vsub.f32 %v3394, %v3395
    %v3397 = vand.u32 %v3396, 4294901760
    %3398 = vmatmul.mubr.f32.gmra.mrb[0].mxu0 %v3397
    %v3399 = vpop.f32.mrb[0].mxu0
    %v3400 = vadd.f32 0.0, %v3399
    %v3401 = vpop.f32.mrb[0].mxu0
    %3402 = vmatprep.mubr.f32.mxu0 0.0
    %v3403 = vand.u32 %v2215, 4294901760
    %v3404 = vsub.f32 %v2215, %v3403
    %v3405 = vand.u32 %v3404, 4294901760
    %v3406 = vsub.f32 %v3404, %v3405
    %v3407 = vand.u32 %v3406, 4294901760
    %3408 = vmatmul.mubr.f32.gmra.mrb[0].mxu0 %v3407
    %v3409 = vpop.f32.mrb[0].mxu0
    %v3410 = vadd.f32 0.0, %v3409
    %v3411 = vpop.f32.mrb[0].mxu0
    %3412 = vdwg.mxu0
    %3413 = vmatprep.subr.mxu0 0.0
    %v3414 = vand.u32 %v240, 4294901760
    %v3415 = vsub.f32 %v240, %v3414
    %v3416 = vand.u32 %v3415, 4294901760
    %v3417 = vsub.f32 %v3415, %v3416
    %v3418 = vand.u32 %v3417, 4294901760
    %3419 = vmatpush1.msra.mxu0 %v3418
    %3420 = vmatprep.subr.mxu0 0.0
    %v3421 = vand.u32 %v344, 4294901760
    %v3422 = vsub.f32 %v344, %v3421
    %v3423 = vand.u32 %v3422, 4294901760
    %v3424 = vsub.f32 %v3422, %v3423
    %v3425 = vand.u32 %v3424, 4294901760
    %3426 = vmatpush1.msra.mxu0 %v3425
    %3427 = vmatprep.subr.mxu0 0.0
    %3428 = vmatpush1.msra.mxu0 0.0
    %3429 = vmatprep.subr.mxu0 0.0
    %3430 = vmatpush1.msra.mxu0 0.0
    %3431 = vmatprep.subr.mxu0 0.0
    %3432 = vmatpush1.msra.mxu0 0.0
    %3433 = vmatprep.subr.mxu0 0.0
    %3434 = vmatpush1.msra.mxu0 0.0
    %3435 = vmatprep.subr.mxu0 0.0
    %3436 = vmatpush1.msra.mxu0 0.0
    %3437 = vmatprep.subr.mxu0 0.0
    %3438 = vmatpush1.msra.mxu0 0.0
    %3439 = vmatprep.subr.mxu0 0.0
    %3440 = vmatpush1.msra.mxu0 0.0
    %3441 = vmatprep.subr.mxu0 0.0
    %3442 = vmatpush1.msra.mxu0 0.0
    %3443 = vmatprep.subr.mxu0 0.0
    %3444 = vmatpush1.msra.mxu0 0.0
    %3445 = vmatprep.subr.mxu0 0.0
    %3446 = vmatpush1.msra.mxu0 0.0
    %3447 = vmatprep.subr.mxu0 0.0
    %3448 = vmatpush1.msra.mxu0 0.0
    %3449 = vmatprep.subr.mxu0 0.0
    %3450 = vmatpush1.msra.mxu0 0.0
    %3451 = vmatprep.subr.mxu0 0.0
    %3452 = vmatpush1.msra.mxu0 0.0
    %3453 = vmatprep.subr.mxu0 0.0
    %3454 = vmatpush1.msra.mxu0 0.0
    %3455 = vmatprep.subr.mxu0 0.0
    %3456 = vmatpush1.msra.mxu0 0.0
    %3457 = vmatprep.subr.mxu0 0.0
    %3458 = vmatpush1.msra.mxu0 0.0
    %3459 = vmatprep.subr.mxu0 0.0
    %3460 = vmatpush1.msra.mxu0 0.0
    %3461 = vmatprep.subr.mxu0 0.0
    %3462 = vmatpush1.msra.mxu0 0.0
    %3463 = vmatprep.subr.mxu0 0.0
    %3464 = vmatpush1.msra.mxu0 0.0
    %3465 = vmatprep.subr.mxu0 0.0
    %3466 = vmatpush1.msra.mxu0 0.0
    %3467 = vmatprep.subr.mxu0 0.0
    %3468 = vmatpush1.msra.mxu0 0.0
    %3469 = vmatprep.subr.mxu0 0.0
    %3470 = vmatpush1.msra.mxu0 0.0
    %3471 = vmatprep.subr.mxu0 0.0
    %3472 = vmatpush1.msra.mxu0 0.0
    %3473 = vmatprep.subr.mxu0 0.0
    %3474 = vmatpush1.msra.mxu0 0.0
    %3475 = vmatprep.subr.mxu0 0.0
    %3476 = vmatpush1.msra.mxu0 0.0
    %3477 = vmatprep.subr.mxu0 0.0
    %3478 = vmatpush1.msra.mxu0 0.0
    %3479 = vmatprep.subr.mxu0 0.0
    %3480 = vmatpush1.msra.mxu0 0.0
    %3481 = vmatprep.subr.mxu0 0.0
    %3482 = vmatpush1.msra.mxu0 0.0
    %3483 = vmatprep.subr.mxu0 0.0
    %3484 = vmatpush1.msra.mxu0 0.0
    %3485 = vmatprep.subr.mxu0 0.0
    %3486 = vmatpush1.msra.mxu0 0.0
    %3487 = vmatprep.mubr.f32.mxu0 0.0
    %v3488 = vand.u32 %v2209, 4294901760
    %3489 = vmatmul.mubr.f32.gmra.mrb[0].mxu0 %v3488
    %v3490 = vpop.f32.mrb[0].mxu0
    %v3491 = vadd.f32 %v3390, %v3490
    %v3492 = vpop.f32.mrb[0].mxu0
    %3493 = vmatprep.mubr.f32.mxu0 0.0
    %v3494 = vand.u32 %v2212, 4294901760
    %3495 = vmatmul.mubr.f32.gmra.mrb[0].mxu0 %v3494
    %v3496 = vpop.f32.mrb[0].mxu0
    %v3497 = vadd.f32 %v3400, %v3496
    %v3498 = vpop.f32.mrb[0].mxu0
    %3499 = vmatprep.mubr.f32.mxu0 0.0
    %v3500 = vand.u32 %v2215, 4294901760
    %3501 = vmatmul.mubr.f32.gmra.mrb[0].mxu0 %v3500
    %v3502 = vpop.f32.mrb[0].mxu0
    %v3503 = vadd.f32 %v3410, %v3502
    %v3504 = vpop.f32.mrb[0].mxu0
    %3505 = vdwg.mxu0
    %3506 = vmatprep.subr.mxu0 0.0
    %v3507 = vand.u32 %v240, 4294901760
    %v3508 = vsub.f32 %v240, %v3507
    %3509 = vmatpush1.msra.mxu0 %v3508
    %3510 = vmatprep.subr.mxu0 0.0
    %v3511 = vand.u32 %v344, 4294901760
    %v3512 = vsub.f32 %v344, %v3511
    %3513 = vmatpush1.msra.mxu0 %v3512
    %3514 = vmatprep.subr.mxu0 0.0
    %3515 = vmatpush1.msra.mxu0 0.0
    %3516 = vmatprep.subr.mxu0 0.0
    %3517 = vmatpush1.msra.mxu0 0.0
    %3518 = vmatprep.subr.mxu0 0.0
    %3519 = vmatpush1.msra.mxu0 0.0
    %3520 = vmatprep.subr.mxu0 0.0
    %3521 = vmatpush1.msra.mxu0 0.0
    %3522 = vmatprep.subr.mxu0 0.0
    %3523 = vmatpush1.msra.mxu0 0.0
    %3524 = vmatprep.subr.mxu0 0.0
    %3525 = vmatpush1.msra.mxu0 0.0
    %3526 = vmatprep.subr.mxu0 0.0
    %3527 = vmatpush1.msra.mxu0 0.0
    %3528 = vmatprep.subr.mxu0 0.0
    %3529 = vmatpush1.msra.mxu0 0.0
    %3530 = vmatprep.subr.mxu0 0.0
    %3531 = vmatpush1.msra.mxu0 0.0
    %3532 = vmatprep.subr.mxu0 0.0
    %3533 = vmatpush1.msra.mxu0 0.0
    %3534 = vmatprep.subr.mxu0 0.0
    %3535 = vmatpush1.msra.mxu0 0.0
    %3536 = vmatprep.subr.mxu0 0.0
    %3537 = vmatpush1.msra.mxu0 0.0
    %3538 = vmatprep.subr.mxu0 0.0
    %3539 = vmatpush1.msra.mxu0 0.0
    %3540 = vmatprep.subr.mxu0 0.0
    %3541 = vmatpush1.msra.mxu0 0.0
    %3542 = vmatprep.subr.mxu0 0.0
    %3543 = vmatpush1.msra.mxu0 0.0
    %3544 = vmatprep.subr.mxu0 0.0
    %3545 = vmatpush1.msra.mxu0 0.0
    %3546 = vmatprep.subr.mxu0 0.0
    %3547 = vmatpush1.msra.mxu0 0.0
    %3548 = vmatprep.subr.mxu0 0.0
    %3549 = vmatpush1.msra.mxu0 0.0
    %3550 = vmatprep.subr.mxu0 0.0
    %3551 = vmatpush1.msra.mxu0 0.0
    %3552 = vmatprep.subr.mxu0 0.0
    %3553 = vmatpush1.msra.mxu0 0.0
    %3554 = vmatprep.subr.mxu0 0.0
    %3555 = vmatpush1.msra.mxu0 0.0
    %3556 = vmatprep.subr.mxu0 0.0
    %3557 = vmatpush1.msra.mxu0 0.0
    %3558 = vmatprep.subr.mxu0 0.0
    %3559 = vmatpush1.msra.mxu0 0.0
    %3560 = vmatprep.subr.mxu0 0.0
    %3561 = vmatpush1.msra.mxu0 0.0
    %3562 = vmatprep.subr.mxu0 0.0
    %3563 = vmatpush1.msra.mxu0 0.0
    %3564 = vmatprep.subr.mxu0 0.0
    %3565 = vmatpush1.msra.mxu0 0.0
    %3566 = vmatprep.subr.mxu0 0.0
    %3567 = vmatpush1.msra.mxu0 0.0
    %3568 = vmatprep.subr.mxu0 0.0
    %3569 = vmatpush1.msra.mxu0 0.0
    %3570 = vmatprep.subr.mxu0 0.0
    %3571 = vmatpush1.msra.mxu0 0.0
    %3572 = vmatprep.subr.mxu0 0.0
    %3573 = vmatpush1.msra.mxu0 0.0
    %3574 = vmatprep.mubr.f32.mxu0 0.0
    %v3575 = vand.u32 %v2209, 4294901760
    %v3576 = vsub.f32 %v2209, %v3575
    %3577 = vmatmul.mubr.f32.gmra.mrb[0].mxu0 %v3576
    %v3578 = vpop.f32.mrb[0].mxu0
    %v3579 = vadd.f32 %v3491, %v3578
    %v3580 = vpop.f32.mrb[0].mxu0
    %3581 = vmatprep.mubr.f32.mxu0 0.0
    %v3582 = vand.u32 %v2212, 4294901760
    %v3583 = vsub.f32 %v2212, %v3582
    %3584 = vmatmul.mubr.f32.gmra.mrb[0].mxu0 %v3583
    %v3585 = vpop.f32.mrb[0].mxu0
    %v3586 = vadd.f32 %v3497, %v3585
    %v3587 = vpop.f32.mrb[0].mxu0
    %3588 = vmatprep.mubr.f32.mxu0 0.0
    %v3589 = vand.u32 %v2215, 4294901760
    %v3590 = vsub.f32 %v2215, %v3589
    %3591 = vmatmul.mubr.f32.gmra.mrb[0].mxu0 %v3590
    %v3592 = vpop.f32.mrb[0].mxu0
    %v3593 = vadd.f32 %v3503, %v3592
    %v3594 = vpop.f32.mrb[0].mxu0
    %3595 = vdwg.mxu0
    %3596 = vmatprep.subr.mxu0 0.0
    %v3597 = vand.u32 %v240, 4294901760
    %3598 = vmatpush1.msra.mxu0 %v3597
    %3599 = vmatprep.subr.mxu0 0.0
    %v3600 = vand.u32 %v344, 4294901760
    %3601 = vmatpush1.msra.mxu0 %v3600
    %3602 = vmatprep.subr.mxu0 0.0
    %3603 = vmatpush1.msra.mxu0 0.0
    %3604 = vmatprep.subr.mxu0 0.0
    %3605 = vmatpush1.msra.mxu0 0.0
    %3606 = vmatprep.subr.mxu0 0.0
    %3607 = vmatpush1.msra.mxu0 0.0
    %3608 = vmatprep.subr.mxu0 0.0
    %3609 = vmatpush1.msra.mxu0 0.0
    %3610 = vmatprep.subr.mxu0 0.0
    %3611 = vmatpush1.msra.mxu0 0.0
    %3612 = vmatprep.subr.mxu0 0.0
    %3613 = vmatpush1.msra.mxu0 0.0
    %3614 = vmatprep.subr.mxu0 0.0
    %3615 = vmatpush1.msra.mxu0 0.0
    %3616 = vmatprep.subr.mxu0 0.0
    %3617 = vmatpush1.msra.mxu0 0.0
    %3618 = vmatprep.subr.mxu0 0.0
    %3619 = vmatpush1.msra.mxu0 0.0
    %3620 = vmatprep.subr.mxu0 0.0
    %3621 = vmatpush1.msra.mxu0 0.0
    %3622 = vmatprep.subr.mxu0 0.0
    %3623 = vmatpush1.msra.mxu0 0.0
    %3624 = vmatprep.subr.mxu0 0.0
    %3625 = vmatpush1.msra.mxu0 0.0
    %3626 = vmatprep.subr.mxu0 0.0
    %3627 = vmatpush1.msra.mxu0 0.0
    %3628 = vmatprep.subr.mxu0 0.0
    %3629 = vmatpush1.msra.mxu0 0.0
    %3630 = vmatprep.subr.mxu0 0.0
    %3631 = vmatpush1.msra.mxu0 0.0
    %3632 = vmatprep.subr.mxu0 0.0
    %3633 = vmatpush1.msra.mxu0 0.0
    %3634 = vmatprep.subr.mxu0 0.0
    %3635 = vmatpush1.msra.mxu0 0.0
    %3636 = vmatprep.subr.mxu0 0.0
    %3637 = vmatpush1.msra.mxu0 0.0
    %3638 = vmatprep.subr.mxu0 0.0
    %3639 = vmatpush1.msra.mxu0 0.0
    %3640 = vmatprep.subr.mxu0 0.0
    %3641 = vmatpush1.msra.mxu0 0.0
    %3642 = vmatprep.subr.mxu0 0.0
    %3643 = vmatpush1.msra.mxu0 0.0
    %3644 = vmatprep.subr.mxu0 0.0
    %3645 = vmatpush1.msra.mxu0 0.0
    %3646 = vmatprep.subr.mxu0 0.0
    %3647 = vmatpush1.msra.mxu0 0.0
    %3648 = vmatprep.subr.mxu0 0.0
    %3649 = vmatpush1.msra.mxu0 0.0
    %3650 = vmatprep.subr.mxu0 0.0
    %3651 = vmatpush1.msra.mxu0 0.0
    %3652 = vmatprep.subr.mxu0 0.0
    %3653 = vmatpush1.msra.mxu0 0.0
    %3654 = vmatprep.subr.mxu0 0.0
    %3655 = vmatpush1.msra.mxu0 0.0
    %3656 = vmatprep.subr.mxu0 0.0
    %3657 = vmatpush1.msra.mxu0 0.0
    %3658 = vmatprep.subr.mxu0 0.0
    %3659 = vmatpush1.msra.mxu0 0.0
    %3660 = vmatprep.subr.mxu0 0.0
    %3661 = vmatpush1.msra.mxu0 0.0
    %3662 = vmatprep.mubr.f32.mxu0 0.0
    %v3663 = vand.u32 %v2209, 4294901760
    %v3664 = vsub.f32 %v2209, %v3663
    %v3665 = vand.u32 %v3664, 4294901760
    %3666 = vmatmul.mubr.f32.gmra.mrb[0].mxu0 %v3665
    %v3667 = vpop.f32.mrb[0].mxu0
    %v3668 = vadd.f32 %v3579, %v3667
    %v3669 = vpop.f32.mrb[0].mxu0
    %3670 = vmatprep.mubr.f32.mxu0 0.0
    %v3671 = vand.u32 %v2212, 4294901760
    %v3672 = vsub.f32 %v2212, %v3671
    %v3673 = vand.u32 %v3672, 4294901760
    %3674 = vmatmul.mubr.f32.gmra.mrb[0].mxu0 %v3673
    %v3675 = vpop.f32.mrb[0].mxu0
    %v3676 = vadd.f32 %v3586, %v3675
    %v3677 = vpop.f32.mrb[0].mxu0
    %3678 = vmatprep.mubr.f32.mxu0 0.0
    %v3679 = vand.u32 %v2215, 4294901760
    %v3680 = vsub.f32 %v2215, %v3679
    %v3681 = vand.u32 %v3680, 4294901760
    %3682 = vmatmul.mubr.f32.gmra.mrb[0].mxu0 %v3681
    %v3683 = vpop.f32.mrb[0].mxu0
    %v3684 = vadd.f32 %v3593, %v3683
    %v3685 = vpop.f32.mrb[0].mxu0
    %3686 = vdwg.mxu0
    %3687 = vmatprep.subr.mxu0 0.0
    %v3688 = vand.u32 %v240, 4294901760
    %v3689 = vsub.f32 %v240, %v3688
    %v3690 = vand.u32 %v3689, 4294901760
    %3691 = vmatpush1.msra.mxu0 %v3690
    %3692 = vmatprep.subr.mxu0 0.0
    %v3693 = vand.u32 %v344, 4294901760
    %v3694 = vsub.f32 %v344, %v3693
    %v3695 = vand.u32 %v3694, 4294901760
    %3696 = vmatpush1.msra.mxu0 %v3695
    %3697 = vmatprep.subr.mxu0 0.0
    %3698 = vmatpush1.msra.mxu0 0.0
    %3699 = vmatprep.subr.mxu0 0.0
    %3700 = vmatpush1.msra.mxu0 0.0
    %3701 = vmatprep.subr.mxu0 0.0
    %3702 = vmatpush1.msra.mxu0 0.0
    %3703 = vmatprep.subr.mxu0 0.0
    %3704 = vmatpush1.msra.mxu0 0.0
    %3705 = vmatprep.subr.mxu0 0.0
    %3706 = vmatpush1.msra.mxu0 0.0
    %3707 = vmatprep.subr.mxu0 0.0
    %3708 = vmatpush1.msra.mxu0 0.0
    %3709 = vmatprep.subr.mxu0 0.0
    %3710 = vmatpush1.msra.mxu0 0.0
    %3711 = vmatprep.subr.mxu0 0.0
    %3712 = vmatpush1.msra.mxu0 0.0
    %3713 = vmatprep.subr.mxu0 0.0
    %3714 = vmatpush1.msra.mxu0 0.0
    %3715 = vmatprep.subr.mxu0 0.0
    %3716 = vmatpush1.msra.mxu0 0.0
    %3717 = vmatprep.subr.mxu0 0.0
    %3718 = vmatpush1.msra.mxu0 0.0
    %3719 = vmatprep.subr.mxu0 0.0
    %3720 = vmatpush1.msra.mxu0 0.0
    %3721 = vmatprep.subr.mxu0 0.0
    %3722 = vmatpush1.msra.mxu0 0.0
    %3723 = vmatprep.subr.mxu0 0.0
    %3724 = vmatpush1.msra.mxu0 0.0
    %3725 = vmatprep.subr.mxu0 0.0
    %3726 = vmatpush1.msra.mxu0 0.0
    %3727 = vmatprep.subr.mxu0 0.0
    %3728 = vmatpush1.msra.mxu0 0.0
    %3729 = vmatprep.subr.mxu0 0.0
    %3730 = vmatpush1.msra.mxu0 0.0
    %3731 = vmatprep.subr.mxu0 0.0
    %3732 = vmatpush1.msra.mxu0 0.0
    %3733 = vmatprep.subr.mxu0 0.0
    %3734 = vmatpush1.msra.mxu0 0.0
    %3735 = vmatprep.subr.mxu0 0.0
    %3736 = vmatpush1.msra.mxu0 0.0
    %3737 = vmatprep.subr.mxu0 0.0
    %3738 = vmatpush1.msra.mxu0 0.0
    %3739 = vmatprep.subr.mxu0 0.0
    %3740 = vmatpush1.msra.mxu0 0.0
    %3741 = vmatprep.subr.mxu0 0.0
    %3742 = vmatpush1.msra.mxu0 0.0
    %3743 = vmatprep.subr.mxu0 0.0
    %3744 = vmatpush1.msra.mxu0 0.0
    %3745 = vmatprep.subr.mxu0 0.0
    %3746 = vmatpush1.msra.mxu0 0.0
    %3747 = vmatprep.subr.mxu0 0.0
    %3748 = vmatpush1.msra.mxu0 0.0
    %3749 = vmatprep.subr.mxu0 0.0
    %3750 = vmatpush1.msra.mxu0 0.0
    %3751 = vmatprep.subr.mxu0 0.0
    %3752 = vmatpush1.msra.mxu0 0.0
    %3753 = vmatprep.subr.mxu0 0.0
    %3754 = vmatpush1.msra.mxu0 0.0
    %3755 = vmatprep.subr.mxu0 0.0
    %3756 = vmatpush1.msra.mxu0 0.0
    %3757 = vmatprep.mubr.f32.mxu0 0.0
    %v3758 = vand.u32 %v2209, 4294901760
    %3759 = vmatmul.mubr.f32.gmra.mrb[0].mxu0 %v3758
    %v3760 = vpop.f32.mrb[0].mxu0
    %v3761 = vadd.f32 %v3668, %v3760
    %v3762 = vpop.f32.mrb[0].mxu0
    %3763 = vmatprep.mubr.f32.mxu0 0.0
    %v3764 = vand.u32 %v2212, 4294901760
    %3765 = vmatmul.mubr.f32.gmra.mrb[0].mxu0 %v3764
    %v3766 = vpop.f32.mrb[0].mxu0
    %v3767 = vadd.f32 %v3676, %v3766
    %v3768 = vpop.f32.mrb[0].mxu0
    %3769 = vmatprep.mubr.f32.mxu0 0.0
    %v3770 = vand.u32 %v2215, 4294901760
    %3771 = vmatmul.mubr.f32.gmra.mrb[0].mxu0 %v3770
    %v3772 = vpop.f32.mrb[0].mxu0
    %v3773 = vadd.f32 %v3684, %v3772
    %v3774 = vpop.f32.mrb[0].mxu0
    %3775 = vdwg.mxu0
    %3776 = vmatprep.subr.mxu0 0.0
    %v3777 = vand.u32 %v240, 4294901760
    %3778 = vmatpush1.msra.mxu0 %v3777
    %3779 = vmatprep.subr.mxu0 0.0
    %v3780 = vand.u32 %v344, 4294901760
    %3781 = vmatpush1.msra.mxu0 %v3780
    %3782 = vmatprep.subr.mxu0 0.0
    %3783 = vmatpush1.msra.mxu0 0.0
    %3784 = vmatprep.subr.mxu0 0.0
    %3785 = vmatpush1.msra.mxu0 0.0
    %3786 = vmatprep.subr.mxu0 0.0
    %3787 = vmatpush1.msra.mxu0 0.0
    %3788 = vmatprep.subr.mxu0 0.0
    %3789 = vmatpush1.msra.mxu0 0.0
    %3790 = vmatprep.subr.mxu0 0.0
    %3791 = vmatpush1.msra.mxu0 0.0
    %3792 = vmatprep.subr.mxu0 0.0
    %3793 = vmatpush1.msra.mxu0 0.0
    %3794 = vmatprep.subr.mxu0 0.0
    %3795 = vmatpush1.msra.mxu0 0.0
    %3796 = vmatprep.subr.mxu0 0.0
    %3797 = vmatpush1.msra.mxu0 0.0
    %3798 = vmatprep.subr.mxu0 0.0
    %3799 = vmatpush1.msra.mxu0 0.0
    %3800 = vmatprep.subr.mxu0 0.0
    %3801 = vmatpush1.msra.mxu0 0.0
    %3802 = vmatprep.subr.mxu0 0.0
    %3803 = vmatpush1.msra.mxu0 0.0
    %3804 = vmatprep.subr.mxu0 0.0
    %3805 = vmatpush1.msra.mxu0 0.0
    %3806 = vmatprep.subr.mxu0 0.0
    %3807 = vmatpush1.msra.mxu0 0.0
    %3808 = vmatprep.subr.mxu0 0.0
    %3809 = vmatpush1.msra.mxu0 0.0
    %3810 = vmatprep.subr.mxu0 0.0
    %3811 = vmatpush1.msra.mxu0 0.0
    %3812 = vmatprep.subr.mxu0 0.0
    %3813 = vmatpush1.msra.mxu0 0.0
    %3814 = vmatprep.subr.mxu0 0.0
    %3815 = vmatpush1.msra.mxu0 0.0
    %3816 = vmatprep.subr.mxu0 0.0
    %3817 = vmatpush1.msra.mxu0 0.0
    %3818 = vmatprep.subr.mxu0 0.0
    %3819 = vmatpush1.msra.mxu0 0.0
    %3820 = vmatprep.subr.mxu0 0.0
    %3821 = vmatpush1.msra.mxu0 0.0
    %3822 = vmatprep.subr.mxu0 0.0
    %3823 = vmatpush1.msra.mxu0 0.0
    %3824 = vmatprep.subr.mxu0 0.0
    %3825 = vmatpush1.msra.mxu0 0.0
    %3826 = vmatprep.subr.mxu0 0.0
    %3827 = vmatpush1.msra.mxu0 0.0
    %3828 = vmatprep.subr.mxu0 0.0
    %3829 = vmatpush1.msra.mxu0 0.0
    %3830 = vmatprep.subr.mxu0 0.0
    %3831 = vmatpush1.msra.mxu0 0.0
    %3832 = vmatprep.subr.mxu0 0.0
    %3833 = vmatpush1.msra.mxu0 0.0
    %3834 = vmatprep.subr.mxu0 0.0
    %3835 = vmatpush1.msra.mxu0 0.0
    %3836 = vmatprep.subr.mxu0 0.0
    %3837 = vmatpush1.msra.mxu0 0.0
    %3838 = vmatprep.subr.mxu0 0.0
    %3839 = vmatpush1.msra.mxu0 0.0
    %3840 = vmatprep.subr.mxu0 0.0
    %3841 = vmatpush1.msra.mxu0 0.0
    %3842 = vmatprep.mubr.f32.mxu0 0.0
    %v3843 = vand.u32 %v2209, 4294901760
    %3844 = vmatmul.mubr.f32.gmra.mrb[0].mxu0 %v3843
    %v3845 = vpop.f32.mrb[0].mxu0
    %v3846 = vadd.f32 %v3761, %v3845
    %v3847 = vpop.f32.mrb[0].mxu0
    %3848 = vmatprep.mubr.f32.mxu0 0.0
    %v3849 = vand.u32 %v2212, 4294901760
    %3850 = vmatmul.mubr.f32.gmra.mrb[0].mxu0 %v3849
    %v3851 = vpop.f32.mrb[0].mxu0
    %v3852 = vadd.f32 %v3767, %v3851
    %v3853 = vpop.f32.mrb[0].mxu0
    %3854 = vmatprep.mubr.f32.mxu0 0.0
    %v3855 = vand.u32 %v2215, 4294901760
    %3856 = vmatmul.mubr.f32.gmra.mrb[0].mxu0 %v3855
    %v3857 = vpop.f32.mrb[0].mxu0
    %v3858 = vadd.f32 %v3773, %v3857
    %v3859 = vpop.f32.mrb[0].mxu0
    %3860 = vdwg.mxu0
    %3861 = vmatprep.subr.mxu0 0.0
    %v3862 = vand.u32 %v448, 4294901760
    %3863 = vmatpush1.msra.mxu0 %v3862
    %3864 = vmatprep.subr.mxu0 0.0
    %v3865 = vand.u32 %v552, 4294901760
    %3866 = vmatpush1.msra.mxu0 %v3865
    %3867 = vmatprep.subr.mxu0 0.0
    %3868 = vmatpush1.msra.mxu0 0.0
    %3869 = vmatprep.subr.mxu0 0.0
    %3870 = vmatpush1.msra.mxu0 0.0
    %3871 = vmatprep.subr.mxu0 0.0
    %3872 = vmatpush1.msra.mxu0 0.0
    %3873 = vmatprep.subr.mxu0 0.0
    %3874 = vmatpush1.msra.mxu0 0.0
    %3875 = vmatprep.subr.mxu0 0.0
    %3876 = vmatpush1.msra.mxu0 0.0
    %3877 = vmatprep.subr.mxu0 0.0
    %3878 = vmatpush1.msra.mxu0 0.0
    %3879 = vmatprep.subr.mxu0 0.0
    %3880 = vmatpush1.msra.mxu0 0.0
    %3881 = vmatprep.subr.mxu0 0.0
    %3882 = vmatpush1.msra.mxu0 0.0
    %3883 = vmatprep.subr.mxu0 0.0
    %3884 = vmatpush1.msra.mxu0 0.0
    %3885 = vmatprep.subr.mxu0 0.0
    %3886 = vmatpush1.msra.mxu0 0.0
    %3887 = vmatprep.subr.mxu0 0.0
    %3888 = vmatpush1.msra.mxu0 0.0
    %3889 = vmatprep.subr.mxu0 0.0
    %3890 = vmatpush1.msra.mxu0 0.0
    %3891 = vmatprep.subr.mxu0 0.0
    %3892 = vmatpush1.msra.mxu0 0.0
    %3893 = vmatprep.subr.mxu0 0.0
    %3894 = vmatpush1.msra.mxu0 0.0
    %3895 = vmatprep.subr.mxu0 0.0
    %3896 = vmatpush1.msra.mxu0 0.0
    %3897 = vmatprep.subr.mxu0 0.0
    %3898 = vmatpush1.msra.mxu0 0.0
    %3899 = vmatprep.subr.mxu0 0.0
    %3900 = vmatpush1.msra.mxu0 0.0
    %3901 = vmatprep.subr.mxu0 0.0
    %3902 = vmatpush1.msra.mxu0 0.0
    %3903 = vmatprep.subr.mxu0 0.0
    %3904 = vmatpush1.msra.mxu0 0.0
    %3905 = vmatprep.subr.mxu0 0.0
    %3906 = vmatpush1.msra.mxu0 0.0
    %3907 = vmatprep.subr.mxu0 0.0
    %3908 = vmatpush1.msra.mxu0 0.0
    %3909 = vmatprep.subr.mxu0 0.0
    %3910 = vmatpush1.msra.mxu0 0.0
    %3911 = vmatprep.subr.mxu0 0.0
    %3912 = vmatpush1.msra.mxu0 0.0
    %3913 = vmatprep.subr.mxu0 0.0
    %3914 = vmatpush1.msra.mxu0 0.0
    %3915 = vmatprep.subr.mxu0 0.0
    %3916 = vmatpush1.msra.mxu0 0.0
    %3917 = vmatprep.subr.mxu0 0.0
    %3918 = vmatpush1.msra.mxu0 0.0
    %3919 = vmatprep.subr.mxu0 0.0
    %3920 = vmatpush1.msra.mxu0 0.0
    %3921 = vmatprep.subr.mxu0 0.0
    %3922 = vmatpush1.msra.mxu0 0.0
    %3923 = vmatprep.subr.mxu0 0.0
    %3924 = vmatpush1.msra.mxu0 0.0
    %3925 = vmatprep.subr.mxu0 0.0
    %3926 = vmatpush1.msra.mxu0 0.0
    %3927 = vmatprep.mubr.f32.mxu0 0.0
    %v3928 = vand.u32 %v2763, 4294901760
    %v3929 = vsub.f32 %v2763, %v3928
    %v3930 = vand.u32 %v3929, 4294901760
    %v3931 = vsub.f32 %v3929, %v3930
    %v3932 = vand.u32 %v3931, 4294901760
    %3933 = vmatmul.mubr.f32.gmra.mrb[0].mxu0 %v3932
    %v3934 = vpop.f32.mrb[0].mxu0
    %v3935 = vadd.f32 0.0, %v3934
    %v3936 = vpop.f32.mrb[0].mxu0
    %3937 = vmatprep.mubr.f32.mxu0 0.0
    %v3938 = vand.u32 %v2766, 4294901760
    %v3939 = vsub.f32 %v2766, %v3938
    %v3940 = vand.u32 %v3939, 4294901760
    %v3941 = vsub.f32 %v3939, %v3940
    %v3942 = vand.u32 %v3941, 4294901760
    %3943 = vmatmul.mubr.f32.gmra.mrb[0].mxu0 %v3942
    %v3944 = vpop.f32.mrb[0].mxu0
    %v3945 = vadd.f32 0.0, %v3944
    %v3946 = vpop.f32.mrb[0].mxu0
    %3947 = vmatprep.mubr.f32.mxu0 0.0
    %v3948 = vand.u32 %v2769, 4294901760
    %v3949 = vsub.f32 %v2769, %v3948
    %v3950 = vand.u32 %v3949, 4294901760
    %v3951 = vsub.f32 %v3949, %v3950
    %v3952 = vand.u32 %v3951, 4294901760
    %3953 = vmatmul.mubr.f32.gmra.mrb[0].mxu0 %v3952
    %v3954 = vpop.f32.mrb[0].mxu0
    %v3955 = vadd.f32 0.0, %v3954
    %v3956 = vpop.f32.mrb[0].mxu0
    %3957 = vdwg.mxu0
    %3958 = vmatprep.subr.mxu0 0.0
    %v3959 = vand.u32 %v448, 4294901760
    %v3960 = vsub.f32 %v448, %v3959
    %v3961 = vand.u32 %v3960, 4294901760
    %v3962 = vsub.f32 %v3960, %v3961
    %v3963 = vand.u32 %v3962, 4294901760
    %3964 = vmatpush1.msra.mxu0 %v3963
    %3965 = vmatprep.subr.mxu0 0.0
    %v3966 = vand.u32 %v552, 4294901760
    %v3967 = vsub.f32 %v552, %v3966
    %v3968 = vand.u32 %v3967, 4294901760
    %v3969 = vsub.f32 %v3967, %v3968
    %v3970 = vand.u32 %v3969, 4294901760
    %3971 = vmatpush1.msra.mxu0 %v3970
    %3972 = vmatprep.subr.mxu0 0.0
    %3973 = vmatpush1.msra.mxu0 0.0
    %3974 = vmatprep.subr.mxu0 0.0
    %3975 = vmatpush1.msra.mxu0 0.0
    %3976 = vmatprep.subr.mxu0 0.0
    %3977 = vmatpush1.msra.mxu0 0.0
    %3978 = vmatprep.subr.mxu0 0.0
    %3979 = vmatpush1.msra.mxu0 0.0
    %3980 = vmatprep.subr.mxu0 0.0
    %3981 = vmatpush1.msra.mxu0 0.0
    %3982 = vmatprep.subr.mxu0 0.0
    %3983 = vmatpush1.msra.mxu0 0.0
    %3984 = vmatprep.subr.mxu0 0.0
    %3985 = vmatpush1.msra.mxu0 0.0
    %3986 = vmatprep.subr.mxu0 0.0
    %3987 = vmatpush1.msra.mxu0 0.0
    %3988 = vmatprep.subr.mxu0 0.0
    %3989 = vmatpush1.msra.mxu0 0.0
    %3990 = vmatprep.subr.mxu0 0.0
    %3991 = vmatpush1.msra.mxu0 0.0
    %3992 = vmatprep.subr.mxu0 0.0
    %3993 = vmatpush1.msra.mxu0 0.0
    %3994 = vmatprep.subr.mxu0 0.0
    %3995 = vmatpush1.msra.mxu0 0.0
    %3996 = vmatprep.subr.mxu0 0.0
    %3997 = vmatpush1.msra.mxu0 0.0
    %3998 = vmatprep.subr.mxu0 0.0
    %3999 = vmatpush1.msra.mxu0 0.0
    %4000 = vmatprep.subr.mxu0 0.0
    %4001 = vmatpush1.msra.mxu0 0.0
    %4002 = vmatprep.subr.mxu0 0.0
    %4003 = vmatpush1.msra.mxu0 0.0
    %4004 = vmatprep.subr.mxu0 0.0
    %4005 = vmatpush1.msra.mxu0 0.0
    %4006 = vmatprep.subr.mxu0 0.0
    %4007 = vmatpush1.msra.mxu0 0.0
    %4008 = vmatprep.subr.mxu0 0.0
    %4009 = vmatpush1.msra.mxu0 0.0
    %4010 = vmatprep.subr.mxu0 0.0
    %4011 = vmatpush1.msra.mxu0 0.0
    %4012 = vmatprep.subr.mxu0 0.0
    %4013 = vmatpush1.msra.mxu0 0.0
    %4014 = vmatprep.subr.mxu0 0.0
    %4015 = vmatpush1.msra.mxu0 0.0
    %4016 = vmatprep.subr.mxu0 0.0
    %4017 = vmatpush1.msra.mxu0 0.0
    %4018 = vmatprep.subr.mxu0 0.0
    %4019 = vmatpush1.msra.mxu0 0.0
    %4020 = vmatprep.subr.mxu0 0.0
    %4021 = vmatpush1.msra.mxu0 0.0
    %4022 = vmatprep.subr.mxu0 0.0
    %4023 = vmatpush1.msra.mxu0 0.0
    %4024 = vmatprep.subr.mxu0 0.0
    %4025 = vmatpush1.msra.mxu0 0.0
    %4026 = vmatprep.subr.mxu0 0.0
    %4027 = vmatpush1.msra.mxu0 0.0
    %4028 = vmatprep.subr.mxu0 0.0
    %4029 = vmatpush1.msra.mxu0 0.0
    %4030 = vmatprep.subr.mxu0 0.0
    %4031 = vmatpush1.msra.mxu0 0.0
    %4032 = vmatprep.mubr.f32.mxu0 0.0
    %v4033 = vand.u32 %v2763, 4294901760
    %4034 = vmatmul.mubr.f32.gmra.mrb[0].mxu0 %v4033
    %v4035 = vpop.f32.mrb[0].mxu0
    %v4036 = vadd.f32 %v3935, %v4035
    %v4037 = vpop.f32.mrb[0].mxu0
    %4038 = vmatprep.mubr.f32.mxu0 0.0
    %v4039 = vand.u32 %v2766, 4294901760
    %4040 = vmatmul.mubr.f32.gmra.mrb[0].mxu0 %v4039
    %v4041 = vpop.f32.mrb[0].mxu0
    %v4042 = vadd.f32 %v3945, %v4041
    %v4043 = vpop.f32.mrb[0].mxu0
    %4044 = vmatprep.mubr.f32.mxu0 0.0
    %v4045 = vand.u32 %v2769, 4294901760
    %4046 = vmatmul.mubr.f32.gmra.mrb[0].mxu0 %v4045
    %v4047 = vpop.f32.mrb[0].mxu0
    %v4048 = vadd.f32 %v3955, %v4047
    %v4049 = vpop.f32.mrb[0].mxu0
    %4050 = vdwg.mxu0
    %4051 = vmatprep.subr.mxu0 0.0
    %v4052 = vand.u32 %v448, 4294901760
    %v4053 = vsub.f32 %v448, %v4052
    %4054 = vmatpush1.msra.mxu0 %v4053
    %4055 = vmatprep.subr.mxu0 0.0
    %v4056 = vand.u32 %v552, 4294901760
    %v4057 = vsub.f32 %v552, %v4056
    %4058 = vmatpush1.msra.mxu0 %v4057
    %4059 = vmatprep.subr.mxu0 0.0
    %4060 = vmatpush1.msra.mxu0 0.0
    %4061 = vmatprep.subr.mxu0 0.0
    %4062 = vmatpush1.msra.mxu0 0.0
    %4063 = vmatprep.subr.mxu0 0.0
    %4064 = vmatpush1.msra.mxu0 0.0
    %4065 = vmatprep.subr.mxu0 0.0
    %4066 = vmatpush1.msra.mxu0 0.0
    %4067 = vmatprep.subr.mxu0 0.0
    %4068 = vmatpush1.msra.mxu0 0.0
    %4069 = vmatprep.subr.mxu0 0.0
    %4070 = vmatpush1.msra.mxu0 0.0
    %4071 = vmatprep.subr.mxu0 0.0
    %4072 = vmatpush1.msra.mxu0 0.0
    %4073 = vmatprep.subr.mxu0 0.0
    %4074 = vmatpush1.msra.mxu0 0.0
    %4075 = vmatprep.subr.mxu0 0.0
    %4076 = vmatpush1.msra.mxu0 0.0
    %4077 = vmatprep.subr.mxu0 0.0
    %4078 = vmatpush1.msra.mxu0 0.0
    %4079 = vmatprep.subr.mxu0 0.0
    %4080 = vmatpush1.msra.mxu0 0.0
    %4081 = vmatprep.subr.mxu0 0.0
    %4082 = vmatpush1.msra.mxu0 0.0
    %4083 = vmatprep.subr.mxu0 0.0
    %4084 = vmatpush1.msra.mxu0 0.0
    %4085 = vmatprep.subr.mxu0 0.0
    %4086 = vmatpush1.msra.mxu0 0.0
    %4087 = vmatprep.subr.mxu0 0.0
    %4088 = vmatpush1.msra.mxu0 0.0
    %4089 = vmatprep.subr.mxu0 0.0
    %4090 = vmatpush1.msra.mxu0 0.0
    %4091 = vmatprep.subr.mxu0 0.0
    %4092 = vmatpush1.msra.mxu0 0.0
    %4093 = vmatprep.subr.mxu0 0.0
    %4094 = vmatpush1.msra.mxu0 0.0
    %4095 = vmatprep.subr.mxu0 0.0
    %4096 = vmatpush1.msra.mxu0 0.0
    %4097 = vmatprep.subr.mxu0 0.0
    %4098 = vmatpush1.msra.mxu0 0.0
    %4099 = vmatprep.subr.mxu0 0.0
    %4100 = vmatpush1.msra.mxu0 0.0
    %4101 = vmatprep.subr.mxu0 0.0
    %4102 = vmatpush1.msra.mxu0 0.0
    %4103 = vmatprep.subr.mxu0 0.0
    %4104 = vmatpush1.msra.mxu0 0.0
    %4105 = vmatprep.subr.mxu0 0.0
    %4106 = vmatpush1.msra.mxu0 0.0
    %4107 = vmatprep.subr.mxu0 0.0
    %4108 = vmatpush1.msra.mxu0 0.0
    %4109 = vmatprep.subr.mxu0 0.0
    %4110 = vmatpush1.msra.mxu0 0.0
    %4111 = vmatprep.subr.mxu0 0.0
    %4112 = vmatpush1.msra.mxu0 0.0
    %4113 = vmatprep.subr.mxu0 0.0
    %4114 = vmatpush1.msra.mxu0 0.0
    %4115 = vmatprep.subr.mxu0 0.0
    %4116 = vmatpush1.msra.mxu0 0.0
    %4117 = vmatprep.subr.mxu0 0.0
    %4118 = vmatpush1.msra.mxu0 0.0
    %4119 = vmatprep.mubr.f32.mxu0 0.0
    %v4120 = vand.u32 %v2763, 4294901760
    %v4121 = vsub.f32 %v2763, %v4120
    %4122 = vmatmul.mubr.f32.gmra.mrb[0].mxu0 %v4121
    %v4123 = vpop.f32.mrb[0].mxu0
    %v4124 = vadd.f32 %v4036, %v4123
    %v4125 = vpop.f32.mrb[0].mxu0
    %4126 = vmatprep.mubr.f32.mxu0 0.0
    %v4127 = vand.u32 %v2766, 4294901760
    %v4128 = vsub.f32 %v2766, %v4127
    %4129 = vmatmul.mubr.f32.gmra.mrb[0].mxu0 %v4128
    %v4130 = vpop.f32.mrb[0].mxu0
    %v4131 = vadd.f32 %v4042, %v4130
    %v4132 = vpop.f32.mrb[0].mxu0
    %4133 = vmatprep.mubr.f32.mxu0 0.0
    %v4134 = vand.u32 %v2769, 4294901760
    %v4135 = vsub.f32 %v2769, %v4134
    %4136 = vmatmul.mubr.f32.gmra.mrb[0].mxu0 %v4135
    %v4137 = vpop.f32.mrb[0].mxu0
    %v4138 = vadd.f32 %v4048, %v4137
    %v4139 = vpop.f32.mrb[0].mxu0
    %4140 = vdwg.mxu0
    %4141 = vmatprep.subr.mxu0 0.0
    %v4142 = vand.u32 %v448, 4294901760
    %4143 = vmatpush1.msra.mxu0 %v4142
    %4144 = vmatprep.subr.mxu0 0.0
    %v4145 = vand.u32 %v552, 4294901760
    %4146 = vmatpush1.msra.mxu0 %v4145
    %4147 = vmatprep.subr.mxu0 0.0
    %4148 = vmatpush1.msra.mxu0 0.0
    %4149 = vmatprep.subr.mxu0 0.0
    %4150 = vmatpush1.msra.mxu0 0.0
    %4151 = vmatprep.subr.mxu0 0.0
    %4152 = vmatpush1.msra.mxu0 0.0
    %4153 = vmatprep.subr.mxu0 0.0
    %4154 = vmatpush1.msra.mxu0 0.0
    %4155 = vmatprep.subr.mxu0 0.0
    %4156 = vmatpush1.msra.mxu0 0.0
    %4157 = vmatprep.subr.mxu0 0.0
    %4158 = vmatpush1.msra.mxu0 0.0
    %4159 = vmatprep.subr.mxu0 0.0
    %4160 = vmatpush1.msra.mxu0 0.0
    %4161 = vmatprep.subr.mxu0 0.0
    %4162 = vmatpush1.msra.mxu0 0.0
    %4163 = vmatprep.subr.mxu0 0.0
    %4164 = vmatpush1.msra.mxu0 0.0
    %4165 = vmatprep.subr.mxu0 0.0
    %4166 = vmatpush1.msra.mxu0 0.0
    %4167 = vmatprep.subr.mxu0 0.0
    %4168 = vmatpush1.msra.mxu0 0.0
    %4169 = vmatprep.subr.mxu0 0.0
    %4170 = vmatpush1.msra.mxu0 0.0
    %4171 = vmatprep.subr.mxu0 0.0
    %4172 = vmatpush1.msra.mxu0 0.0
    %4173 = vmatprep.subr.mxu0 0.0
    %4174 = vmatpush1.msra.mxu0 0.0
    %4175 = vmatprep.subr.mxu0 0.0
    %4176 = vmatpush1.msra.mxu0 0.0
    %4177 = vmatprep.subr.mxu0 0.0
    %4178 = vmatpush1.msra.mxu0 0.0
    %4179 = vmatprep.subr.mxu0 0.0
    %4180 = vmatpush1.msra.mxu0 0.0
    %4181 = vmatprep.subr.mxu0 0.0
    %4182 = vmatpush1.msra.mxu0 0.0
    %4183 = vmatprep.subr.mxu0 0.0
    %4184 = vmatpush1.msra.mxu0 0.0
    %4185 = vmatprep.subr.mxu0 0.0
    %4186 = vmatpush1.msra.mxu0 0.0
    %4187 = vmatprep.subr.mxu0 0.0
    %4188 = vmatpush1.msra.mxu0 0.0
    %4189 = vmatprep.subr.mxu0 0.0
    %4190 = vmatpush1.msra.mxu0 0.0
    %4191 = vmatprep.subr.mxu0 0.0
    %4192 = vmatpush1.msra.mxu0 0.0
    %4193 = vmatprep.subr.mxu0 0.0
    %4194 = vmatpush1.msra.mxu0 0.0
    %4195 = vmatprep.subr.mxu0 0.0
    %4196 = vmatpush1.msra.mxu0 0.0
    %4197 = vmatprep.subr.mxu0 0.0
    %4198 = vmatpush1.msra.mxu0 0.0
    %4199 = vmatprep.subr.mxu0 0.0
    %4200 = vmatpush1.msra.mxu0 0.0
    %4201 = vmatprep.subr.mxu0 0.0
    %4202 = vmatpush1.msra.mxu0 0.0
    %4203 = vmatprep.subr.mxu0 0.0
    %4204 = vmatpush1.msra.mxu0 0.0
    %4205 = vmatprep.subr.mxu0 0.0
    %4206 = vmatpush1.msra.mxu0 0.0
    %4207 = vmatprep.mubr.f32.mxu0 0.0
    %v4208 = vand.u32 %v2763, 4294901760
    %v4209 = vsub.f32 %v2763, %v4208
    %v4210 = vand.u32 %v4209, 4294901760
    %4211 = vmatmul.mubr.f32.gmra.mrb[0].mxu0 %v4210
    %v4212 = vpop.f32.mrb[0].mxu0
    %v4213 = vadd.f32 %v4124, %v4212
    %v4214 = vpop.f32.mrb[0].mxu0
    %4215 = vmatprep.mubr.f32.mxu0 0.0
    %v4216 = vand.u32 %v2766, 4294901760
    %v4217 = vsub.f32 %v2766, %v4216
    %v4218 = vand.u32 %v4217, 4294901760
    %4219 = vmatmul.mubr.f32.gmra.mrb[0].mxu0 %v4218
    %v4220 = vpop.f32.mrb[0].mxu0
    %v4221 = vadd.f32 %v4131, %v4220
    %v4222 = vpop.f32.mrb[0].mxu0
    %4223 = vmatprep.mubr.f32.mxu0 0.0
    %v4224 = vand.u32 %v2769, 4294901760
    %v4225 = vsub.f32 %v2769, %v4224
    %v4226 = vand.u32 %v4225, 4294901760
    %4227 = vmatmul.mubr.f32.gmra.mrb[0].mxu0 %v4226
    %v4228 = vpop.f32.mrb[0].mxu0
    %v4229 = vadd.f32 %v4138, %v4228
    %v4230 = vpop.f32.mrb[0].mxu0
    %4231 = vdwg.mxu0
    %4232 = vmatprep.subr.mxu0 0.0
    %v4233 = vand.u32 %v448, 4294901760
    %v4234 = vsub.f32 %v448, %v4233
    %v4235 = vand.u32 %v4234, 4294901760
    %4236 = vmatpush1.msra.mxu0 %v4235
    %4237 = vmatprep.subr.mxu0 0.0
    %v4238 = vand.u32 %v552, 4294901760
    %v4239 = vsub.f32 %v552, %v4238
    %v4240 = vand.u32 %v4239, 4294901760
    %4241 = vmatpush1.msra.mxu0 %v4240
    %4242 = vmatprep.subr.mxu0 0.0
    %4243 = vmatpush1.msra.mxu0 0.0
    %4244 = vmatprep.subr.mxu0 0.0
    %4245 = vmatpush1.msra.mxu0 0.0
    %4246 = vmatprep.subr.mxu0 0.0
    %4247 = vmatpush1.msra.mxu0 0.0
    %4248 = vmatprep.subr.mxu0 0.0
    %4249 = vmatpush1.msra.mxu0 0.0
    %4250 = vmatprep.subr.mxu0 0.0
    %4251 = vmatpush1.msra.mxu0 0.0
    %4252 = vmatprep.subr.mxu0 0.0
    %4253 = vmatpush1.msra.mxu0 0.0
    %4254 = vmatprep.subr.mxu0 0.0
    %4255 = vmatpush1.msra.mxu0 0.0
    %4256 = vmatprep.subr.mxu0 0.0
    %4257 = vmatpush1.msra.mxu0 0.0
    %4258 = vmatprep.subr.mxu0 0.0
    %4259 = vmatpush1.msra.mxu0 0.0
    %4260 = vmatprep.subr.mxu0 0.0
    %4261 = vmatpush1.msra.mxu0 0.0
    %4262 = vmatprep.subr.mxu0 0.0
    %4263 = vmatpush1.msra.mxu0 0.0
    %4264 = vmatprep.subr.mxu0 0.0
    %4265 = vmatpush1.msra.mxu0 0.0
    %4266 = vmatprep.subr.mxu0 0.0
    %4267 = vmatpush1.msra.mxu0 0.0
    %4268 = vmatprep.subr.mxu0 0.0
    %4269 = vmatpush1.msra.mxu0 0.0
    %4270 = vmatprep.subr.mxu0 0.0
    %4271 = vmatpush1.msra.mxu0 0.0
    %4272 = vmatprep.subr.mxu0 0.0
    %4273 = vmatpush1.msra.mxu0 0.0
    %4274 = vmatprep.subr.mxu0 0.0
    %4275 = vmatpush1.msra.mxu0 0.0
    %4276 = vmatprep.subr.mxu0 0.0
    %4277 = vmatpush1.msra.mxu0 0.0
    %4278 = vmatprep.subr.mxu0 0.0
    %4279 = vmatpush1.msra.mxu0 0.0
    %4280 = vmatprep.subr.mxu0 0.0
    %4281 = vmatpush1.msra.mxu0 0.0
    %4282 = vmatprep.subr.mxu0 0.0
    %4283 = vmatpush1.msra.mxu0 0.0
    %4284 = vmatprep.subr.mxu0 0.0
    %4285 = vmatpush1.msra.mxu0 0.0
    %4286 = vmatprep.subr.mxu0 0.0
    %4287 = vmatpush1.msra.mxu0 0.0
    %4288 = vmatprep.subr.mxu0 0.0
    %4289 = vmatpush1.msra.mxu0 0.0
    %4290 = vmatprep.subr.mxu0 0.0
    %4291 = vmatpush1.msra.mxu0 0.0
    %4292 = vmatprep.subr.mxu0 0.0
    %4293 = vmatpush1.msra.mxu0 0.0
    %4294 = vmatprep.subr.mxu0 0.0
    %4295 = vmatpush1.msra.mxu0 0.0
    %4296 = vmatprep.subr.mxu0 0.0
    %4297 = vmatpush1.msra.mxu0 0.0
    %4298 = vmatprep.subr.mxu0 0.0
    %4299 = vmatpush1.msra.mxu0 0.0
    %4300 = vmatprep.subr.mxu0 0.0
    %4301 = vmatpush1.msra.mxu0 0.0
    %4302 = vmatprep.mubr.f32.mxu0 0.0
    %v4303 = vand.u32 %v2763, 4294901760
    %4304 = vmatmul.mubr.f32.gmra.mrb[0].mxu0 %v4303
    %v4305 = vpop.f32.mrb[0].mxu0
    %v4306 = vadd.f32 %v4213, %v4305
    %v4307 = vpop.f32.mrb[0].mxu0
    %4308 = vmatprep.mubr.f32.mxu0 0.0
    %v4309 = vand.u32 %v2766, 4294901760
    %4310 = vmatmul.mubr.f32.gmra.mrb[0].mxu0 %v4309
    %v4311 = vpop.f32.mrb[0].mxu0
    %v4312 = vadd.f32 %v4221, %v4311
    %v4313 = vpop.f32.mrb[0].mxu0
    %4314 = vmatprep.mubr.f32.mxu0 0.0
    %v4315 = vand.u32 %v2769, 4294901760
    %4316 = vmatmul.mubr.f32.gmra.mrb[0].mxu0 %v4315
    %v4317 = vpop.f32.mrb[0].mxu0
    %v4318 = vadd.f32 %v4229, %v4317
    %v4319 = vpop.f32.mrb[0].mxu0
    %4320 = vdwg.mxu0
    %4321 = vmatprep.subr.mxu0 0.0
    %v4322 = vand.u32 %v448, 4294901760
    %4323 = vmatpush1.msra.mxu0 %v4322
    %4324 = vmatprep.subr.mxu0 0.0
    %v4325 = vand.u32 %v552, 4294901760
    %4326 = vmatpush1.msra.mxu0 %v4325
    %4327 = vmatprep.subr.mxu0 0.0
    %4328 = vmatpush1.msra.mxu0 0.0
    %4329 = vmatprep.subr.mxu0 0.0
    %4330 = vmatpush1.msra.mxu0 0.0
    %4331 = vmatprep.subr.mxu0 0.0
    %4332 = vmatpush1.msra.mxu0 0.0
    %4333 = vmatprep.subr.mxu0 0.0
    %4334 = vmatpush1.msra.mxu0 0.0
    %4335 = vmatprep.subr.mxu0 0.0
    %4336 = vmatpush1.msra.mxu0 0.0
    %4337 = vmatprep.subr.mxu0 0.0
    %4338 = vmatpush1.msra.mxu0 0.0
    %4339 = vmatprep.subr.mxu0 0.0
    %4340 = vmatpush1.msra.mxu0 0.0
    %4341 = vmatprep.subr.mxu0 0.0
    %4342 = vmatpush1.msra.mxu0 0.0
    %4343 = vmatprep.subr.mxu0 0.0
    %4344 = vmatpush1.msra.mxu0 0.0
    %4345 = vmatprep.subr.mxu0 0.0
    %4346 = vmatpush1.msra.mxu0 0.0
    %4347 = vmatprep.subr.mxu0 0.0
    %4348 = vmatpush1.msra.mxu0 0.0
    %4349 = vmatprep.subr.mxu0 0.0
    %4350 = vmatpush1.msra.mxu0 0.0
    %4351 = vmatprep.subr.mxu0 0.0
    %4352 = vmatpush1.msra.mxu0 0.0
    %4353 = vmatprep.subr.mxu0 0.0
    %4354 = vmatpush1.msra.mxu0 0.0
    %4355 = vmatprep.subr.mxu0 0.0
    %4356 = vmatpush1.msra.mxu0 0.0
    %4357 = vmatprep.subr.mxu0 0.0
    %4358 = vmatpush1.msra.mxu0 0.0
    %4359 = vmatprep.subr.mxu0 0.0
    %4360 = vmatpush1.msra.mxu0 0.0
    %4361 = vmatprep.subr.mxu0 0.0
    %4362 = vmatpush1.msra.mxu0 0.0
    %4363 = vmatprep.subr.mxu0 0.0
    %4364 = vmatpush1.msra.mxu0 0.0
    %4365 = vmatprep.subr.mxu0 0.0
    %4366 = vmatpush1.msra.mxu0 0.0
    %4367 = vmatprep.subr.mxu0 0.0
    %4368 = vmatpush1.msra.mxu0 0.0
    %4369 = vmatprep.subr.mxu0 0.0
    %4370 = vmatpush1.msra.mxu0 0.0
    %4371 = vmatprep.subr.mxu0 0.0
    %4372 = vmatpush1.msra.mxu0 0.0
    %4373 = vmatprep.subr.mxu0 0.0
    %4374 = vmatpush1.msra.mxu0 0.0
    %4375 = vmatprep.subr.mxu0 0.0
    %4376 = vmatpush1.msra.mxu0 0.0
    %4377 = vmatprep.subr.mxu0 0.0
    %4378 = vmatpush1.msra.mxu0 0.0
    %4379 = vmatprep.subr.mxu0 0.0
    %4380 = vmatpush1.msra.mxu0 0.0
    %4381 = vmatprep.subr.mxu0 0.0
    %4382 = vmatpush1.msra.mxu0 0.0
    %4383 = vmatprep.subr.mxu0 0.0
    %4384 = vmatpush1.msra.mxu0 0.0
    %4385 = vmatprep.subr.mxu0 0.0
    %4386 = vmatpush1.msra.mxu0 0.0
    %4387 = vmatprep.mubr.f32.mxu0 0.0
    %v4388 = vand.u32 %v2763, 4294901760
    %4389 = vmatmul.mubr.f32.gmra.mrb[0].mxu0 %v4388
    %v4390 = vpop.f32.mrb[0].mxu0
    %v4391 = vadd.f32 %v4306, %v4390
    %v4392 = vpop.f32.mrb[0].mxu0
    %4393 = vmatprep.mubr.f32.mxu0 0.0
    %v4394 = vand.u32 %v2766, 4294901760
    %4395 = vmatmul.mubr.f32.gmra.mrb[0].mxu0 %v4394
    %v4396 = vpop.f32.mrb[0].mxu0
    %v4397 = vadd.f32 %v4312, %v4396
    %v4398 = vpop.f32.mrb[0].mxu0
    %4399 = vmatprep.mubr.f32.mxu0 0.0
    %v4400 = vand.u32 %v2769, 4294901760
    %4401 = vmatmul.mubr.f32.gmra.mrb[0].mxu0 %v4400
    %v4402 = vpop.f32.mrb[0].mxu0
    %v4403 = vadd.f32 %v4318, %v4402
    %v4404 = vpop.f32.mrb[0].mxu0
    %4405 = vdwg.mxu0
    %v4406 = vmul.f32 %v1068, %v2747
    %v4407 = vmul.f32 %v1172, %v2753
    %v4408 = vmul.f32 %v1276, %v2759
    %v4409 = vmul.f32 %v1380, %v3301
    %v4410 = vmul.f32 %v1484, %v3307
    %v4411 = vmul.f32 %v1588, %v3313
    %v4412 = vmul.f32 %v1691, %v3846
    %v4413 = vmul.f32 %v1794, %v3852
    %v4414 = vmul.f32 %v1897, %v3858
    %v4415 = vmul.f32 %v2000, %v4391
    %v4416 = vmul.f32 %v2103, %v4397
    %v4417 = vmul.f32 %v2206, %v4403
    %v4418 = vadd.f32 %v4406, %v4412
    %v4419 = vadd.f32 %v4407, %v4413
    %v4420 = vadd.f32 %v4408, %v4414
    %v4421 = vadd.f32 %v4409, %v4415
    %v4422 = vadd.f32 %v4410, %v4416
    %v4423 = vadd.f32 %v4411, %v4417
    %vm4424 = vcmask 900096
    %v4425 = vsel %vm4424, %v4418, 0.0
    %v4426 = vsel %vm4424, %v4419, 0.0
    %v4427 = vadd.f32 %v4425, %v4426
    %v4428 = vsel %vm4424, %v4420, 0.0
    %v4429 = vadd.f32 %v4427, %v4428
    %v4430 = vrot.slane %v4429, 4
    %v4431 = vadd.f32 %v4429, %v4430
    %v4432 = vrot.slane %v4431, 2
    %v4433 = vadd.f32 %v4431, %v4432
    %v4434 = vrot.slane %v4433, 1
    %v4435 = vadd.f32 %v4433, %v4434
    %v4436 = vsel %vm4424, %v4421, 0.0
    %v4437 = vsel %vm4424, %v4422, 0.0
    %v4438 = vadd.f32 %v4436, %v4437
    %v4439 = vsel %vm4424, %v4423, 0.0
    %v4440 = vadd.f32 %v4438, %v4439
    %v4441 = vrot.slane %v4440, 4
    %v4442 = vadd.f32 %v4440, %v4441
    %v4443 = vrot.slane %v4442, 2
    %v4444 = vadd.f32 %v4442, %v4443
    %v4445 = vrot.slane %v4444, 1
    %v4446 = vadd.f32 %v4444, %v4445
    %v4447 = vmul.f32 %v1691, %v2747
    %v4448 = vmul.f32 %v1794, %v2753
    %v4449 = vmul.f32 %v1897, %v2759
    %v4450 = vmul.f32 %v2000, %v3301
    %v4451 = vmul.f32 %v2103, %v3307
    %v4452 = vmul.f32 %v2206, %v3313
    %v4453 = vmul.f32 %v1068, %v3846
    %v4454 = vmul.f32 %v1172, %v3852
    %v4455 = vmul.f32 %v1276, %v3858
    %v4456 = vmul.f32 %v1380, %v4391
    %v4457 = vmul.f32 %v1484, %v4397
    %v4458 = vmul.f32 %v1588, %v4403
    %v4459 = vsub.f32 %v4447, %v4453
    %v4460 = vsub.f32 %v4448, %v4454
    %v4461 = vsub.f32 %v4449, %v4455
    %v4462 = vsub.f32 %v4450, %v4456
    %v4463 = vsub.f32 %v4451, %v4457
    %v4464 = vsub.f32 %v4452, %v4458
    %v4465 = vsel %vm4424, %v4459, 0.0
    %v4466 = vsel %vm4424, %v4460, 0.0
    %v4467 = vadd.f32 %v4465, %v4466
    %v4468 = vsel %vm4424, %v4461, 0.0
    %v4469 = vadd.f32 %v4467, %v4468
    %v4470 = vrot.slane %v4469, 4
    %v4471 = vadd.f32 %v4469, %v4470
    %v4472 = vrot.slane %v4471, 2
    %v4473 = vadd.f32 %v4471, %v4472
    %v4474 = vrot.slane %v4473, 1
    %v4475 = vadd.f32 %v4473, %v4474
    %v4476 = vsel %vm4424, %v4462, 0.0
    %v4477 = vsel %vm4424, %v4463, 0.0
    %v4478 = vadd.f32 %v4476, %v4477
    %v4479 = vsel %vm4424, %v4464, 0.0
    %v4480 = vadd.f32 %v4478, %v4479
    %v4481 = vrot.slane %v4480, 4
    %v4482 = vadd.f32 %v4480, %v4481
    %v4483 = vrot.slane %v4482, 2
    %v4484 = vadd.f32 %v4482, %v4483
    %v4485 = vrot.slane %v4484, 1
    %v4486 = vadd.f32 %v4484, %v4485
    %v4487 = vmul.f32 %v4435, %v4435
    %v4488 = vmul.f32 %v4446, %v4446
    %v4489 = vmul.f32 %v4475, %v4475
    %v4490 = vmul.f32 %v4486, %v4486
    %v4491 = vadd.f32 %v4487, %v4489
    %v4492 = vadd.f32 %v4488, %v4490
    %vm4495 = vcmask 1041409
    %v4496 = vsel %vm4495, %v4492, %v4491
    %vm4498 = vcmask 893952
    %v4499 = vsel %vm4498, %v4496, 0.0
    %4500 = vadd.xlane.f32.xlu0 %v4499
    %v4501 = vpop.xlane.xlu0 %4500
    %v4502 = vrcp.pop %v4501
    %v4504 = vrot.slane %v4502, 1
    %v4507 = vmul.f32 %v4491, %v4502
    %v4508 = vmul.f32 %v4492, %v4504
    %v4511 = vrot.slane %v4508, 7
    %v4512 = vsel %vm4495, %v4511, %v4507
    %v4514 = vsel %vm4498, %v4512, -inf
    %4515 = vmax.xlane.f32.xlu0 %v4514
    %v4516 = vpop.xlane.xlu0 %4515
    %v4518 = vrot.slane %v4516, 1
    %v4521 = vsub.f32 %v4507, %v4516
    %v4522 = vsub.f32 %v4508, %v4518
    %v4523 = vmul.f32 %v4521, 1.442695
    %v4524 = vpow.pop %v4523
    %v4525 = vmul.f32 %v4522, 1.442695
    %v4526 = vpow.pop %v4525
    %v4529 = vrot.slane %v4526, 7
    %v4530 = vsel %vm4495, %v4529, %v4524
    %v4532 = vsel %vm4498, %v4530, 0.0
    %4533 = vadd.xlane.f32.xlu0 %v4532
    %v4534 = vpop.xlane.xlu0 %4533
    %v4535 = vlog2.pop %v4534
    %v4536 = vmul.f32 %v4535, 0.6931472
    %v4537 = vadd.f32 %v4536, %v4516
    %v4538 = vlaneseq
    %v4539 = vand.u32 %v4538, 127
    %4540 = vset.pattern.permute.xlu0 0
    %4541 = vperm.xlu0 %4540, %v31
    %v4542 = vpop.permute.xlu0 %4541
    %vm4543 = vcmp.eq.s32.totalorder %v4539, %v4542
    %v4544 = vsel %vm4543, %v4512, 0.0
    %v4545 = vsel %vm4498, %v4544, 0.0
    %4546 = vadd.xlane.f32.xlu0 %v4545
    %v4547 = vpop.xlane.xlu0 %4546
    %v4548 = vsub.f32 %v4537, %v4547
    %vm4549 = vcmask 1024
    %v4550 = vsel %vm4549, %v4548, 0.0
    %4551 = vadd.xlane.f32.xlu0 %v4550
    %v4552 = vpop.xlane.xlu0 %4551
    %v4553 = vrot.slane %v4552, 4
    %v4554 = vadd.f32 %v4552, %v4553
    %v4555 = vrot.slane %v4554, 2
    %v4556 = vadd.f32 %v4554, %v4555
    %v4557 = vrot.slane %v4556, 1
    %v4558 = vadd.f32 %v4556, %v4557
    %s4559 = vtos %v4558
    %v4560 = vstv %s4559
    %v4561 = vrcp.pop 2.0
    %v4562 = vmul.f32 %v4560, %v4561
    %vm4563 = vcmask 0
    %4564 = vst.msk [vmem:[#allocation2] sm:$0x1] %vm4563, %v4562
    // Predicated region
    $region22: #{tpu_custom_call.1} parent=1 // pred_check
      _
    $region23: #{tpu_custom_call.1} parent=1 // pred_check_branch
      %4566 = sbr.rel (0) target = $region25
    $region24: #{tpu_custom_call.1} parent=1 // pred_region
      %s4568 = ssub.s32 16, 16
      %4569 = vsyncadd [#allocation3], %s4568
      %s4571 = sshll.u32 [#allocation2], 4
      %s4572 = int_to_ptr.vmem [resolvable:$true] %s4571
      %4574 = dma.vmem_to_hbm [thread:$0]  %s4572, 16, %s5, [#allocation3]
    $region25: #{tpu_custom_call.1} parent=1 // pred_fallthru
      _
    // Predicated region
    $region26: #{tpu_custom_call.1} parent=1 // pred_check
      _
    $region27: #{tpu_custom_call.1} parent=1 // pred_check_branch
      %4576 = sbr.rel (0) target = $region29
    $region28: #{tpu_custom_call.1} parent=1 // pred_region
      %4577 = dma.done [#allocation3], 16
    $region29: #{tpu_custom_call.1} parent=1 // pred_fallthru
      _
    %4578 = vsyncpa [#allocation3], 1

</llo_original>
